<compile_context>
chip_gen: v6e
topology: v6e:2x2x1
jax: 0.10.0
libtpu: 0.0.40
codegen_flags: <defaults>
</compile_context>

<pallas_src>
import jax
import jax.numpy as jnp
from jax import lax
from jax.experimental import pallas as pl
from jax.experimental.pallas import tpu as pltpu

EPS = 1e-5  # PyTorch BatchNorm1d default eps
PF = 0.1    # FeatureMasking probability

# Row layout of the packed per-column parameter block `vecs` ([16, H] f32).
ROW_ENC_B, ROW_BN_G, ROW_BN_B = 0, 1, 2
ROW_PROJ_B, ROW_PROJ_G, ROW_PROJ_BB = 3, 4, 5
ROW_PRED_B, ROW_PRED_G, ROW_PRED_BB = 6, 7, 8
ROW_ALPHA_PROJ, ROW_ALPHA_PRED = 9, 10
N_PARAM_ROWS = 11
PACK_ROWS = 16  # padded to a sublane multiple


# ---------------------------------------------------------------------------
# Fused kernel: both views, whole chain, one invocation
# ---------------------------------------------------------------------------
def _bgrl_fused_kernel(x_ref, mask_ref, enc_w_ref, w2_ref, vec_ref,
                       h_ref, online_ref, pred_ref):
    n, f = x_ref.shape
    v = mask_ref.shape[0]            # number of augmented views (2)
    h_dim = enc_w_ref.shape[1]
    inv_n = 1.0 / float(n)

    # Packed per-column parameters (cheap single-sublane loads).
    enc_b = vec_ref[ROW_ENC_B:ROW_ENC_B + 1, :]
    bn_g = vec_ref[ROW_BN_G:ROW_BN_G + 1, :]
    bn_b = vec_ref[ROW_BN_B:ROW_BN_B + 1, :]
    proj_b = vec_ref[ROW_PROJ_B:ROW_PROJ_B + 1, :]
    proj_g = vec_ref[ROW_PROJ_G:ROW_PROJ_G + 1, :]
    proj_bb = vec_ref[ROW_PROJ_BB:ROW_PROJ_BB + 1, :]
    pred_b = vec_ref[ROW_PRED_B:ROW_PRED_B + 1, :]
    pred_g = vec_ref[ROW_PRED_G:ROW_PRED_G + 1, :]
    pred_bb = vec_ref[ROW_PRED_BB:ROW_PRED_BB + 1, :]
    a_proj = vec_ref[ROW_ALPHA_PROJ:ROW_ALPHA_PROJ + 1, :]   # PReLU alpha, lane-bcast
    a_pred = vec_ref[ROW_ALPHA_PRED:ROW_ALPHA_PRED + 1, :]

    def mm(a_f32, w_bf16):
        # MXU matmul: bf16 operands, f32 accumulation. Weights are [IN, OUT].
        return lax.dot_general(
            a_f32.astype(jnp.bfloat16), w_bf16,
            dimension_numbers=(((1,), (0,)), ((), ())),
            preferred_element_type=jnp.float32,
        )

    def bn_per_view(y2d, gamma, beta):
        # BatchNorm1d, training-mode (biased) batch statistics per view.
        # Two-pass (center first) for numerical robustness; normalize applied
        # as c * scale + beta (slim epilogue).
        y3 = y2d.reshape(v, n, h_dim)
        mean = jnp.sum(y3, axis=1, keepdims=True) * inv_n          # [V,1,H]
        c = y3 - mean
        var = jnp.sum(c * c, axis=1, keepdims=True) * inv_n        # [V,1,H]
        scale = gamma * lax.rsqrt(var + EPS)                       # [V,1,H]
        return c * scale + beta                                    # [V,N,H]

    # FeatureMasking(pf): zero whole feature columns per view, then stack the
    # two views along M so every matmul runs once at M = V*N.
    x = x_ref[...]                                                 # [N,F]
    masks = mask_ref[...]                                          # [V,F]
    xv = (x[None, :, :] * masks[:, None, :]).reshape(v * n, f)     # [VN,F]

    # stand-in graph_encoder: Linear, then BGRLModelWrapper.batch_norm
    z = mm(xv, enc_w_ref[...]) + enc_b                             # [VN,H]
    h3 = bn_per_view(z, bn_g, bn_b)                                # [V,N,H]

    # projection_head: Linear -> BatchNorm1d -> PReLU -> Dropout(identity)
    p = mm(h3.reshape(v * n, h_dim), w2_ref[0]) + proj_b
    p3 = bn_per_view(p, proj_g, proj_bb)
    online3 = jnp.where(p3 >= 0.0, p3, a_proj * p3)

    # predictor: Linear -> BatchNorm1d -> PReLU -> Dropout(identity)
    q = mm(online3.reshape(v * n, h_dim), w2_ref[1]) + pred_b
    q3 = bn_per_view(q, pred_g, pred_bb)
    pred3 = jnp.where(q3 >= 0.0, q3, a_pred * q3)

    # bf16 outputs: halves HBM writeback (the dominant traffic here).
    h_ref[...] = h3.astype(h_ref.dtype)
    online_ref[...] = online3.astype(online_ref.dtype)
    pred_ref[...] = pred3.astype(pred_ref.dtype)


# ---------------------------------------------------------------------------
# pallas_call wrapper: single launch, whole arrays resident in VMEM
# ---------------------------------------------------------------------------
def bgrl_fused_forward(x, masks, params):
    n, _ = x.shape
    h_dim = params["enc_w"].shape[1]
    n_views = masks.shape[0]

    vmem = pl.BlockSpec(memory_space=pltpu.MemorySpace.VMEM)
    out_shape = tuple(
        jax.ShapeDtypeStruct((n_views, n, h_dim), jnp.bfloat16) for _ in range(3)
    )

    h, h_online, h_pred = pl.pallas_call(
        _bgrl_fused_kernel,
        out_shape=out_shape,
        in_specs=[vmem] * 5,
        out_specs=(vmem, vmem, vmem),
    )(x, masks, params["enc_w"], params["w2"], params["vecs"])
    return h, h_online, h_pred


# ---------------------------------------------------------------------------
# Parameters + full BGRLEncoder forward
# ---------------------------------------------------------------------------
def init_params(key, feat_dim, hidden_dim):
    ks = jax.random.split(key, 3)

    def lin(k, in_d, out_d):
        # PyTorch Linear init: U(-1/sqrt(in), 1/sqrt(in)); weight stored [IN,OUT] bf16.
        bound = 1.0 / float(in_d) ** 0.5
        kw, kb = jax.random.split(k)
        w = jax.random.uniform(kw, (out_d, in_d), jnp.float32, -bound, bound)
        b = jax.random.uniform(kb, (out_d,), jnp.float32, -bound, bound)
        return jnp.transpose(w).astype(jnp.bfloat16), b

    enc_w, enc_b = lin(ks[0], feat_dim, hidden_dim)       # stand-in graph_encoder
    proj_w, proj_b = lin(ks[1], hidden_dim, hidden_dim)   # projection_head Linear
    pred_w, pred_b = lin(ks[2], hidden_dim, hidden_dim)   # predictor Linear

    ones = jnp.ones((hidden_dim,), jnp.float32)           # BN gamma init
    zeros = jnp.zeros((hidden_dim,), jnp.float32)         # BN beta init
    alpha = jnp.full((hidden_dim,), 0.25, jnp.float32)    # PReLU default, lane-bcast

    rows = jnp.stack([
        enc_b, ones, zeros,          # enc bias, wrapper BN gamma/beta
        proj_b, ones, zeros,         # proj Linear bias, proj BN gamma/beta
        pred_b, ones, zeros,         # pred Linear bias, pred BN gamma/beta
        alpha, alpha,                # PReLU alphas (proj, pred)
    ])                               # [N_PARAM_ROWS, H]
    vecs = jnp.zeros((PACK_ROWS, hidden_dim), jnp.float32)
    vecs = vecs.at[:N_PARAM_ROWS, :].set(rows)

    w2 = jnp.stack([proj_w, pred_w])                       # [2, H, H] bf16

    return dict(enc_w=enc_w, w2=w2, vecs=vecs)


def bgrl_encoder_forward(x, params, key):
    # FeatureMasking(pf=0.1) keep-masks for the two augmented views.
    k1, k2 = jax.random.split(key)
    f = x.shape[1]
    keep1 = jax.random.bernoulli(k1, 1.0 - PF, (f,)).astype(jnp.float32)
    keep2 = jax.random.bernoulli(k2, 1.0 - PF, (f,)).astype(jnp.float32)
    masks = jnp.stack([keep1, keep2])                      # [2, F]

    h, h_online, h_pred = bgrl_fused_forward(x, masks, params)

    h1, h2 = h[0], h[1]
    h1_pred, h2_pred = h_pred[0], h_pred[1]
    # target_encoder = deepcopy(online_encoder) at first use -> identical params;
    # with eval-mode dropout the target projection equals the online projection,
    # just computed under no_grad -> reuse with stop_gradient (no recompute).
    h1_target = lax.stop_gradient(h_online[0])
    h2_target = lax.stop_gradient(h_online[1])
    return h1, h2, h1_pred, h2_pred, h1_target, h2_target


# ---------------------------------------------------------------------------
if __name__ == "__main__":
    N_NODES, FEAT_DIM, HIDDEN_DIM = 256, 128, 128

    root = jax.random.PRNGKey(0)
    k_x, k_params, k_aug = jax.random.split(root, 3)

    x = jax.random.normal(k_x, (N_NODES, FEAT_DIM), jnp.float32)
    params = init_params(k_params, FEAT_DIM, HIDDEN_DIM)

    forward = jax.jit(bgrl_encoder_forward)
    outs = jax.block_until_ready(forward(x, params, k_aug))

    h1, h2, h1_pred, h2_pred, h1_target, h2_target = outs
    for o in outs:
        assert o.shape == (N_NODES, HIDDEN_DIM)
        assert bool(jnp.all(jnp.isfinite(o.astype(jnp.float32))))

    print("KERNEL_OK")
</pallas_src>

<mosaic_0001>
module attributes {stable_mosaic.version = 11 : i64} {
  func.func @_bgrl_fused_kernel(%arg0: memref<256x128xf32, #tpu.memory_space<vmem>>, %arg1: memref<2x128xf32, #tpu.memory_space<vmem>>, %arg2: memref<128x128xbf16, #tpu.memory_space<vmem>>, %arg3: memref<2x128x128xbf16, #tpu.memory_space<vmem>>, %arg4: memref<16x128xf32, #tpu.memory_space<vmem>>, %arg5: memref<2x256x128xbf16, #tpu.memory_space<vmem>>, %arg6: memref<2x256x128xbf16, #tpu.memory_space<vmem>>, %arg7: memref<2x256x128xbf16, #tpu.memory_space<vmem>>) attributes {dimension_semantics = [], scalar_prefetch = 0 : i64, scratch_operands = 0 : i64, tpu.core_type = #tpu.core_type<tc>} {
    %c0 = arith.constant 0 : index
    %c0_0 = arith.constant 0 : index
    %0 = vector.load %arg4[%c0, %c0_0] : memref<16x128xf32, #tpu.memory_space<vmem>>, vector<1x128xf32>
    %c1 = arith.constant 1 : index
    %c0_1 = arith.constant 0 : index
    %1 = vector.load %arg4[%c1, %c0_1] : memref<16x128xf32, #tpu.memory_space<vmem>>, vector<1x128xf32>
    %c2 = arith.constant 2 : index
    %c0_2 = arith.constant 0 : index
    %2 = vector.load %arg4[%c2, %c0_2] : memref<16x128xf32, #tpu.memory_space<vmem>>, vector<1x128xf32>
    %c3 = arith.constant 3 : index
    %c0_3 = arith.constant 0 : index
    %3 = vector.load %arg4[%c3, %c0_3] : memref<16x128xf32, #tpu.memory_space<vmem>>, vector<1x128xf32>
    %c4 = arith.constant 4 : index
    %c0_4 = arith.constant 0 : index
    %4 = vector.load %arg4[%c4, %c0_4] : memref<16x128xf32, #tpu.memory_space<vmem>>, vector<1x128xf32>
    %c5 = arith.constant 5 : index
    %c0_5 = arith.constant 0 : index
    %5 = vector.load %arg4[%c5, %c0_5] : memref<16x128xf32, #tpu.memory_space<vmem>>, vector<1x128xf32>
    %c6 = arith.constant 6 : index
    %c0_6 = arith.constant 0 : index
    %6 = vector.load %arg4[%c6, %c0_6] : memref<16x128xf32, #tpu.memory_space<vmem>>, vector<1x128xf32>
    %c7 = arith.constant 7 : index
    %c0_7 = arith.constant 0 : index
    %7 = vector.load %arg4[%c7, %c0_7] : memref<16x128xf32, #tpu.memory_space<vmem>>, vector<1x128xf32>
    %c8 = arith.constant 8 : index
    %c0_8 = arith.constant 0 : index
    %8 = vector.load %arg4[%c8, %c0_8] : memref<16x128xf32, #tpu.memory_space<vmem>>, vector<1x128xf32>
    %c9 = arith.constant 9 : index
    %c0_9 = arith.constant 0 : index
    %9 = vector.load %arg4[%c9, %c0_9] : memref<16x128xf32, #tpu.memory_space<vmem>>, vector<1x128xf32>
    %c10 = arith.constant 10 : index
    %c0_10 = arith.constant 0 : index
    %10 = vector.load %arg4[%c10, %c0_10] : memref<16x128xf32, #tpu.memory_space<vmem>>, vector<1x128xf32>
    %c0_11 = arith.constant 0 : index
    %c0_12 = arith.constant 0 : index
    %11 = vector.load %arg0[%c0_11, %c0_12] : memref<256x128xf32, #tpu.memory_space<vmem>>, vector<256x128xf32>
    %c0_13 = arith.constant 0 : index
    %c0_14 = arith.constant 0 : index
    %12 = vector.load %arg1[%c0_13, %c0_14] : memref<2x128xf32, #tpu.memory_space<vmem>>, vector<2x128xf32>
    %13 = vector.shape_cast %11 : vector<256x128xf32> to vector<1x256x128xf32>
    %14 = vector.shape_cast %12 : vector<2x128xf32> to vector<2x1x128xf32>
    %15 = vector.broadcast %13 : vector<1x256x128xf32> to vector<2x256x128xf32>
    %16 = vector.broadcast %14 : vector<2x1x128xf32> to vector<2x256x128xf32>
    %17 = arith.mulf %15, %16 : vector<2x256x128xf32>
    %18 = vector.shape_cast %17 : vector<2x256x128xf32> to vector<512x128xf32>
    %c0_15 = arith.constant 0 : index
    %c0_16 = arith.constant 0 : index
    %19 = vector.load %arg2[%c0_15, %c0_16] : memref<128x128xbf16, #tpu.memory_space<vmem>>, vector<128x128xbf16>
    %20 = arith.truncf %18 : vector<512x128xf32> to vector<512x128xbf16>
    %cst = arith.constant dense<0.000000e+00> : vector<512x128xf32>
    %21 = tpu.matmul %20, %19, %cst {dimension_numbers = #tpu.dot_dimension_numbers<[1], [0], [0], [1], [0, 0, 1, 1], [], []>} : vector<512x128xbf16>, vector<128x128xbf16>, vector<512x128xf32> -> vector<512x128xf32>
    %22 = vector.broadcast %0 : vector<1x128xf32> to vector<512x128xf32>
    %23 = arith.addf %21, %22 : vector<512x128xf32>
    %24 = vector.shape_cast %23 : vector<512x128xf32> to vector<2x256x128xf32>
    %cst_17 = arith.constant dense<0.000000e+00> : vector<2x128xf32>
    %25 = vector.multi_reduction <add>, %24, %cst_17 [1] : vector<2x256x128xf32> to vector<2x128xf32>
    %26 = vector.shape_cast %25 : vector<2x128xf32> to vector<2x1x128xf32>
    %cst_18 = arith.constant 3.906250e-03 : f32
    %27 = vector.broadcast %cst_18 : f32 to vector<2x1x128xf32>
    %28 = arith.mulf %26, %27 : vector<2x1x128xf32>
    %29 = vector.broadcast %28 : vector<2x1x128xf32> to vector<2x256x128xf32>
    %30 = arith.subf %24, %29 : vector<2x256x128xf32>
    %31 = arith.mulf %30, %30 : vector<2x256x128xf32>
    %cst_19 = arith.constant dense<0.000000e+00> : vector<2x128xf32>
    %32 = vector.multi_reduction <add>, %31, %cst_19 [1] : vector<2x256x128xf32> to vector<2x128xf32>
    %33 = vector.shape_cast %32 : vector<2x128xf32> to vector<2x1x128xf32>
    %cst_20 = arith.constant 3.906250e-03 : f32
    %34 = vector.broadcast %cst_20 : f32 to vector<2x1x128xf32>
    %35 = arith.mulf %33, %34 : vector<2x1x128xf32>
    %cst_21 = arith.constant 9.99999974E-6 : f32
    %36 = vector.broadcast %cst_21 : f32 to vector<2x1x128xf32>
    %37 = arith.addf %35, %36 : vector<2x1x128xf32>
    %38 = math.rsqrt %37 : vector<2x1x128xf32>
    %39 = vector.shape_cast %1 : vector<1x128xf32> to vector<1x1x128xf32>
    %40 = vector.broadcast %39 : vector<1x1x128xf32> to vector<2x1x128xf32>
    %41 = arith.mulf %40, %38 : vector<2x1x128xf32>
    %42 = vector.broadcast %41 : vector<2x1x128xf32> to vector<2x256x128xf32>
    %43 = arith.mulf %30, %42 : vector<2x256x128xf32>
    %44 = vector.shape_cast %2 : vector<1x128xf32> to vector<1x1x128xf32>
    %45 = vector.broadcast %44 : vector<1x1x128xf32> to vector<2x256x128xf32>
    %46 = arith.addf %43, %45 : vector<2x256x128xf32>
    %47 = vector.shape_cast %46 : vector<2x256x128xf32> to vector<512x128xf32>
    %c0_22 = arith.constant 0 : index
    %c0_23 = arith.constant 0 : index
    %c0_24 = arith.constant 0 : index
    %48 = vector.load %arg3[%c0_22, %c0_23, %c0_24] : memref<2x128x128xbf16, #tpu.memory_space<vmem>>, vector<1x128x128xbf16>
    %49 = vector.shape_cast %48 : vector<1x128x128xbf16> to vector<128x128xbf16>
    %50 = arith.truncf %47 : vector<512x128xf32> to vector<512x128xbf16>
    %cst_25 = arith.constant dense<0.000000e+00> : vector<512x128xf32>
    %51 = tpu.matmul %50, %49, %cst_25 {dimension_numbers = #tpu.dot_dimension_numbers<[1], [0], [0], [1], [0, 0, 1, 1], [], []>} : vector<512x128xbf16>, vector<128x128xbf16>, vector<512x128xf32> -> vector<512x128xf32>
    %52 = vector.broadcast %3 : vector<1x128xf32> to vector<512x128xf32>
    %53 = arith.addf %51, %52 : vector<512x128xf32>
    %54 = vector.shape_cast %53 : vector<512x128xf32> to vector<2x256x128xf32>
    %cst_26 = arith.constant dense<0.000000e+00> : vector<2x128xf32>
    %55 = vector.multi_reduction <add>, %54, %cst_26 [1] : vector<2x256x128xf32> to vector<2x128xf32>
    %56 = vector.shape_cast %55 : vector<2x128xf32> to vector<2x1x128xf32>
    %cst_27 = arith.constant 3.906250e-03 : f32
    %57 = vector.broadcast %cst_27 : f32 to vector<2x1x128xf32>
    %58 = arith.mulf %56, %57 : vector<2x1x128xf32>
    %59 = vector.broadcast %58 : vector<2x1x128xf32> to vector<2x256x128xf32>
    %60 = arith.subf %54, %59 : vector<2x256x128xf32>
    %61 = arith.mulf %60, %60 : vector<2x256x128xf32>
    %cst_28 = arith.constant dense<0.000000e+00> : vector<2x128xf32>
    %62 = vector.multi_reduction <add>, %61, %cst_28 [1] : vector<2x256x128xf32> to vector<2x128xf32>
    %63 = vector.shape_cast %62 : vector<2x128xf32> to vector<2x1x128xf32>
    %cst_29 = arith.constant 3.906250e-03 : f32
    %64 = vector.broadcast %cst_29 : f32 to vector<2x1x128xf32>
    %65 = arith.mulf %63, %64 : vector<2x1x128xf32>
    %cst_30 = arith.constant 9.99999974E-6 : f32
    %66 = vector.broadcast %cst_30 : f32 to vector<2x1x128xf32>
    %67 = arith.addf %65, %66 : vector<2x1x128xf32>
    %68 = math.rsqrt %67 : vector<2x1x128xf32>
    %69 = vector.shape_cast %4 : vector<1x128xf32> to vector<1x1x128xf32>
    %70 = vector.broadcast %69 : vector<1x1x128xf32> to vector<2x1x128xf32>
    %71 = arith.mulf %70, %68 : vector<2x1x128xf32>
    %72 = vector.broadcast %71 : vector<2x1x128xf32> to vector<2x256x128xf32>
    %73 = arith.mulf %60, %72 : vector<2x256x128xf32>
    %74 = vector.shape_cast %5 : vector<1x128xf32> to vector<1x1x128xf32>
    %75 = vector.broadcast %74 : vector<1x1x128xf32> to vector<2x256x128xf32>
    %76 = arith.addf %73, %75 : vector<2x256x128xf32>
    %cst_31 = arith.constant 0.000000e+00 : f32
    %77 = vector.broadcast %cst_31 : f32 to vector<2x256x128xf32>
    %78 = arith.cmpf oge, %76, %77 : vector<2x256x128xf32>
    %79 = vector.shape_cast %9 : vector<1x128xf32> to vector<1x1x128xf32>
    %80 = vector.broadcast %79 : vector<1x1x128xf32> to vector<2x256x128xf32>
    %81 = arith.mulf %80, %76 : vector<2x256x128xf32>
    %82 = arith.select %78, %76, %81 : vector<2x256x128xi1>, vector<2x256x128xf32>
    %83 = vector.shape_cast %82 : vector<2x256x128xf32> to vector<512x128xf32>
    %c1_32 = arith.constant 1 : index
    %c0_33 = arith.constant 0 : index
    %c0_34 = arith.constant 0 : index
    %84 = vector.load %arg3[%c1_32, %c0_33, %c0_34] : memref<2x128x128xbf16, #tpu.memory_space<vmem>>, vector<1x128x128xbf16>
    %85 = vector.shape_cast %84 : vector<1x128x128xbf16> to vector<128x128xbf16>
    %86 = arith.truncf %83 : vector<512x128xf32> to vector<512x128xbf16>
    %cst_35 = arith.constant dense<0.000000e+00> : vector<512x128xf32>
    %87 = tpu.matmul %86, %85, %cst_35 {dimension_numbers = #tpu.dot_dimension_numbers<[1], [0], [0], [1], [0, 0, 1, 1], [], []>} : vector<512x128xbf16>, vector<128x128xbf16>, vector<512x128xf32> -> vector<512x128xf32>
    %88 = vector.broadcast %6 : vector<1x128xf32> to vector<512x128xf32>
    %89 = arith.addf %87, %88 : vector<512x128xf32>
    %90 = vector.shape_cast %89 : vector<512x128xf32> to vector<2x256x128xf32>
    %cst_36 = arith.constant dense<0.000000e+00> : vector<2x128xf32>
    %91 = vector.multi_reduction <add>, %90, %cst_36 [1] : vector<2x256x128xf32> to vector<2x128xf32>
    %92 = vector.shape_cast %91 : vector<2x128xf32> to vector<2x1x128xf32>
    %cst_37 = arith.constant 3.906250e-03 : f32
    %93 = vector.broadcast %cst_37 : f32 to vector<2x1x128xf32>
    %94 = arith.mulf %92, %93 : vector<2x1x128xf32>
    %95 = vector.broadcast %94 : vector<2x1x128xf32> to vector<2x256x128xf32>
    %96 = arith.subf %90, %95 : vector<2x256x128xf32>
    %97 = arith.mulf %96, %96 : vector<2x256x128xf32>
    %cst_38 = arith.constant dense<0.000000e+00> : vector<2x128xf32>
    %98 = vector.multi_reduction <add>, %97, %cst_38 [1] : vector<2x256x128xf32> to vector<2x128xf32>
    %99 = vector.shape_cast %98 : vector<2x128xf32> to vector<2x1x128xf32>
    %cst_39 = arith.constant 3.906250e-03 : f32
    %100 = vector.broadcast %cst_39 : f32 to vector<2x1x128xf32>
    %101 = arith.mulf %99, %100 : vector<2x1x128xf32>
    %cst_40 = arith.constant 9.99999974E-6 : f32
    %102 = vector.broadcast %cst_40 : f32 to vector<2x1x128xf32>
    %103 = arith.addf %101, %102 : vector<2x1x128xf32>
    %104 = math.rsqrt %103 : vector<2x1x128xf32>
    %105 = vector.shape_cast %7 : vector<1x128xf32> to vector<1x1x128xf32>
    %106 = vector.broadcast %105 : vector<1x1x128xf32> to vector<2x1x128xf32>
    %107 = arith.mulf %106, %104 : vector<2x1x128xf32>
    %108 = vector.broadcast %107 : vector<2x1x128xf32> to vector<2x256x128xf32>
    %109 = arith.mulf %96, %108 : vector<2x256x128xf32>
    %110 = vector.shape_cast %8 : vector<1x128xf32> to vector<1x1x128xf32>
    %111 = vector.broadcast %110 : vector<1x1x128xf32> to vector<2x256x128xf32>
    %112 = arith.addf %109, %111 : vector<2x256x128xf32>
    %cst_41 = arith.constant 0.000000e+00 : f32
    %113 = vector.broadcast %cst_41 : f32 to vector<2x256x128xf32>
    %114 = arith.cmpf oge, %112, %113 : vector<2x256x128xf32>
    %115 = vector.shape_cast %10 : vector<1x128xf32> to vector<1x1x128xf32>
    %116 = vector.broadcast %115 : vector<1x1x128xf32> to vector<2x256x128xf32>
    %117 = arith.mulf %116, %112 : vector<2x256x128xf32>
    %118 = arith.select %114, %112, %117 : vector<2x256x128xi1>, vector<2x256x128xf32>
    %119 = arith.truncf %46 : vector<2x256x128xf32> to vector<2x256x128xbf16>
    %c0_42 = arith.constant 0 : index
    %c0_43 = arith.constant 0 : index
    %c0_44 = arith.constant 0 : index
    %120 = vector.load %arg5[%c0_42, %c0_43, %c0_44] : memref<2x256x128xbf16, #tpu.memory_space<vmem>>, vector<2x256x128xbf16>
    tpu.vector_store %arg5[%c0_42, %c0_43, %c0_44], %119 {strides = array<i32>} : memref<2x256x128xbf16, #tpu.memory_space<vmem>>, vector<2x256x128xbf16>,
    %121 = arith.truncf %82 : vector<2x256x128xf32> to vector<2x256x128xbf16>
    %c0_45 = arith.constant 0 : index
    %c0_46 = arith.constant 0 : index
    %c0_47 = arith.constant 0 : index
    %122 = vector.load %arg6[%c0_45, %c0_46, %c0_47] : memref<2x256x128xbf16, #tpu.memory_space<vmem>>, vector<2x256x128xbf16>
    tpu.vector_store %arg6[%c0_45, %c0_46, %c0_47], %121 {strides = array<i32>} : memref<2x256x128xbf16, #tpu.memory_space<vmem>>, vector<2x256x128xbf16>,
    %123 = arith.truncf %118 : vector<2x256x128xf32> to vector<2x256x128xbf16>
    %c0_48 = arith.constant 0 : index
    %c0_49 = arith.constant 0 : index
    %c0_50 = arith.constant 0 : index
    %124 = vector.load %arg7[%c0_48, %c0_49, %c0_50] : memref<2x256x128xbf16, #tpu.memory_space<vmem>>, vector<2x256x128xbf16>
    tpu.vector_store %arg7[%c0_48, %c0_49, %c0_50], %123 {strides = array<i32>} : memref<2x256x128xbf16, #tpu.memory_space<vmem>>, vector<2x256x128xbf16>,
    return
  }
}

</mosaic_0001>

<llo_original>
// kernel: bgrl_encoder_forward.3
$region0: #{bgrl_encoder_forward.3}
  #allocation0 [shape = 'u32[]', space=smem, size = 0x4, offset = 0x4, fixed_abs, tag = 'smem constant byte address 0x4 - core index']
  #allocation1 [shape = 'u32[144,128]{1,0:T(1,128)}', space=vmem, size = 0x12000, scoped, tag = 'internal scratch']
  %s0 = inlined_call_operand.hbm [shape: f32[256,128], index: 0, kind: input, shape index: {}]
  %s1 = inlined_call_operand.vmem [shape: f32[2,128], index: 1, kind: input, shape index: {}]
  %s2 = inlined_call_operand.vmem [shape: bf16[128,128], index: 2, kind: input, shape index: {}]
  %s3 = inlined_call_operand.hbm [shape: bf16[2,128,128], index: 3, kind: input, shape index: {}]
  %s4 = inlined_call_operand.vmem [shape: f32[16,128], index: 4, kind: input, shape index: {}]
  %s5 = inlined_call_operand.vmem [shape: bf16[2,256,128], index: 5, kind: output, shape index: {0}]
  %s6 = inlined_call_operand.vmem [shape: bf16[2,256,128], index: 6, kind: output, shape index: {1}]
  %s7 = inlined_call_operand.vmem [shape: bf16[2,256,128], index: 7, kind: output, shape index: {2}]
  %8 = xla_tuple %s5, %s6, %s7
  %s9 = sld [smem:[#allocation0]]
  $region54: #{bgrl_encoder_forward.3} parent=0
    _
  %s11 = ssub.s32 1, %s9
  %s12 = scalar_select 0, %s11, %s9
  $region1: #{bgrl_encoder_forward.3} parent=0
    #allocation2 [shape = 'u8[131072]{0}', space=vmem, size = 0x20000, scoped, tag = 'input window, operand 0, single buffered']
    #allocation3 [shape = 's32[1]{0}', space=sflag, size = 0x4, scoped, tag = 'scoped memory for bgrl_encoder_forward.3']
    #allocation4 [shape = 'u8[65536]{0}', space=vmem, size = 0x10000, scoped, tag = 'input window, operand 3, single buffered']
    #allocation5 [shape = 's32[1]{0}', space=sflag, size = 0x4, scoped, tag = 'scoped memory for bgrl_encoder_forward.3']
    %13 = vsyncpa [#allocation3], 0
    %14 = vsyncpa [#allocation5], 0
    // Predicated region
    $region2: #{bgrl_encoder_forward.3} parent=1 // pred_check
      _
    $region3: #{bgrl_encoder_forward.3} parent=1 // pred_check_branch
      %16 = sbr.rel (0) target = $region5
    $region4: #{bgrl_encoder_forward.3} parent=1 // pred_region
      %s18 = ssub.s32 4096, 4096
      %19 = vsyncadd [#allocation3], %s18
      %s20 = sshll.u32 [#allocation2], 4
      %s21 = int_to_ptr.vmem [resolvable:$true] %s20
      %26 = dma.hbm_to_vmem [thread:$0]  %s0, 4096, %s21, [#allocation3], 128, 128, 8
    $region5: #{bgrl_encoder_forward.3} parent=1 // pred_fallthru
      _
    // Predicated region
    $region6: #{bgrl_encoder_forward.3} parent=1 // pred_check
      _
    $region7: #{bgrl_encoder_forward.3} parent=1 // pred_check_branch
      %28 = sbr.rel (0) target = $region9
    $region8: #{bgrl_encoder_forward.3} parent=1 // pred_region
      _
    $region9: #{bgrl_encoder_forward.3} parent=1 // pred_fallthru
      _
    // Predicated region
    $region10: #{bgrl_encoder_forward.3} parent=1 // pred_check
      _
    $region11: #{bgrl_encoder_forward.3} parent=1 // pred_check_branch
      %30 = sbr.rel (0) target = $region13
    $region12: #{bgrl_encoder_forward.3} parent=1 // pred_region
      _
    $region13: #{bgrl_encoder_forward.3} parent=1 // pred_fallthru
      _
    // Predicated region
    $region14: #{bgrl_encoder_forward.3} parent=1 // pred_check
      _
    $region15: #{bgrl_encoder_forward.3} parent=1 // pred_check_branch
      %32 = sbr.rel (0) target = $region17
    $region16: #{bgrl_encoder_forward.3} parent=1 // pred_region
      %s34 = ssub.s32 2048, 2048
      %35 = vsyncadd [#allocation5], %s34
      %s36 = sshll.u32 [#allocation4], 4
      %s37 = int_to_ptr.vmem [resolvable:$true] %s36
      %42 = dma.hbm_to_vmem [thread:$0]  %s3, 2048, %s37, [#allocation5], 64, 64, 4
    $region17: #{bgrl_encoder_forward.3} parent=1 // pred_fallthru
      _
    // Predicated region
    $region18: #{bgrl_encoder_forward.3} parent=1 // pred_check
      _
    $region19: #{bgrl_encoder_forward.3} parent=1 // pred_check_branch
      %44 = sbr.rel (0) target = $region21
    $region20: #{bgrl_encoder_forward.3} parent=1 // pred_region
      _
    $region21: #{bgrl_encoder_forward.3} parent=1 // pred_fallthru
      _
    // Predicated region
    $region22: #{bgrl_encoder_forward.3} parent=1 // pred_check
      _
    $region23: #{bgrl_encoder_forward.3} parent=1 // pred_check_branch
      %46 = sbr.rel (0) target = $region25
    $region24: #{bgrl_encoder_forward.3} parent=1 // pred_region
      %47 = dma.done [#allocation3], 4096
    $region25: #{bgrl_encoder_forward.3} parent=1 // pred_fallthru
      _
    // Predicated region
    $region26: #{bgrl_encoder_forward.3} parent=1 // pred_check
      _
    $region27: #{bgrl_encoder_forward.3} parent=1 // pred_check_branch
      %49 = sbr.rel (0) target = $region29
    $region28: #{bgrl_encoder_forward.3} parent=1 // pred_region
      %50 = dma.done [#allocation5], 2048
    $region29: #{bgrl_encoder_forward.3} parent=1 // pred_fallthru
      _
    %v52 = vld [vmem:[%s4] sm:$0x1]
    %v53 = vld [vmem:[%s4 + $0x1] sm:$0x1]
    %v54 = vld [vmem:[%s4 + $0x2] sm:$0x1]
    %v55 = vld [vmem:[%s4 + $0x3] sm:$0x1]
    %v56 = vld [vmem:[%s4 + $0x4] sm:$0x1]
    %v57 = vld [vmem:[%s4 + $0x5] sm:$0x1]
    %v58 = vld [vmem:[%s4 + $0x6] sm:$0x1]
    %v59 = vld [vmem:[%s4 + $0x7] sm:$0x1]
    %v60 = vld [vmem:[%s4 + $0x8] sm:$0x1]
    %v61 = vld [vmem:[%s4 + $0x9] sm:$0x1]
    %v62 = vld [vmem:[%s4 + $0xa] sm:$0x1]
    %v63 = vld [vmem:[#allocation2] sm:$0xff]
    %v64 = vld [vmem:[#allocation2 + $0x8] sm:$0xff]
    %v65 = vld [vmem:[#allocation2 + $0x10] sm:$0xff]
    %v66 = vld [vmem:[#allocation2 + $0x18] sm:$0xff]
    %v67 = vld [vmem:[#allocation2 + $0x20] sm:$0xff]
    %v68 = vld [vmem:[#allocation2 + $0x28] sm:$0xff]
    %v69 = vld [vmem:[#allocation2 + $0x30] sm:$0xff]
    %v70 = vld [vmem:[#allocation2 + $0x38] sm:$0xff]
    %v71 = vld [vmem:[#allocation2 + $0x40] sm:$0xff]
    %v72 = vld [vmem:[#allocation2 + $0x48] sm:$0xff]
    %v73 = vld [vmem:[#allocation2 + $0x50] sm:$0xff]
    %v74 = vld [vmem:[#allocation2 + $0x58] sm:$0xff]
    %v75 = vld [vmem:[#allocation2 + $0x60] sm:$0xff]
    %v76 = vld [vmem:[#allocation2 + $0x68] sm:$0xff]
    %v77 = vld [vmem:[#allocation2 + $0x70] sm:$0xff]
    %v78 = vld [vmem:[#allocation2 + $0x78] sm:$0xff]
    %v79 = vld [vmem:[#allocation2 + $0x80] sm:$0xff]
    %v80 = vld [vmem:[#allocation2 + $0x88] sm:$0xff]
    %v81 = vld [vmem:[#allocation2 + $0x90] sm:$0xff]
    %v82 = vld [vmem:[#allocation2 + $0x98] sm:$0xff]
    %v83 = vld [vmem:[#allocation2 + $0xa0] sm:$0xff]
    %v84 = vld [vmem:[#allocation2 + $0xa8] sm:$0xff]
    %v85 = vld [vmem:[#allocation2 + $0xb0] sm:$0xff]
    %v86 = vld [vmem:[#allocation2 + $0xb8] sm:$0xff]
    %v87 = vld [vmem:[#allocation2 + $0xc0] sm:$0xff]
    %v88 = vld [vmem:[#allocation2 + $0xc8] sm:$0xff]
    %v89 = vld [vmem:[#allocation2 + $0xd0] sm:$0xff]
    %v90 = vld [vmem:[#allocation2 + $0xd8] sm:$0xff]
    %v91 = vld [vmem:[#allocation2 + $0xe0] sm:$0xff]
    %v92 = vld [vmem:[#allocation2 + $0xe8] sm:$0xff]
    %v93 = vld [vmem:[#allocation2 + $0xf0] sm:$0xff]
    %v94 = vld [vmem:[#allocation2 + $0xf8] sm:$0xff]
    %v95 = vld [vmem:[%s1] sm:$0x3]
    %v98 = vunpack.c.l.s4 1966171168
    %v99 = vunpack.c.0.s8 %v98
    %v100 = vlaneseq
    %v101 = vshrl.u32 %v100, 7
    %v102 = vsub.s32 %v99, %v101
    %v103 = vrot.slane %v95, %v102
    %v104 = vcombine.high %v103, %v103
    %v106 = vunpack.c.l.s4 1966171168
    %v107 = vunpack.c.0.s8 %v106
    %v108 = vlaneseq
    %v109 = vshrl.u32 %v108, 7
    %v110 = vsub.s32 %v107, %v109
    %v111 = vrot.slane %v103, %v110
    %v113 = vunpack.c.l.s4 1966171168
    %v114 = vunpack.c.0.s8 %v113
    %v115 = vlaneseq
    %v116 = vshrl.u32 %v115, 7
    %v117 = vsub.s32 %v114, %v116
    %v118 = vrot.slane %v104, %v117
    %v119 = vlaneseq
    %v120 = vshrl.u32 %v119, 7
    %v121 = vsub.s32 0, %v120
    %v122 = vrot.slane %v111, %v121
    %v123 = vlaneseq
    %v124 = vshrl.u32 %v123, 7
    %v125 = vsub.s32 0, %v124
    %v126 = vrot.slane %v118, %v125
    %v129 = vmul.f32 %v63, %v122
    %v130 = vmul.f32 %v64, %v122
    %v131 = vmul.f32 %v65, %v122
    %v132 = vmul.f32 %v66, %v122
    %v133 = vmul.f32 %v67, %v122
    %v134 = vmul.f32 %v68, %v122
    %v135 = vmul.f32 %v69, %v122
    %v136 = vmul.f32 %v70, %v122
    %v137 = vmul.f32 %v71, %v122
    %v138 = vmul.f32 %v72, %v122
    %v139 = vmul.f32 %v73, %v122
    %v140 = vmul.f32 %v74, %v122
    %v141 = vmul.f32 %v75, %v122
    %v142 = vmul.f32 %v76, %v122
    %v143 = vmul.f32 %v77, %v122
    %v144 = vmul.f32 %v78, %v122
    %v145 = vmul.f32 %v79, %v122
    %v146 = vmul.f32 %v80, %v122
    %v147 = vmul.f32 %v81, %v122
    %v148 = vmul.f32 %v82, %v122
    %v149 = vmul.f32 %v83, %v122
    %v150 = vmul.f32 %v84, %v122
    %v151 = vmul.f32 %v85, %v122
    %v152 = vmul.f32 %v86, %v122
    %v153 = vmul.f32 %v87, %v122
    %v154 = vmul.f32 %v88, %v122
    %v155 = vmul.f32 %v89, %v122
    %v156 = vmul.f32 %v90, %v122
    %v157 = vmul.f32 %v91, %v122
    %v158 = vmul.f32 %v92, %v122
    %v159 = vmul.f32 %v93, %v122
    %v160 = vmul.f32 %v94, %v122
    %v161 = vmul.f32 %v63, %v126
    %v162 = vmul.f32 %v64, %v126
    %v163 = vmul.f32 %v65, %v126
    %v164 = vmul.f32 %v66, %v126
    %v165 = vmul.f32 %v67, %v126
    %v166 = vmul.f32 %v68, %v126
    %v167 = vmul.f32 %v69, %v126
    %v168 = vmul.f32 %v70, %v126
    %v169 = vmul.f32 %v71, %v126
    %v170 = vmul.f32 %v72, %v126
    %v171 = vmul.f32 %v73, %v126
    %v172 = vmul.f32 %v74, %v126
    %v173 = vmul.f32 %v75, %v126
    %v174 = vmul.f32 %v76, %v126
    %v175 = vmul.f32 %v77, %v126
    %v176 = vmul.f32 %v78, %v126
    %v177 = vmul.f32 %v79, %v126
    %v178 = vmul.f32 %v80, %v126
    %v179 = vmul.f32 %v81, %v126
    %v180 = vmul.f32 %v82, %v126
    %v181 = vmul.f32 %v83, %v126
    %v182 = vmul.f32 %v84, %v126
    %v183 = vmul.f32 %v85, %v126
    %v184 = vmul.f32 %v86, %v126
    %v185 = vmul.f32 %v87, %v126
    %v186 = vmul.f32 %v88, %v126
    %v187 = vmul.f32 %v89, %v126
    %v188 = vmul.f32 %v90, %v126
    %v189 = vmul.f32 %v91, %v126
    %v190 = vmul.f32 %v92, %v126
    %v191 = vmul.f32 %v93, %v126
    %v192 = vmul.f32 %v94, %v126
    %v193 = vld [vmem:[%s2] sm:$0xf]
    %v194 = vld [vmem:[%s2 + $0x4] sm:$0xf]
    %v195 = vld [vmem:[%s2 + $0x8] sm:$0xf]
    %v196 = vld [vmem:[%s2 + $0xc] sm:$0xf]
    %v197 = vld [vmem:[%s2 + $0x10] sm:$0xf]
    %v198 = vld [vmem:[%s2 + $0x14] sm:$0xf]
    %v199 = vld [vmem:[%s2 + $0x18] sm:$0xf]
    %v200 = vld [vmem:[%s2 + $0x1c] sm:$0xf]
    %v201 = vld [vmem:[%s2 + $0x20] sm:$0xf]
    %v202 = vld [vmem:[%s2 + $0x24] sm:$0xf]
    %v203 = vld [vmem:[%s2 + $0x28] sm:$0xf]
    %v204 = vld [vmem:[%s2 + $0x2c] sm:$0xf]
    %v205 = vld [vmem:[%s2 + $0x30] sm:$0xf]
    %v206 = vld [vmem:[%s2 + $0x34] sm:$0xf]
    %v207 = vld [vmem:[%s2 + $0x38] sm:$0xf]
    %v208 = vld [vmem:[%s2 + $0x3c] sm:$0xf]
    %v209 = vpack.c.bf16 %v130, %v129
    %v210 = vpack.c.bf16 %v132, %v131
    %v211 = vpack.c.bf16 %v134, %v133
    %v212 = vpack.c.bf16 %v136, %v135
    %v213 = vpack.c.bf16 %v138, %v137
    %v214 = vpack.c.bf16 %v140, %v139
    %v215 = vpack.c.bf16 %v142, %v141
    %v216 = vpack.c.bf16 %v144, %v143
    %v217 = vpack.c.bf16 %v146, %v145
    %v218 = vpack.c.bf16 %v148, %v147
    %v219 = vpack.c.bf16 %v150, %v149
    %v220 = vpack.c.bf16 %v152, %v151
    %v221 = vpack.c.bf16 %v154, %v153
    %v222 = vpack.c.bf16 %v156, %v155
    %v223 = vpack.c.bf16 %v158, %v157
    %v224 = vpack.c.bf16 %v160, %v159
    %v225 = vpack.c.bf16 %v162, %v161
    %v226 = vpack.c.bf16 %v164, %v163
    %v227 = vpack.c.bf16 %v166, %v165
    %v228 = vpack.c.bf16 %v168, %v167
    %v229 = vpack.c.bf16 %v170, %v169
    %v230 = vpack.c.bf16 %v172, %v171
    %v231 = vpack.c.bf16 %v174, %v173
    %v232 = vpack.c.bf16 %v176, %v175
    %v233 = vpack.c.bf16 %v178, %v177
    %v234 = vpack.c.bf16 %v180, %v179
    %v235 = vpack.c.bf16 %v182, %v181
    %v236 = vpack.c.bf16 %v184, %v183
    %v237 = vpack.c.bf16 %v186, %v185
    %v238 = vpack.c.bf16 %v188, %v187
    %v239 = vpack.c.bf16 %v190, %v189
    %v240 = vpack.c.bf16 %v192, %v191
    %v241 = vlaneseq
    %v242 = vshrl.u32 %v241, 7
    %v243 = vsub.s32 0, %v242
    %v244 = vrot.slane %v52, %v243
    %v261 = vunpack.c.l.b16 %v193
    %v262 = vunpack.c.l.b16 %v194
    %v263 = vunpack.c.l.b16 %v195
    %v264 = vunpack.c.l.b16 %v196
    %v265 = vunpack.c.l.b16 %v197
    %v266 = vunpack.c.l.b16 %v198
    %v267 = vunpack.c.l.b16 %v199
    %v268 = vunpack.c.l.b16 %v200
    %v269 = vunpack.c.l.b16 %v201
    %v270 = vunpack.c.l.b16 %v202
    %v271 = vunpack.c.l.b16 %v203
    %v272 = vunpack.c.l.b16 %v204
    %v273 = vunpack.c.l.b16 %v205
    %v274 = vunpack.c.l.b16 %v206
    %v275 = vunpack.c.l.b16 %v207
    %v276 = vunpack.c.l.b16 %v208
    %v277 = vpack.c.b16 %v262, %v261
    %v278 = vpack.c.b16 %v264, %v263
    %v279 = vpack.c.b16 %v266, %v265
    %v280 = vpack.c.b16 %v268, %v267
    %v281 = vpack.c.b16 %v270, %v269
    %v282 = vpack.c.b16 %v272, %v271
    %v283 = vpack.c.b16 %v274, %v273
    %v284 = vpack.c.b16 %v276, %v275
    %293 = vmatprep.subr.bf16.mxu0 0
    %294 = vmatpush1.bf16.msra.mxu0 %v284
    %295 = vmatprep.subr.bf16.mxu0 0
    %296 = vmatpush1.bf16.msra.mxu0 %v283
    %297 = vmatprep.subr.bf16.mxu0 0
    %298 = vmatpush1.bf16.msra.mxu0 %v282
    %299 = vmatprep.subr.bf16.mxu0 0
    %300 = vmatpush1.bf16.msra.mxu0 %v281
    %301 = vmatprep.subr.bf16.mxu0 0
    %302 = vmatpush1.bf16.msra.mxu0 %v280
    %303 = vmatprep.subr.bf16.mxu0 0
    %304 = vmatpush1.bf16.msra.mxu0 %v279
    %305 = vmatprep.subr.bf16.mxu0 0
    %306 = vmatpush1.bf16.msra.mxu0 %v278
    %307 = vmatprep.subr.bf16.mxu0 0
    %308 = vmatpush1.bf16.msra.mxu0 %v277
    %309 = vmatprep.subr.bf16.mxu0 0
    %310 = vmatpush2.bf16.msra.mxu0 0
    %311 = vmatprep.subr.bf16.mxu0 0
    %312 = vmatpush2.bf16.msra.mxu0 0
    %313 = vmatprep.subr.bf16.mxu0 0
    %314 = vmatpush2.bf16.msra.mxu0 0
    %315 = vmatprep.subr.bf16.mxu0 0
    %316 = vmatpush2.bf16.msra.mxu0 0
    %317 = vmatprep.subr.bf16.mxu0 0
    %318 = vmatpush2.bf16.msra.mxu0 0
    %319 = vmatprep.subr.bf16.mxu0 0
    %320 = vmatpush2.bf16.msra.mxu0 0
    %321 = vmatprep.subr.bf16.mxu0 0
    %322 = vmatpush2.bf16.msra.mxu0 0
    %323 = vmatprep.subr.bf16.mxu0 0
    %324 = vmatpush2.bf16.msra.mxu0 0
    %325 = vmatprep.mubr.bf16.mxu0 0
    %326 = vmatmul.mubr.bf16.gmra.mxu0 %v209
    %v327 = vpop.f32.mrf.mxu0
    %v328 = vadd.f32 %v244, %v327
    %v329 = vpop.f32.mrf.mxu0
    %v330 = vpop.f32.mrf.mxu0
    %v331 = vadd.f32 %v244, %v330
    %v332 = vpop.f32.mrf.mxu0
    %333 = vmatprep.mubr.bf16.mxu0 0
    %334 = vmatmul.mubr.bf16.gmra.mxu0 %v210
    %v335 = vpop.f32.mrf.mxu0
    %v336 = vadd.f32 %v244, %v335
    %v337 = vpop.f32.mrf.mxu0
    %v338 = vpop.f32.mrf.mxu0
    %v339 = vadd.f32 %v244, %v338
    %v340 = vpop.f32.mrf.mxu0
    %341 = vmatprep.mubr.bf16.mxu0 0
    %342 = vmatmul.mubr.bf16.gmra.mxu0 %v211
    %v343 = vpop.f32.mrf.mxu0
    %v344 = vadd.f32 %v244, %v343
    %v345 = vpop.f32.mrf.mxu0
    %v346 = vpop.f32.mrf.mxu0
    %v347 = vadd.f32 %v244, %v346
    %v348 = vpop.f32.mrf.mxu0
    %349 = vmatprep.mubr.bf16.mxu0 0
    %350 = vmatmul.mubr.bf16.gmra.mxu0 %v212
    %v351 = vpop.f32.mrf.mxu0
    %v352 = vadd.f32 %v244, %v351
    %v353 = vpop.f32.mrf.mxu0
    %v354 = vpop.f32.mrf.mxu0
    %v355 = vadd.f32 %v244, %v354
    %v356 = vpop.f32.mrf.mxu0
    %357 = vmatprep.mubr.bf16.mxu0 0
    %358 = vmatmul.mubr.bf16.gmra.mxu0 %v213
    %v359 = vpop.f32.mrf.mxu0
    %v360 = vadd.f32 %v244, %v359
    %v361 = vpop.f32.mrf.mxu0
    %v362 = vpop.f32.mrf.mxu0
    %v363 = vadd.f32 %v244, %v362
    %v364 = vpop.f32.mrf.mxu0
    %365 = vmatprep.mubr.bf16.mxu0 0
    %366 = vmatmul.mubr.bf16.gmra.mxu0 %v214
    %v367 = vpop.f32.mrf.mxu0
    %v368 = vadd.f32 %v244, %v367
    %v369 = vpop.f32.mrf.mxu0
    %v370 = vpop.f32.mrf.mxu0
    %v371 = vadd.f32 %v244, %v370
    %v372 = vpop.f32.mrf.mxu0
    %373 = vmatprep.mubr.bf16.mxu0 0
    %374 = vmatmul.mubr.bf16.gmra.mxu0 %v215
    %v375 = vpop.f32.mrf.mxu0
    %v376 = vadd.f32 %v244, %v375
    %v377 = vpop.f32.mrf.mxu0
    %v378 = vpop.f32.mrf.mxu0
    %v379 = vadd.f32 %v244, %v378
    %v380 = vpop.f32.mrf.mxu0
    %381 = vmatprep.mubr.bf16.mxu0 0
    %382 = vmatmul.mubr.bf16.gmra.mxu0 %v216
    %v383 = vpop.f32.mrf.mxu0
    %v384 = vadd.f32 %v244, %v383
    %v385 = vpop.f32.mrf.mxu0
    %v386 = vpop.f32.mrf.mxu0
    %v387 = vadd.f32 %v244, %v386
    %v388 = vpop.f32.mrf.mxu0
    %389 = vmatprep.mubr.bf16.mxu0 0
    %390 = vmatmul.mubr.bf16.gmra.mxu0 %v217
    %v391 = vpop.f32.mrf.mxu0
    %v392 = vadd.f32 %v244, %v391
    %v393 = vpop.f32.mrf.mxu0
    %v394 = vpop.f32.mrf.mxu0
    %v395 = vadd.f32 %v244, %v394
    %v396 = vpop.f32.mrf.mxu0
    %397 = vmatprep.mubr.bf16.mxu0 0
    %398 = vmatmul.mubr.bf16.gmra.mxu0 %v218
    %v399 = vpop.f32.mrf.mxu0
    %v400 = vadd.f32 %v244, %v399
    %v401 = vpop.f32.mrf.mxu0
    %v402 = vpop.f32.mrf.mxu0
    %v403 = vadd.f32 %v244, %v402
    %v404 = vpop.f32.mrf.mxu0
    %405 = vmatprep.mubr.bf16.mxu0 0
    %406 = vmatmul.mubr.bf16.gmra.mxu0 %v219
    %v407 = vpop.f32.mrf.mxu0
    %v408 = vadd.f32 %v244, %v407
    %v409 = vpop.f32.mrf.mxu0
    %v410 = vpop.f32.mrf.mxu0
    %v411 = vadd.f32 %v244, %v410
    %v412 = vpop.f32.mrf.mxu0
    %413 = vmatprep.mubr.bf16.mxu0 0
    %414 = vmatmul.mubr.bf16.gmra.mxu0 %v220
    %v415 = vpop.f32.mrf.mxu0
    %v416 = vadd.f32 %v244, %v415
    %v417 = vpop.f32.mrf.mxu0
    %v418 = vpop.f32.mrf.mxu0
    %v419 = vadd.f32 %v244, %v418
    %v420 = vpop.f32.mrf.mxu0
    %421 = vmatprep.mubr.bf16.mxu0 0
    %422 = vmatmul.mubr.bf16.gmra.mxu0 %v221
    %v423 = vpop.f32.mrf.mxu0
    %v424 = vadd.f32 %v244, %v423
    %v425 = vpop.f32.mrf.mxu0
    %v426 = vpop.f32.mrf.mxu0
    %v427 = vadd.f32 %v244, %v426
    %v428 = vpop.f32.mrf.mxu0
    %429 = vmatprep.mubr.bf16.mxu0 0
    %430 = vmatmul.mubr.bf16.gmra.mxu0 %v222
    %v431 = vpop.f32.mrf.mxu0
    %v432 = vadd.f32 %v244, %v431
    %v433 = vpop.f32.mrf.mxu0
    %v434 = vpop.f32.mrf.mxu0
    %v435 = vadd.f32 %v244, %v434
    %v436 = vpop.f32.mrf.mxu0
    %437 = vmatprep.mubr.bf16.mxu0 0
    %438 = vmatmul.mubr.bf16.gmra.mxu0 %v223
    %v439 = vpop.f32.mrf.mxu0
    %v440 = vadd.f32 %v244, %v439
    %v441 = vpop.f32.mrf.mxu0
    %v442 = vpop.f32.mrf.mxu0
    %v443 = vadd.f32 %v244, %v442
    %v444 = vpop.f32.mrf.mxu0
    %445 = vmatprep.mubr.bf16.mxu0 0
    %446 = vmatmul.mubr.bf16.gmra.mxu0 %v224
    %v447 = vpop.f32.mrf.mxu0
    %v448 = vadd.f32 %v244, %v447
    %v449 = vpop.f32.mrf.mxu0
    %v450 = vpop.f32.mrf.mxu0
    %v451 = vadd.f32 %v244, %v450
    %v452 = vpop.f32.mrf.mxu0
    %453 = vmatprep.mubr.bf16.mxu0 0
    %454 = vmatmul.mubr.bf16.gmra.mxu0 %v225
    %v455 = vpop.f32.mrf.mxu0
    %v456 = vadd.f32 %v244, %v455
    %v457 = vpop.f32.mrf.mxu0
    %v458 = vpop.f32.mrf.mxu0
    %v459 = vadd.f32 %v244, %v458
    %v460 = vpop.f32.mrf.mxu0
    %461 = vmatprep.mubr.bf16.mxu0 0
    %462 = vmatmul.mubr.bf16.gmra.mxu0 %v226
    %v463 = vpop.f32.mrf.mxu0
    %v464 = vadd.f32 %v244, %v463
    %v465 = vpop.f32.mrf.mxu0
    %v466 = vpop.f32.mrf.mxu0
    %v467 = vadd.f32 %v244, %v466
    %v468 = vpop.f32.mrf.mxu0
    %469 = vmatprep.mubr.bf16.mxu0 0
    %470 = vmatmul.mubr.bf16.gmra.mxu0 %v227
    %v471 = vpop.f32.mrf.mxu0
    %v472 = vadd.f32 %v244, %v471
    %v473 = vpop.f32.mrf.mxu0
    %v474 = vpop.f32.mrf.mxu0
    %v475 = vadd.f32 %v244, %v474
    %v476 = vpop.f32.mrf.mxu0
    %477 = vmatprep.mubr.bf16.mxu0 0
    %478 = vmatmul.mubr.bf16.gmra.mxu0 %v228
    %v479 = vpop.f32.mrf.mxu0
    %v480 = vadd.f32 %v244, %v479
    %v481 = vpop.f32.mrf.mxu0
    %v482 = vpop.f32.mrf.mxu0
    %v483 = vadd.f32 %v244, %v482
    %v484 = vpop.f32.mrf.mxu0
    %485 = vmatprep.mubr.bf16.mxu0 0
    %486 = vmatmul.mubr.bf16.gmra.mxu0 %v229
    %v487 = vpop.f32.mrf.mxu0
    %v488 = vadd.f32 %v244, %v487
    %v489 = vpop.f32.mrf.mxu0
    %v490 = vpop.f32.mrf.mxu0
    %v491 = vadd.f32 %v244, %v490
    %v492 = vpop.f32.mrf.mxu0
    %493 = vmatprep.mubr.bf16.mxu0 0
    %494 = vmatmul.mubr.bf16.gmra.mxu0 %v230
    %v495 = vpop.f32.mrf.mxu0
    %v496 = vadd.f32 %v244, %v495
    %v497 = vpop.f32.mrf.mxu0
    %v498 = vpop.f32.mrf.mxu0
    %v499 = vadd.f32 %v244, %v498
    %v500 = vpop.f32.mrf.mxu0
    %501 = vmatprep.mubr.bf16.mxu0 0
    %502 = vmatmul.mubr.bf16.gmra.mxu0 %v231
    %v503 = vpop.f32.mrf.mxu0
    %v504 = vadd.f32 %v244, %v503
    %v505 = vpop.f32.mrf.mxu0
    %v506 = vpop.f32.mrf.mxu0
    %v507 = vadd.f32 %v244, %v506
    %v508 = vpop.f32.mrf.mxu0
    %509 = vmatprep.mubr.bf16.mxu0 0
    %510 = vmatmul.mubr.bf16.gmra.mxu0 %v232
    %v511 = vpop.f32.mrf.mxu0
    %v512 = vadd.f32 %v244, %v511
    %v513 = vpop.f32.mrf.mxu0
    %v514 = vpop.f32.mrf.mxu0
    %v515 = vadd.f32 %v244, %v514
    %v516 = vpop.f32.mrf.mxu0
    %517 = vmatprep.mubr.bf16.mxu0 0
    %518 = vmatmul.mubr.bf16.gmra.mxu0 %v233
    %v519 = vpop.f32.mrf.mxu0
    %v520 = vadd.f32 %v244, %v519
    %v521 = vpop.f32.mrf.mxu0
    %v522 = vpop.f32.mrf.mxu0
    %v523 = vadd.f32 %v244, %v522
    %v524 = vpop.f32.mrf.mxu0
    %525 = vmatprep.mubr.bf16.mxu0 0
    %526 = vmatmul.mubr.bf16.gmra.mxu0 %v234
    %v527 = vpop.f32.mrf.mxu0
    %v528 = vadd.f32 %v244, %v527
    %v529 = vpop.f32.mrf.mxu0
    %v530 = vpop.f32.mrf.mxu0
    %v531 = vadd.f32 %v244, %v530
    %v532 = vpop.f32.mrf.mxu0
    %533 = vmatprep.mubr.bf16.mxu0 0
    %534 = vmatmul.mubr.bf16.gmra.mxu0 %v235
    %v535 = vpop.f32.mrf.mxu0
    %v536 = vadd.f32 %v244, %v535
    %v537 = vpop.f32.mrf.mxu0
    %v538 = vpop.f32.mrf.mxu0
    %v539 = vadd.f32 %v244, %v538
    %v540 = vpop.f32.mrf.mxu0
    %541 = vmatprep.mubr.bf16.mxu0 0
    %542 = vmatmul.mubr.bf16.gmra.mxu0 %v236
    %v543 = vpop.f32.mrf.mxu0
    %v544 = vadd.f32 %v244, %v543
    %v545 = vpop.f32.mrf.mxu0
    %v546 = vpop.f32.mrf.mxu0
    %v547 = vadd.f32 %v244, %v546
    %v548 = vpop.f32.mrf.mxu0
    %549 = vmatprep.mubr.bf16.mxu0 0
    %550 = vmatmul.mubr.bf16.gmra.mxu0 %v237
    %v551 = vpop.f32.mrf.mxu0
    %v552 = vadd.f32 %v244, %v551
    %v553 = vpop.f32.mrf.mxu0
    %v554 = vpop.f32.mrf.mxu0
    %v555 = vadd.f32 %v244, %v554
    %v556 = vpop.f32.mrf.mxu0
    %557 = vmatprep.mubr.bf16.mxu0 0
    %558 = vmatmul.mubr.bf16.gmra.mxu0 %v238
    %v559 = vpop.f32.mrf.mxu0
    %v560 = vadd.f32 %v244, %v559
    %v561 = vpop.f32.mrf.mxu0
    %v562 = vpop.f32.mrf.mxu0
    %v563 = vadd.f32 %v244, %v562
    %v564 = vpop.f32.mrf.mxu0
    %565 = vmatprep.mubr.bf16.mxu0 0
    %566 = vmatmul.mubr.bf16.gmra.mxu0 %v239
    %v567 = vpop.f32.mrf.mxu0
    %v568 = vadd.f32 %v244, %v567
    %v569 = vpop.f32.mrf.mxu0
    %v570 = vpop.f32.mrf.mxu0
    %v571 = vadd.f32 %v244, %v570
    %v572 = vpop.f32.mrf.mxu0
    %573 = vmatprep.mubr.bf16.mxu0 0
    %574 = vmatmul.mubr.bf16.gmra.mxu0 %v240
    %v575 = vpop.f32.mrf.mxu0
    %v576 = vadd.f32 %v244, %v575
    %v577 = vpop.f32.mrf.mxu0
    %v578 = vpop.f32.mrf.mxu0
    %v579 = vadd.f32 %v244, %v578
    %v580 = vpop.f32.mrf.mxu0
    %581 = vdwg.mxu0
    %v582 = vadd.f32 %v328, %v331
    %v583 = vadd.f32 %v582, %v336
    %v584 = vadd.f32 %v583, %v339
    %v585 = vadd.f32 %v584, %v344
    %v586 = vadd.f32 %v585, %v347
    %v587 = vadd.f32 %v586, %v352
    %v588 = vadd.f32 %v587, %v355
    %v589 = vadd.f32 %v588, %v360
    %v590 = vadd.f32 %v589, %v363
    %v591 = vadd.f32 %v590, %v368
    %v592 = vadd.f32 %v591, %v371
    %v593 = vadd.f32 %v592, %v376
    %v594 = vadd.f32 %v593, %v379
    %v595 = vadd.f32 %v594, %v384
    %v596 = vadd.f32 %v595, %v387
    %v597 = vadd.f32 %v596, %v392
    %v598 = vadd.f32 %v597, %v395
    %v599 = vadd.f32 %v598, %v400
    %v600 = vadd.f32 %v599, %v403
    %v601 = vadd.f32 %v600, %v408
    %v602 = vadd.f32 %v601, %v411
    %v603 = vadd.f32 %v602, %v416
    %v604 = vadd.f32 %v603, %v419
    %v605 = vadd.f32 %v604, %v424
    %v606 = vadd.f32 %v605, %v427
    %v607 = vadd.f32 %v606, %v432
    %v608 = vadd.f32 %v607, %v435
    %v609 = vadd.f32 %v608, %v440
    %v610 = vadd.f32 %v609, %v443
    %v611 = vadd.f32 %v610, %v448
    %v612 = vadd.f32 %v611, %v451
    %v613 = vrot.slane %v612, 4
    %v614 = vadd.f32 %v612, %v613
    %v615 = vrot.slane %v614, 2
    %v616 = vadd.f32 %v614, %v615
    %v617 = vrot.slane %v616, 1
    %v618 = vadd.f32 %v616, %v617
    %v619 = vadd.f32 %v456, %v459
    %v620 = vadd.f32 %v619, %v464
    %v621 = vadd.f32 %v620, %v467
    %v622 = vadd.f32 %v621, %v472
    %v623 = vadd.f32 %v622, %v475
    %v624 = vadd.f32 %v623, %v480
    %v625 = vadd.f32 %v624, %v483
    %v626 = vadd.f32 %v625, %v488
    %v627 = vadd.f32 %v626, %v491
    %v628 = vadd.f32 %v627, %v496
    %v629 = vadd.f32 %v628, %v499
    %v630 = vadd.f32 %v629, %v504
    %v631 = vadd.f32 %v630, %v507
    %v632 = vadd.f32 %v631, %v512
    %v633 = vadd.f32 %v632, %v515
    %v634 = vadd.f32 %v633, %v520
    %v635 = vadd.f32 %v634, %v523
    %v636 = vadd.f32 %v635, %v528
    %v637 = vadd.f32 %v636, %v531
    %v638 = vadd.f32 %v637, %v536
    %v639 = vadd.f32 %v638, %v539
    %v640 = vadd.f32 %v639, %v544
    %v641 = vadd.f32 %v640, %v547
    %v642 = vadd.f32 %v641, %v552
    %v643 = vadd.f32 %v642, %v555
    %v644 = vadd.f32 %v643, %v560
    %v645 = vadd.f32 %v644, %v563
    %v646 = vadd.f32 %v645, %v568
    %v647 = vadd.f32 %v646, %v571
    %v648 = vadd.f32 %v647, %v576
    %v649 = vadd.f32 %v648, %v579
    %v650 = vrot.slane %v649, 4
    %v651 = vadd.f32 %v649, %v650
    %v652 = vrot.slane %v651, 2
    %v653 = vadd.f32 %v651, %v652
    %v654 = vrot.slane %v653, 1
    %v655 = vadd.f32 %v653, %v654
    %v656 = vmul.f32 %v618, 0.00390625
    %v657 = vmul.f32 %v655, 0.00390625
    %v658 = vsub.f32 %v328, %v656
    %v659 = vsub.f32 %v331, %v656
    %v660 = vsub.f32 %v336, %v656
    %v661 = vsub.f32 %v339, %v656
    %v662 = vsub.f32 %v344, %v656
    %v663 = vsub.f32 %v347, %v656
    %v664 = vsub.f32 %v352, %v656
    %v665 = vsub.f32 %v355, %v656
    %v666 = vsub.f32 %v360, %v656
    %v667 = vsub.f32 %v363, %v656
    %v668 = vsub.f32 %v368, %v656
    %v669 = vsub.f32 %v371, %v656
    %v670 = vsub.f32 %v376, %v656
    %v671 = vsub.f32 %v379, %v656
    %v672 = vsub.f32 %v384, %v656
    %v673 = vsub.f32 %v387, %v656
    %v674 = vsub.f32 %v392, %v656
    %v675 = vsub.f32 %v395, %v656
    %v676 = vsub.f32 %v400, %v656
    %v677 = vsub.f32 %v403, %v656
    %v678 = vsub.f32 %v408, %v656
    %v679 = vsub.f32 %v411, %v656
    %v680 = vsub.f32 %v416, %v656
    %v681 = vsub.f32 %v419, %v656
    %v682 = vsub.f32 %v424, %v656
    %v683 = vsub.f32 %v427, %v656
    %v684 = vsub.f32 %v432, %v656
    %v685 = vsub.f32 %v435, %v656
    %v686 = vsub.f32 %v440, %v656
    %v687 = vsub.f32 %v443, %v656
    %v688 = vsub.f32 %v448, %v656
    %v689 = vsub.f32 %v451, %v656
    %v690 = vsub.f32 %v456, %v657
    %v691 = vsub.f32 %v459, %v657
    %v692 = vsub.f32 %v464, %v657
    %v693 = vsub.f32 %v467, %v657
    %v694 = vsub.f32 %v472, %v657
    %v695 = vsub.f32 %v475, %v657
    %v696 = vsub.f32 %v480, %v657
    %v697 = vsub.f32 %v483, %v657
    %v698 = vsub.f32 %v488, %v657
    %v699 = vsub.f32 %v491, %v657
    %v700 = vsub.f32 %v496, %v657
    %v701 = vsub.f32 %v499, %v657
    %v702 = vsub.f32 %v504, %v657
    %v703 = vsub.f32 %v507, %v657
    %v704 = vsub.f32 %v512, %v657
    %v705 = vsub.f32 %v515, %v657
    %v706 = vsub.f32 %v520, %v657
    %v707 = vsub.f32 %v523, %v657
    %v708 = vsub.f32 %v528, %v657
    %v709 = vsub.f32 %v531, %v657
    %v710 = vsub.f32 %v536, %v657
    %v711 = vsub.f32 %v539, %v657
    %v712 = vsub.f32 %v544, %v657
    %v713 = vsub.f32 %v547, %v657
    %v714 = vsub.f32 %v552, %v657
    %v715 = vsub.f32 %v555, %v657
    %v716 = vsub.f32 %v560, %v657
    %v717 = vsub.f32 %v563, %v657
    %v718 = vsub.f32 %v568, %v657
    %v719 = vsub.f32 %v571, %v657
    %v720 = vsub.f32 %v576, %v657
    %v721 = vsub.f32 %v579, %v657
    %v722 = vmul.f32 %v658, %v658
    %v723 = vmul.f32 %v659, %v659
    %v724 = vmul.f32 %v660, %v660
    %v725 = vmul.f32 %v661, %v661
    %v726 = vmul.f32 %v662, %v662
    %v727 = vmul.f32 %v663, %v663
    %v728 = vmul.f32 %v664, %v664
    %v729 = vmul.f32 %v665, %v665
    %v730 = vmul.f32 %v666, %v666
    %v731 = vmul.f32 %v667, %v667
    %v732 = vmul.f32 %v668, %v668
    %v733 = vmul.f32 %v669, %v669
    %v734 = vmul.f32 %v670, %v670
    %v735 = vmul.f32 %v671, %v671
    %v736 = vmul.f32 %v672, %v672
    %v737 = vmul.f32 %v673, %v673
    %v738 = vmul.f32 %v674, %v674
    %v739 = vmul.f32 %v675, %v675
    %v740 = vmul.f32 %v676, %v676
    %v741 = vmul.f32 %v677, %v677
    %v742 = vmul.f32 %v678, %v678
    %v743 = vmul.f32 %v679, %v679
    %v744 = vmul.f32 %v680, %v680
    %v745 = vmul.f32 %v681, %v681
    %v746 = vmul.f32 %v682, %v682
    %v747 = vmul.f32 %v683, %v683
    %v748 = vmul.f32 %v684, %v684
    %v749 = vmul.f32 %v685, %v685
    %v750 = vmul.f32 %v686, %v686
    %v751 = vmul.f32 %v687, %v687
    %v752 = vmul.f32 %v688, %v688
    %v753 = vmul.f32 %v689, %v689
    %v754 = vmul.f32 %v690, %v690
    %v755 = vmul.f32 %v691, %v691
    %v756 = vmul.f32 %v692, %v692
    %v757 = vmul.f32 %v693, %v693
    %v758 = vmul.f32 %v694, %v694
    %v759 = vmul.f32 %v695, %v695
    %v760 = vmul.f32 %v696, %v696
    %v761 = vmul.f32 %v697, %v697
    %v762 = vmul.f32 %v698, %v698
    %v763 = vmul.f32 %v699, %v699
    %v764 = vmul.f32 %v700, %v700
    %v765 = vmul.f32 %v701, %v701
    %v766 = vmul.f32 %v702, %v702
    %v767 = vmul.f32 %v703, %v703
    %v768 = vmul.f32 %v704, %v704
    %v769 = vmul.f32 %v705, %v705
    %v770 = vmul.f32 %v706, %v706
    %v771 = vmul.f32 %v707, %v707
    %v772 = vmul.f32 %v708, %v708
    %v773 = vmul.f32 %v709, %v709
    %v774 = vmul.f32 %v710, %v710
    %v775 = vmul.f32 %v711, %v711
    %v776 = vmul.f32 %v712, %v712
    %v777 = vmul.f32 %v713, %v713
    %v778 = vmul.f32 %v714, %v714
    %v779 = vmul.f32 %v715, %v715
    %v780 = vmul.f32 %v716, %v716
    %v781 = vmul.f32 %v717, %v717
    %v782 = vmul.f32 %v718, %v718
    %v783 = vmul.f32 %v719, %v719
    %v784 = vmul.f32 %v720, %v720
    %v785 = vmul.f32 %v721, %v721
    %v786 = vadd.f32 %v722, %v723
    %v787 = vadd.f32 %v786, %v724
    %v788 = vadd.f32 %v787, %v725
    %v789 = vadd.f32 %v788, %v726
    %v790 = vadd.f32 %v789, %v727
    %v791 = vadd.f32 %v790, %v728
    %v792 = vadd.f32 %v791, %v729
    %v793 = vadd.f32 %v792, %v730
    %v794 = vadd.f32 %v793, %v731
    %v795 = vadd.f32 %v794, %v732
    %v796 = vadd.f32 %v795, %v733
    %v797 = vadd.f32 %v796, %v734
    %v798 = vadd.f32 %v797, %v735
    %v799 = vadd.f32 %v798, %v736
    %v800 = vadd.f32 %v799, %v737
    %v801 = vadd.f32 %v800, %v738
    %v802 = vadd.f32 %v801, %v739
    %v803 = vadd.f32 %v802, %v740
    %v804 = vadd.f32 %v803, %v741
    %v805 = vadd.f32 %v804, %v742
    %v806 = vadd.f32 %v805, %v743
    %v807 = vadd.f32 %v806, %v744
    %v808 = vadd.f32 %v807, %v745
    %v809 = vadd.f32 %v808, %v746
    %v810 = vadd.f32 %v809, %v747
    %v811 = vadd.f32 %v810, %v748
    %v812 = vadd.f32 %v811, %v749
    %v813 = vadd.f32 %v812, %v750
    %v814 = vadd.f32 %v813, %v751
    %v815 = vadd.f32 %v814, %v752
    %v816 = vadd.f32 %v815, %v753
    %v817 = vrot.slane %v816, 4
    %v818 = vadd.f32 %v816, %v817
    %v819 = vrot.slane %v818, 2
    %v820 = vadd.f32 %v818, %v819
    %v821 = vrot.slane %v820, 1
    %v822 = vadd.f32 %v820, %v821
    %v823 = vadd.f32 %v754, %v755
    %v824 = vadd.f32 %v823, %v756
    %v825 = vadd.f32 %v824, %v757
    %v826 = vadd.f32 %v825, %v758
    %v827 = vadd.f32 %v826, %v759
    %v828 = vadd.f32 %v827, %v760
    %v829 = vadd.f32 %v828, %v761
    %v830 = vadd.f32 %v829, %v762
    %v831 = vadd.f32 %v830, %v763
    %v832 = vadd.f32 %v831, %v764
    %v833 = vadd.f32 %v832, %v765
    %v834 = vadd.f32 %v833, %v766
    %v835 = vadd.f32 %v834, %v767
    %v836 = vadd.f32 %v835, %v768
    %v837 = vadd.f32 %v836, %v769
    %v838 = vadd.f32 %v837, %v770
    %v839 = vadd.f32 %v838, %v771
    %v840 = vadd.f32 %v839, %v772
    %v841 = vadd.f32 %v840, %v773
    %v842 = vadd.f32 %v841, %v774
    %v843 = vadd.f32 %v842, %v775
    %v844 = vadd.f32 %v843, %v776
    %v845 = vadd.f32 %v844, %v777
    %v846 = vadd.f32 %v845, %v778
    %v847 = vadd.f32 %v846, %v779
    %v848 = vadd.f32 %v847, %v780
    %v849 = vadd.f32 %v848, %v781
    %v850 = vadd.f32 %v849, %v782
    %v851 = vadd.f32 %v850, %v783
    %v852 = vadd.f32 %v851, %v784
    %v853 = vadd.f32 %v852, %v785
    %v854 = vrot.slane %v853, 4
    %v855 = vadd.f32 %v853, %v854
    %v856 = vrot.slane %v855, 2
    %v857 = vadd.f32 %v855, %v856
    %v858 = vrot.slane %v857, 1
    %v859 = vadd.f32 %v857, %v858
    %v860 = vmul.f32 %v822, 0.00390625
    %v861 = vmul.f32 %v859, 0.00390625
    %v862 = vadd.f32 %v860, 1e-05
    %v863 = vadd.f32 %v861, 1e-05
    %v864 = vrsqrt.pop %v862
    %v865 = vrsqrt.pop %v863
    %v866 = vmul.f32 %v53, %v864
    %v867 = vmul.f32 %v53, %v865
    %v868 = vlaneseq
    %v869 = vshrl.u32 %v868, 7
    %v870 = vsub.s32 0, %v869
    %v871 = vrot.slane %v866, %v870
    %v872 = vlaneseq
    %v873 = vshrl.u32 %v872, 7
    %v874 = vsub.s32 0, %v873
    %v875 = vrot.slane %v867, %v874
    %v876 = vmul.f32 %v658, %v871
    %v877 = vmul.f32 %v659, %v871
    %v878 = vmul.f32 %v660, %v871
    %v879 = vmul.f32 %v661, %v871
    %v880 = vmul.f32 %v662, %v871
    %v881 = vmul.f32 %v663, %v871
    %v882 = vmul.f32 %v664, %v871
    %v883 = vmul.f32 %v665, %v871
    %v884 = vmul.f32 %v666, %v871
    %v885 = vmul.f32 %v667, %v871
    %v886 = vmul.f32 %v668, %v871
    %v887 = vmul.f32 %v669, %v871
    %v888 = vmul.f32 %v670, %v871
    %v889 = vmul.f32 %v671, %v871
    %v890 = vmul.f32 %v672, %v871
    %v891 = vmul.f32 %v673, %v871
    %v892 = vmul.f32 %v674, %v871
    %v893 = vmul.f32 %v675, %v871
    %v894 = vmul.f32 %v676, %v871
    %v895 = vmul.f32 %v677, %v871
    %v896 = vmul.f32 %v678, %v871
    %v897 = vmul.f32 %v679, %v871
    %v898 = vmul.f32 %v680, %v871
    %v899 = vmul.f32 %v681, %v871
    %v900 = vmul.f32 %v682, %v871
    %v901 = vmul.f32 %v683, %v871
    %v902 = vmul.f32 %v684, %v871
    %v903 = vmul.f32 %v685, %v871
    %v904 = vmul.f32 %v686, %v871
    %v905 = vmul.f32 %v687, %v871
    %v906 = vmul.f32 %v688, %v871
    %v907 = vmul.f32 %v689, %v871
    %v908 = vmul.f32 %v690, %v875
    %v909 = vmul.f32 %v691, %v875
    %v910 = vmul.f32 %v692, %v875
    %v911 = vmul.f32 %v693, %v875
    %v912 = vmul.f32 %v694, %v875
    %v913 = vmul.f32 %v695, %v875
    %v914 = vmul.f32 %v696, %v875
    %v915 = vmul.f32 %v697, %v875
    %v916 = vmul.f32 %v698, %v875
    %v917 = vmul.f32 %v699, %v875
    %v918 = vmul.f32 %v700, %v875
    %v919 = vmul.f32 %v701, %v875
    %v920 = vmul.f32 %v702, %v875
    %v921 = vmul.f32 %v703, %v875
    %v922 = vmul.f32 %v704, %v875
    %v923 = vmul.f32 %v705, %v875
    %v924 = vmul.f32 %v706, %v875
    %v925 = vmul.f32 %v707, %v875
    %v926 = vmul.f32 %v708, %v875
    %v927 = vmul.f32 %v709, %v875
    %v928 = vmul.f32 %v710, %v875
    %v929 = vmul.f32 %v711, %v875
    %v930 = vmul.f32 %v712, %v875
    %v931 = vmul.f32 %v713, %v875
    %v932 = vmul.f32 %v714, %v875
    %v933 = vmul.f32 %v715, %v875
    %v934 = vmul.f32 %v716, %v875
    %v935 = vmul.f32 %v717, %v875
    %v936 = vmul.f32 %v718, %v875
    %v937 = vmul.f32 %v719, %v875
    %v938 = vmul.f32 %v720, %v875
    %v939 = vmul.f32 %v721, %v875
    %v940 = vlaneseq
    %v941 = vshrl.u32 %v940, 7
    %v942 = vsub.s32 0, %v941
    %v943 = vrot.slane %v54, %v942
    %v944 = vadd.f32 %v876, %v943
    %v945 = vadd.f32 %v877, %v943
    %v946 = vadd.f32 %v878, %v943
    %v947 = vadd.f32 %v879, %v943
    %v948 = vadd.f32 %v880, %v943
    %v949 = vadd.f32 %v881, %v943
    %v950 = vadd.f32 %v882, %v943
    %v951 = vadd.f32 %v883, %v943
    %v952 = vadd.f32 %v884, %v943
    %v953 = vadd.f32 %v885, %v943
    %v954 = vadd.f32 %v886, %v943
    %v955 = vadd.f32 %v887, %v943
    %v956 = vadd.f32 %v888, %v943
    %v957 = vadd.f32 %v889, %v943
    %v958 = vadd.f32 %v890, %v943
    %v959 = vadd.f32 %v891, %v943
    %v960 = vadd.f32 %v892, %v943
    %v961 = vadd.f32 %v893, %v943
    %v962 = vadd.f32 %v894, %v943
    %v963 = vadd.f32 %v895, %v943
    %v964 = vadd.f32 %v896, %v943
    %v965 = vadd.f32 %v897, %v943
    %v966 = vadd.f32 %v898, %v943
    %v967 = vadd.f32 %v899, %v943
    %v968 = vadd.f32 %v900, %v943
    %v969 = vadd.f32 %v901, %v943
    %v970 = vadd.f32 %v902, %v943
    %v971 = vadd.f32 %v903, %v943
    %v972 = vadd.f32 %v904, %v943
    %v973 = vadd.f32 %v905, %v943
    %v974 = vadd.f32 %v906, %v943
    %v975 = vadd.f32 %v907, %v943
    %v976 = vadd.f32 %v908, %v943
    %v977 = vadd.f32 %v909, %v943
    %v978 = vadd.f32 %v910, %v943
    %v979 = vadd.f32 %v911, %v943
    %v980 = vadd.f32 %v912, %v943
    %v981 = vadd.f32 %v913, %v943
    %v982 = vadd.f32 %v914, %v943
    %v983 = vadd.f32 %v915, %v943
    %v984 = vadd.f32 %v916, %v943
    %v985 = vadd.f32 %v917, %v943
    %v986 = vadd.f32 %v918, %v943
    %v987 = vadd.f32 %v919, %v943
    %v988 = vadd.f32 %v920, %v943
    %v989 = vadd.f32 %v921, %v943
    %v990 = vadd.f32 %v922, %v943
    %v991 = vadd.f32 %v923, %v943
    %v992 = vadd.f32 %v924, %v943
    %v993 = vadd.f32 %v925, %v943
    %v994 = vadd.f32 %v926, %v943
    %v995 = vadd.f32 %v927, %v943
    %v996 = vadd.f32 %v928, %v943
    %v997 = vadd.f32 %v929, %v943
    %v998 = vadd.f32 %v930, %v943
    %v999 = vadd.f32 %v931, %v943
    %v1000 = vadd.f32 %v932, %v943
    %v1001 = vadd.f32 %v933, %v943
    %v1002 = vadd.f32 %v934, %v943
    %v1003 = vadd.f32 %v935, %v943
    %v1004 = vadd.f32 %v936, %v943
    %v1005 = vadd.f32 %v937, %v943
    %v1006 = vadd.f32 %v938, %v943
    %v1007 = vadd.f32 %v939, %v943
    %v1008 = vld [vmem:[#allocation4] sm:$0xf]
    %v1009 = vld [vmem:[#allocation4 + $0x4] sm:$0xf]
    %v1010 = vld [vmem:[#allocation4 + $0x8] sm:$0xf]
    %v1011 = vld [vmem:[#allocation4 + $0xc] sm:$0xf]
    %v1012 = vld [vmem:[#allocation4 + $0x10] sm:$0xf]
    %v1013 = vld [vmem:[#allocation4 + $0x14] sm:$0xf]
    %v1014 = vld [vmem:[#allocation4 + $0x18] sm:$0xf]
    %v1015 = vld [vmem:[#allocation4 + $0x1c] sm:$0xf]
    %v1016 = vld [vmem:[#allocation4 + $0x20] sm:$0xf]
    %v1017 = vld [vmem:[#allocation4 + $0x24] sm:$0xf]
    %v1018 = vld [vmem:[#allocation4 + $0x28] sm:$0xf]
    %v1019 = vld [vmem:[#allocation4 + $0x2c] sm:$0xf]
    %v1020 = vld [vmem:[#allocation4 + $0x30] sm:$0xf]
    %v1021 = vld [vmem:[#allocation4 + $0x34] sm:$0xf]
    %v1022 = vld [vmem:[#allocation4 + $0x38] sm:$0xf]
    %v1023 = vld [vmem:[#allocation4 + $0x3c] sm:$0xf]
    %v1024 = vpack.c.bf16 %v945, %v944
    %v1025 = vpack.c.bf16 %v947, %v946
    %v1026 = vpack.c.bf16 %v949, %v948
    %v1027 = vpack.c.bf16 %v951, %v950
    %v1028 = vpack.c.bf16 %v953, %v952
    %v1029 = vpack.c.bf16 %v955, %v954
    %v1030 = vpack.c.bf16 %v957, %v956
    %v1031 = vpack.c.bf16 %v959, %v958
    %v1032 = vpack.c.bf16 %v961, %v960
    %v1033 = vpack.c.bf16 %v963, %v962
    %v1034 = vpack.c.bf16 %v965, %v964
    %v1035 = vpack.c.bf16 %v967, %v966
    %v1036 = vpack.c.bf16 %v969, %v968
    %v1037 = vpack.c.bf16 %v971, %v970
    %v1038 = vpack.c.bf16 %v973, %v972
    %v1039 = vpack.c.bf16 %v975, %v974
    %v1040 = vpack.c.bf16 %v977, %v976
    %v1041 = vpack.c.bf16 %v979, %v978
    %v1042 = vpack.c.bf16 %v981, %v980
    %v1043 = vpack.c.bf16 %v983, %v982
    %v1044 = vpack.c.bf16 %v985, %v984
    %v1045 = vpack.c.bf16 %v987, %v986
    %v1046 = vpack.c.bf16 %v989, %v988
    %v1047 = vpack.c.bf16 %v991, %v990
    %v1048 = vpack.c.bf16 %v993, %v992
    %v1049 = vpack.c.bf16 %v995, %v994
    %v1050 = vpack.c.bf16 %v997, %v996
    %v1051 = vpack.c.bf16 %v999, %v998
    %v1052 = vpack.c.bf16 %v1001, %v1000
    %v1053 = vpack.c.bf16 %v1003, %v1002
    %v1054 = vpack.c.bf16 %v1005, %v1004
    %v1055 = vpack.c.bf16 %v1007, %v1006
    %v1056 = vlaneseq
    %v1057 = vshrl.u32 %v1056, 7
    %v1058 = vsub.s32 0, %v1057
    %v1059 = vrot.slane %v55, %v1058
    %v1076 = vunpack.c.l.b16 %v1008
    %v1077 = vunpack.c.l.b16 %v1009
    %v1078 = vunpack.c.l.b16 %v1010
    %v1079 = vunpack.c.l.b16 %v1011
    %v1080 = vunpack.c.l.b16 %v1012
    %v1081 = vunpack.c.l.b16 %v1013
    %v1082 = vunpack.c.l.b16 %v1014
    %v1083 = vunpack.c.l.b16 %v1015
    %v1084 = vunpack.c.l.b16 %v1016
    %v1085 = vunpack.c.l.b16 %v1017
    %v1086 = vunpack.c.l.b16 %v1018
    %v1087 = vunpack.c.l.b16 %v1019
    %v1088 = vunpack.c.l.b16 %v1020
    %v1089 = vunpack.c.l.b16 %v1021
    %v1090 = vunpack.c.l.b16 %v1022
    %v1091 = vunpack.c.l.b16 %v1023
    %v1092 = vpack.c.b16 %v1077, %v1076
    %v1093 = vpack.c.b16 %v1079, %v1078
    %v1094 = vpack.c.b16 %v1081, %v1080
    %v1095 = vpack.c.b16 %v1083, %v1082
    %v1096 = vpack.c.b16 %v1085, %v1084
    %v1097 = vpack.c.b16 %v1087, %v1086
    %v1098 = vpack.c.b16 %v1089, %v1088
    %v1099 = vpack.c.b16 %v1091, %v1090
    %1108 = vmatprep.subr.bf16.mxu0 0
    %1109 = vmatpush1.bf16.msra.mxu0 %v1099
    %1110 = vmatprep.subr.bf16.mxu0 0
    %1111 = vmatpush1.bf16.msra.mxu0 %v1098
    %1112 = vmatprep.subr.bf16.mxu0 0
    %1113 = vmatpush1.bf16.msra.mxu0 %v1097
    %1114 = vmatprep.subr.bf16.mxu0 0
    %1115 = vmatpush1.bf16.msra.mxu0 %v1096
    %1116 = vmatprep.subr.bf16.mxu0 0
    %1117 = vmatpush1.bf16.msra.mxu0 %v1095
    %1118 = vmatprep.subr.bf16.mxu0 0
    %1119 = vmatpush1.bf16.msra.mxu0 %v1094
    %1120 = vmatprep.subr.bf16.mxu0 0
    %1121 = vmatpush1.bf16.msra.mxu0 %v1093
    %1122 = vmatprep.subr.bf16.mxu0 0
    %1123 = vmatpush1.bf16.msra.mxu0 %v1092
    %1124 = vmatprep.subr.bf16.mxu0 0
    %1125 = vmatpush2.bf16.msra.mxu0 0
    %1126 = vmatprep.subr.bf16.mxu0 0
    %1127 = vmatpush2.bf16.msra.mxu0 0
    %1128 = vmatprep.subr.bf16.mxu0 0
    %1129 = vmatpush2.bf16.msra.mxu0 0
    %1130 = vmatprep.subr.bf16.mxu0 0
    %1131 = vmatpush2.bf16.msra.mxu0 0
    %1132 = vmatprep.subr.bf16.mxu0 0
    %1133 = vmatpush2.bf16.msra.mxu0 0
    %1134 = vmatprep.subr.bf16.mxu0 0
    %1135 = vmatpush2.bf16.msra.mxu0 0
    %1136 = vmatprep.subr.bf16.mxu0 0
    %1137 = vmatpush2.bf16.msra.mxu0 0
    %1138 = vmatprep.subr.bf16.mxu0 0
    %1139 = vmatpush2.bf16.msra.mxu0 0
    %1140 = vmatprep.mubr.bf16.mxu0 0
    %1141 = vmatmul.mubr.bf16.gmra.mxu0 %v1024
    %v1142 = vpop.f32.mrf.mxu0
    %v1143 = vadd.f32 %v1059, %v1142
    %v1144 = vpop.f32.mrf.mxu0
    %v1145 = vpop.f32.mrf.mxu0
    %v1146 = vadd.f32 %v1059, %v1145
    %v1147 = vpop.f32.mrf.mxu0
    %1148 = vmatprep.mubr.bf16.mxu0 0
    %1149 = vmatmul.mubr.bf16.gmra.mxu0 %v1025
    %v1150 = vpop.f32.mrf.mxu0
    %v1151 = vadd.f32 %v1059, %v1150
    %v1152 = vpop.f32.mrf.mxu0
    %v1153 = vpop.f32.mrf.mxu0
    %v1154 = vadd.f32 %v1059, %v1153
    %v1155 = vpop.f32.mrf.mxu0
    %1156 = vmatprep.mubr.bf16.mxu0 0
    %1157 = vmatmul.mubr.bf16.gmra.mxu0 %v1026
    %v1158 = vpop.f32.mrf.mxu0
    %v1159 = vadd.f32 %v1059, %v1158
    %v1160 = vpop.f32.mrf.mxu0
    %v1161 = vpop.f32.mrf.mxu0
    %v1162 = vadd.f32 %v1059, %v1161
    %v1163 = vpop.f32.mrf.mxu0
    %1164 = vmatprep.mubr.bf16.mxu0 0
    %1165 = vmatmul.mubr.bf16.gmra.mxu0 %v1027
    %v1166 = vpop.f32.mrf.mxu0
    %v1167 = vadd.f32 %v1059, %v1166
    %v1168 = vpop.f32.mrf.mxu0
    %v1169 = vpop.f32.mrf.mxu0
    %v1170 = vadd.f32 %v1059, %v1169
    %v1171 = vpop.f32.mrf.mxu0
    %1172 = vmatprep.mubr.bf16.mxu0 0
    %1173 = vmatmul.mubr.bf16.gmra.mxu0 %v1028
    %v1174 = vpop.f32.mrf.mxu0
    %v1175 = vadd.f32 %v1059, %v1174
    %v1176 = vpop.f32.mrf.mxu0
    %v1177 = vpop.f32.mrf.mxu0
    %v1178 = vadd.f32 %v1059, %v1177
    %v1179 = vpop.f32.mrf.mxu0
    %1180 = vmatprep.mubr.bf16.mxu0 0
    %1181 = vmatmul.mubr.bf16.gmra.mxu0 %v1029
    %v1182 = vpop.f32.mrf.mxu0
    %v1183 = vadd.f32 %v1059, %v1182
    %v1184 = vpop.f32.mrf.mxu0
    %v1185 = vpop.f32.mrf.mxu0
    %v1186 = vadd.f32 %v1059, %v1185
    %v1187 = vpop.f32.mrf.mxu0
    %1188 = vmatprep.mubr.bf16.mxu0 0
    %1189 = vmatmul.mubr.bf16.gmra.mxu0 %v1030
    %v1190 = vpop.f32.mrf.mxu0
    %v1191 = vadd.f32 %v1059, %v1190
    %v1192 = vpop.f32.mrf.mxu0
    %v1193 = vpop.f32.mrf.mxu0
    %v1194 = vadd.f32 %v1059, %v1193
    %v1195 = vpop.f32.mrf.mxu0
    %1196 = vmatprep.mubr.bf16.mxu0 0
    %1197 = vmatmul.mubr.bf16.gmra.mxu0 %v1031
    %v1198 = vpop.f32.mrf.mxu0
    %v1199 = vadd.f32 %v1059, %v1198
    %v1200 = vpop.f32.mrf.mxu0
    %v1201 = vpop.f32.mrf.mxu0
    %v1202 = vadd.f32 %v1059, %v1201
    %v1203 = vpop.f32.mrf.mxu0
    %1204 = vmatprep.mubr.bf16.mxu0 0
    %1205 = vmatmul.mubr.bf16.gmra.mxu0 %v1032
    %v1206 = vpop.f32.mrf.mxu0
    %v1207 = vadd.f32 %v1059, %v1206
    %v1208 = vpop.f32.mrf.mxu0
    %v1209 = vpop.f32.mrf.mxu0
    %v1210 = vadd.f32 %v1059, %v1209
    %v1211 = vpop.f32.mrf.mxu0
    %1212 = vmatprep.mubr.bf16.mxu0 0
    %1213 = vmatmul.mubr.bf16.gmra.mxu0 %v1033
    %v1214 = vpop.f32.mrf.mxu0
    %v1215 = vadd.f32 %v1059, %v1214
    %v1216 = vpop.f32.mrf.mxu0
    %v1217 = vpop.f32.mrf.mxu0
    %v1218 = vadd.f32 %v1059, %v1217
    %v1219 = vpop.f32.mrf.mxu0
    %1220 = vmatprep.mubr.bf16.mxu0 0
    %1221 = vmatmul.mubr.bf16.gmra.mxu0 %v1034
    %v1222 = vpop.f32.mrf.mxu0
    %v1223 = vadd.f32 %v1059, %v1222
    %v1224 = vpop.f32.mrf.mxu0
    %v1225 = vpop.f32.mrf.mxu0
    %v1226 = vadd.f32 %v1059, %v1225
    %v1227 = vpop.f32.mrf.mxu0
    %1228 = vmatprep.mubr.bf16.mxu0 0
    %1229 = vmatmul.mubr.bf16.gmra.mxu0 %v1035
    %v1230 = vpop.f32.mrf.mxu0
    %v1231 = vadd.f32 %v1059, %v1230
    %v1232 = vpop.f32.mrf.mxu0
    %v1233 = vpop.f32.mrf.mxu0
    %v1234 = vadd.f32 %v1059, %v1233
    %v1235 = vpop.f32.mrf.mxu0
    %1236 = vmatprep.mubr.bf16.mxu0 0
    %1237 = vmatmul.mubr.bf16.gmra.mxu0 %v1036
    %v1238 = vpop.f32.mrf.mxu0
    %v1239 = vadd.f32 %v1059, %v1238
    %v1240 = vpop.f32.mrf.mxu0
    %v1241 = vpop.f32.mrf.mxu0
    %v1242 = vadd.f32 %v1059, %v1241
    %v1243 = vpop.f32.mrf.mxu0
    %1244 = vmatprep.mubr.bf16.mxu0 0
    %1245 = vmatmul.mubr.bf16.gmra.mxu0 %v1037
    %v1246 = vpop.f32.mrf.mxu0
    %v1247 = vadd.f32 %v1059, %v1246
    %v1248 = vpop.f32.mrf.mxu0
    %v1249 = vpop.f32.mrf.mxu0
    %v1250 = vadd.f32 %v1059, %v1249
    %v1251 = vpop.f32.mrf.mxu0
    %1252 = vmatprep.mubr.bf16.mxu0 0
    %1253 = vmatmul.mubr.bf16.gmra.mxu0 %v1038
    %v1254 = vpop.f32.mrf.mxu0
    %v1255 = vadd.f32 %v1059, %v1254
    %v1256 = vpop.f32.mrf.mxu0
    %v1257 = vpop.f32.mrf.mxu0
    %v1258 = vadd.f32 %v1059, %v1257
    %v1259 = vpop.f32.mrf.mxu0
    %1260 = vmatprep.mubr.bf16.mxu0 0
    %1261 = vmatmul.mubr.bf16.gmra.mxu0 %v1039
    %v1262 = vpop.f32.mrf.mxu0
    %v1263 = vadd.f32 %v1059, %v1262
    %v1264 = vpop.f32.mrf.mxu0
    %v1265 = vpop.f32.mrf.mxu0
    %v1266 = vadd.f32 %v1059, %v1265
    %v1267 = vpop.f32.mrf.mxu0
    %1268 = vmatprep.mubr.bf16.mxu0 0
    %1269 = vmatmul.mubr.bf16.gmra.mxu0 %v1040
    %v1270 = vpop.f32.mrf.mxu0
    %v1271 = vadd.f32 %v1059, %v1270
    %v1272 = vpop.f32.mrf.mxu0
    %v1273 = vpop.f32.mrf.mxu0
    %v1274 = vadd.f32 %v1059, %v1273
    %v1275 = vpop.f32.mrf.mxu0
    %1276 = vmatprep.mubr.bf16.mxu0 0
    %1277 = vmatmul.mubr.bf16.gmra.mxu0 %v1041
    %v1278 = vpop.f32.mrf.mxu0
    %v1279 = vadd.f32 %v1059, %v1278
    %v1280 = vpop.f32.mrf.mxu0
    %v1281 = vpop.f32.mrf.mxu0
    %v1282 = vadd.f32 %v1059, %v1281
    %v1283 = vpop.f32.mrf.mxu0
    %1284 = vmatprep.mubr.bf16.mxu0 0
    %1285 = vmatmul.mubr.bf16.gmra.mxu0 %v1042
    %v1286 = vpop.f32.mrf.mxu0
    %v1287 = vadd.f32 %v1059, %v1286
    %v1288 = vpop.f32.mrf.mxu0
    %v1289 = vpop.f32.mrf.mxu0
    %v1290 = vadd.f32 %v1059, %v1289
    %v1291 = vpop.f32.mrf.mxu0
    %1292 = vmatprep.mubr.bf16.mxu0 0
    %1293 = vmatmul.mubr.bf16.gmra.mxu0 %v1043
    %v1294 = vpop.f32.mrf.mxu0
    %v1295 = vadd.f32 %v1059, %v1294
    %v1296 = vpop.f32.mrf.mxu0
    %v1297 = vpop.f32.mrf.mxu0
    %v1298 = vadd.f32 %v1059, %v1297
    %v1299 = vpop.f32.mrf.mxu0
    %1300 = vmatprep.mubr.bf16.mxu0 0
    %1301 = vmatmul.mubr.bf16.gmra.mxu0 %v1044
    %v1302 = vpop.f32.mrf.mxu0
    %v1303 = vadd.f32 %v1059, %v1302
    %v1304 = vpop.f32.mrf.mxu0
    %v1305 = vpop.f32.mrf.mxu0
    %v1306 = vadd.f32 %v1059, %v1305
    %v1307 = vpop.f32.mrf.mxu0
    %1308 = vmatprep.mubr.bf16.mxu0 0
    %1309 = vmatmul.mubr.bf16.gmra.mxu0 %v1045
    %v1310 = vpop.f32.mrf.mxu0
    %v1311 = vadd.f32 %v1059, %v1310
    %v1312 = vpop.f32.mrf.mxu0
    %v1313 = vpop.f32.mrf.mxu0
    %v1314 = vadd.f32 %v1059, %v1313
    %v1315 = vpop.f32.mrf.mxu0
    %1316 = vmatprep.mubr.bf16.mxu0 0
    %1317 = vmatmul.mubr.bf16.gmra.mxu0 %v1046
    %v1318 = vpop.f32.mrf.mxu0
    %v1319 = vadd.f32 %v1059, %v1318
    %v1320 = vpop.f32.mrf.mxu0
    %v1321 = vpop.f32.mrf.mxu0
    %v1322 = vadd.f32 %v1059, %v1321
    %v1323 = vpop.f32.mrf.mxu0
    %1324 = vmatprep.mubr.bf16.mxu0 0
    %1325 = vmatmul.mubr.bf16.gmra.mxu0 %v1047
    %v1326 = vpop.f32.mrf.mxu0
    %v1327 = vadd.f32 %v1059, %v1326
    %v1328 = vpop.f32.mrf.mxu0
    %v1329 = vpop.f32.mrf.mxu0
    %v1330 = vadd.f32 %v1059, %v1329
    %v1331 = vpop.f32.mrf.mxu0
    %1332 = vmatprep.mubr.bf16.mxu0 0
    %1333 = vmatmul.mubr.bf16.gmra.mxu0 %v1048
    %v1334 = vpop.f32.mrf.mxu0
    %v1335 = vadd.f32 %v1059, %v1334
    %v1336 = vpop.f32.mrf.mxu0
    %v1337 = vpop.f32.mrf.mxu0
    %v1338 = vadd.f32 %v1059, %v1337
    %v1339 = vpop.f32.mrf.mxu0
    %1340 = vmatprep.mubr.bf16.mxu0 0
    %1341 = vmatmul.mubr.bf16.gmra.mxu0 %v1049
    %v1342 = vpop.f32.mrf.mxu0
    %v1343 = vadd.f32 %v1059, %v1342
    %v1344 = vpop.f32.mrf.mxu0
    %v1345 = vpop.f32.mrf.mxu0
    %v1346 = vadd.f32 %v1059, %v1345
    %v1347 = vpop.f32.mrf.mxu0
    %1348 = vmatprep.mubr.bf16.mxu0 0
    %1349 = vmatmul.mubr.bf16.gmra.mxu0 %v1050
    %v1350 = vpop.f32.mrf.mxu0
    %v1351 = vadd.f32 %v1059, %v1350
    %v1352 = vpop.f32.mrf.mxu0
    %v1353 = vpop.f32.mrf.mxu0
    %v1354 = vadd.f32 %v1059, %v1353
    %v1355 = vpop.f32.mrf.mxu0
    %1356 = vmatprep.mubr.bf16.mxu0 0
    %1357 = vmatmul.mubr.bf16.gmra.mxu0 %v1051
    %v1358 = vpop.f32.mrf.mxu0
    %v1359 = vadd.f32 %v1059, %v1358
    %v1360 = vpop.f32.mrf.mxu0
    %v1361 = vpop.f32.mrf.mxu0
    %v1362 = vadd.f32 %v1059, %v1361
    %v1363 = vpop.f32.mrf.mxu0
    %1364 = vmatprep.mubr.bf16.mxu0 0
    %1365 = vmatmul.mubr.bf16.gmra.mxu0 %v1052
    %v1366 = vpop.f32.mrf.mxu0
    %v1367 = vadd.f32 %v1059, %v1366
    %v1368 = vpop.f32.mrf.mxu0
    %v1369 = vpop.f32.mrf.mxu0
    %v1370 = vadd.f32 %v1059, %v1369
    %v1371 = vpop.f32.mrf.mxu0
    %1372 = vmatprep.mubr.bf16.mxu0 0
    %1373 = vmatmul.mubr.bf16.gmra.mxu0 %v1053
    %v1374 = vpop.f32.mrf.mxu0
    %v1375 = vadd.f32 %v1059, %v1374
    %v1376 = vpop.f32.mrf.mxu0
    %v1377 = vpop.f32.mrf.mxu0
    %v1378 = vadd.f32 %v1059, %v1377
    %v1379 = vpop.f32.mrf.mxu0
    %1380 = vmatprep.mubr.bf16.mxu0 0
    %1381 = vmatmul.mubr.bf16.gmra.mxu0 %v1054
    %v1382 = vpop.f32.mrf.mxu0
    %v1383 = vadd.f32 %v1059, %v1382
    %v1384 = vpop.f32.mrf.mxu0
    %v1385 = vpop.f32.mrf.mxu0
    %v1386 = vadd.f32 %v1059, %v1385
    %v1387 = vpop.f32.mrf.mxu0
    %1388 = vmatprep.mubr.bf16.mxu0 0
    %1389 = vmatmul.mubr.bf16.gmra.mxu0 %v1055
    %v1390 = vpop.f32.mrf.mxu0
    %v1391 = vadd.f32 %v1059, %v1390
    %v1392 = vpop.f32.mrf.mxu0
    %v1393 = vpop.f32.mrf.mxu0
    %v1394 = vadd.f32 %v1059, %v1393
    %v1395 = vpop.f32.mrf.mxu0
    %1396 = vdwg.mxu0
    %v1397 = vadd.f32 %v1143, %v1146
    %v1398 = vadd.f32 %v1397, %v1151
    %v1399 = vadd.f32 %v1398, %v1154
    %v1400 = vadd.f32 %v1399, %v1159
    %v1401 = vadd.f32 %v1400, %v1162
    %v1402 = vadd.f32 %v1401, %v1167
    %v1403 = vadd.f32 %v1402, %v1170
    %v1404 = vadd.f32 %v1403, %v1175
    %v1405 = vadd.f32 %v1404, %v1178
    %v1406 = vadd.f32 %v1405, %v1183
    %v1407 = vadd.f32 %v1406, %v1186
    %v1408 = vadd.f32 %v1407, %v1191
    %v1409 = vadd.f32 %v1408, %v1194
    %v1410 = vadd.f32 %v1409, %v1199
    %v1411 = vadd.f32 %v1410, %v1202
    %v1412 = vadd.f32 %v1411, %v1207
    %v1413 = vadd.f32 %v1412, %v1210
    %v1414 = vadd.f32 %v1413, %v1215
    %v1415 = vadd.f32 %v1414, %v1218
    %v1416 = vadd.f32 %v1415, %v1223
    %v1417 = vadd.f32 %v1416, %v1226
    %v1418 = vadd.f32 %v1417, %v1231
    %v1419 = vadd.f32 %v1418, %v1234
    %v1420 = vadd.f32 %v1419, %v1239
    %v1421 = vadd.f32 %v1420, %v1242
    %v1422 = vadd.f32 %v1421, %v1247
    %v1423 = vadd.f32 %v1422, %v1250
    %v1424 = vadd.f32 %v1423, %v1255
    %v1425 = vadd.f32 %v1424, %v1258
    %v1426 = vadd.f32 %v1425, %v1263
    %v1427 = vadd.f32 %v1426, %v1266
    %v1428 = vrot.slane %v1427, 4
    %v1429 = vadd.f32 %v1427, %v1428
    %v1430 = vrot.slane %v1429, 2
    %v1431 = vadd.f32 %v1429, %v1430
    %v1432 = vrot.slane %v1431, 1
    %v1433 = vadd.f32 %v1431, %v1432
    %v1434 = vadd.f32 %v1271, %v1274
    %v1435 = vadd.f32 %v1434, %v1279
    %v1436 = vadd.f32 %v1435, %v1282
    %v1437 = vadd.f32 %v1436, %v1287
    %v1438 = vadd.f32 %v1437, %v1290
    %v1439 = vadd.f32 %v1438, %v1295
    %v1440 = vadd.f32 %v1439, %v1298
    %v1441 = vadd.f32 %v1440, %v1303
    %v1442 = vadd.f32 %v1441, %v1306
    %v1443 = vadd.f32 %v1442, %v1311
    %v1444 = vadd.f32 %v1443, %v1314
    %v1445 = vadd.f32 %v1444, %v1319
    %v1446 = vadd.f32 %v1445, %v1322
    %v1447 = vadd.f32 %v1446, %v1327
    %v1448 = vadd.f32 %v1447, %v1330
    %v1449 = vadd.f32 %v1448, %v1335
    %v1450 = vadd.f32 %v1449, %v1338
    %v1451 = vadd.f32 %v1450, %v1343
    %v1452 = vadd.f32 %v1451, %v1346
    %v1453 = vadd.f32 %v1452, %v1351
    %v1454 = vadd.f32 %v1453, %v1354
    %v1455 = vadd.f32 %v1454, %v1359
    %v1456 = vadd.f32 %v1455, %v1362
    %v1457 = vadd.f32 %v1456, %v1367
    %v1458 = vadd.f32 %v1457, %v1370
    %v1459 = vadd.f32 %v1458, %v1375
    %v1460 = vadd.f32 %v1459, %v1378
    %v1461 = vadd.f32 %v1460, %v1383
    %v1462 = vadd.f32 %v1461, %v1386
    %v1463 = vadd.f32 %v1462, %v1391
    %v1464 = vadd.f32 %v1463, %v1394
    %v1465 = vrot.slane %v1464, 4
    %v1466 = vadd.f32 %v1464, %v1465
    %v1467 = vrot.slane %v1466, 2
    %v1468 = vadd.f32 %v1466, %v1467
    %v1469 = vrot.slane %v1468, 1
    %v1470 = vadd.f32 %v1468, %v1469
    %v1471 = vmul.f32 %v1433, 0.00390625
    %v1472 = vmul.f32 %v1470, 0.00390625
    %v1473 = vsub.f32 %v1143, %v1471
    %v1474 = vsub.f32 %v1146, %v1471
    %v1475 = vsub.f32 %v1151, %v1471
    %v1476 = vsub.f32 %v1154, %v1471
    %v1477 = vsub.f32 %v1159, %v1471
    %v1478 = vsub.f32 %v1162, %v1471
    %v1479 = vsub.f32 %v1167, %v1471
    %v1480 = vsub.f32 %v1170, %v1471
    %v1481 = vsub.f32 %v1175, %v1471
    %v1482 = vsub.f32 %v1178, %v1471
    %v1483 = vsub.f32 %v1183, %v1471
    %v1484 = vsub.f32 %v1186, %v1471
    %v1485 = vsub.f32 %v1191, %v1471
    %v1486 = vsub.f32 %v1194, %v1471
    %v1487 = vsub.f32 %v1199, %v1471
    %v1488 = vsub.f32 %v1202, %v1471
    %v1489 = vsub.f32 %v1207, %v1471
    %v1490 = vsub.f32 %v1210, %v1471
    %v1491 = vsub.f32 %v1215, %v1471
    %v1492 = vsub.f32 %v1218, %v1471
    %v1493 = vsub.f32 %v1223, %v1471
    %v1494 = vsub.f32 %v1226, %v1471
    %v1495 = vsub.f32 %v1231, %v1471
    %v1496 = vsub.f32 %v1234, %v1471
    %v1497 = vsub.f32 %v1239, %v1471
    %v1498 = vsub.f32 %v1242, %v1471
    %v1499 = vsub.f32 %v1247, %v1471
    %v1500 = vsub.f32 %v1250, %v1471
    %v1501 = vsub.f32 %v1255, %v1471
    %v1502 = vsub.f32 %v1258, %v1471
    %v1503 = vsub.f32 %v1263, %v1471
    %v1504 = vsub.f32 %v1266, %v1471
    %v1505 = vsub.f32 %v1271, %v1472
    %v1506 = vsub.f32 %v1274, %v1472
    %v1507 = vsub.f32 %v1279, %v1472
    %v1508 = vsub.f32 %v1282, %v1472
    %v1509 = vsub.f32 %v1287, %v1472
    %v1510 = vsub.f32 %v1290, %v1472
    %v1511 = vsub.f32 %v1295, %v1472
    %v1512 = vsub.f32 %v1298, %v1472
    %v1513 = vsub.f32 %v1303, %v1472
    %v1514 = vsub.f32 %v1306, %v1472
    %v1515 = vsub.f32 %v1311, %v1472
    %v1516 = vsub.f32 %v1314, %v1472
    %v1517 = vsub.f32 %v1319, %v1472
    %v1518 = vsub.f32 %v1322, %v1472
    %v1519 = vsub.f32 %v1327, %v1472
    %v1520 = vsub.f32 %v1330, %v1472
    %v1521 = vsub.f32 %v1335, %v1472
    %v1522 = vsub.f32 %v1338, %v1472
    %v1523 = vsub.f32 %v1343, %v1472
    %v1524 = vsub.f32 %v1346, %v1472
    %v1525 = vsub.f32 %v1351, %v1472
    %v1526 = vsub.f32 %v1354, %v1472
    %v1527 = vsub.f32 %v1359, %v1472
    %v1528 = vsub.f32 %v1362, %v1472
    %v1529 = vsub.f32 %v1367, %v1472
    %v1530 = vsub.f32 %v1370, %v1472
    %v1531 = vsub.f32 %v1375, %v1472
    %v1532 = vsub.f32 %v1378, %v1472
    %v1533 = vsub.f32 %v1383, %v1472
    %v1534 = vsub.f32 %v1386, %v1472
    %v1535 = vsub.f32 %v1391, %v1472
    %v1536 = vsub.f32 %v1394, %v1472
    %v1537 = vmul.f32 %v1473, %v1473
    %v1538 = vmul.f32 %v1474, %v1474
    %v1539 = vmul.f32 %v1475, %v1475
    %v1540 = vmul.f32 %v1476, %v1476
    %v1541 = vmul.f32 %v1477, %v1477
    %v1542 = vmul.f32 %v1478, %v1478
    %v1543 = vmul.f32 %v1479, %v1479
    %v1544 = vmul.f32 %v1480, %v1480
    %v1545 = vmul.f32 %v1481, %v1481
    %v1546 = vmul.f32 %v1482, %v1482
    %v1547 = vmul.f32 %v1483, %v1483
    %v1548 = vmul.f32 %v1484, %v1484
    %v1549 = vmul.f32 %v1485, %v1485
    %v1550 = vmul.f32 %v1486, %v1486
    %v1551 = vmul.f32 %v1487, %v1487
    %v1552 = vmul.f32 %v1488, %v1488
    %v1553 = vmul.f32 %v1489, %v1489
    %v1554 = vmul.f32 %v1490, %v1490
    %v1555 = vmul.f32 %v1491, %v1491
    %v1556 = vmul.f32 %v1492, %v1492
    %v1557 = vmul.f32 %v1493, %v1493
    %v1558 = vmul.f32 %v1494, %v1494
    %v1559 = vmul.f32 %v1495, %v1495
    %v1560 = vmul.f32 %v1496, %v1496
    %v1561 = vmul.f32 %v1497, %v1497
    %v1562 = vmul.f32 %v1498, %v1498
    %v1563 = vmul.f32 %v1499, %v1499
    %v1564 = vmul.f32 %v1500, %v1500
    %v1565 = vmul.f32 %v1501, %v1501
    %v1566 = vmul.f32 %v1502, %v1502
    %v1567 = vmul.f32 %v1503, %v1503
    %v1568 = vmul.f32 %v1504, %v1504
    %v1569 = vmul.f32 %v1505, %v1505
    %v1570 = vmul.f32 %v1506, %v1506
    %v1571 = vmul.f32 %v1507, %v1507
    %v1572 = vmul.f32 %v1508, %v1508
    %v1573 = vmul.f32 %v1509, %v1509
    %v1574 = vmul.f32 %v1510, %v1510
    %v1575 = vmul.f32 %v1511, %v1511
    %v1576 = vmul.f32 %v1512, %v1512
    %v1577 = vmul.f32 %v1513, %v1513
    %v1578 = vmul.f32 %v1514, %v1514
    %v1579 = vmul.f32 %v1515, %v1515
    %v1580 = vmul.f32 %v1516, %v1516
    %v1581 = vmul.f32 %v1517, %v1517
    %v1582 = vmul.f32 %v1518, %v1518
    %v1583 = vmul.f32 %v1519, %v1519
    %v1584 = vmul.f32 %v1520, %v1520
    %v1585 = vmul.f32 %v1521, %v1521
    %v1586 = vmul.f32 %v1522, %v1522
    %v1587 = vmul.f32 %v1523, %v1523
    %v1588 = vmul.f32 %v1524, %v1524
    %v1589 = vmul.f32 %v1525, %v1525
    %v1590 = vmul.f32 %v1526, %v1526
    %v1591 = vmul.f32 %v1527, %v1527
    %v1592 = vmul.f32 %v1528, %v1528
    %v1593 = vmul.f32 %v1529, %v1529
    %v1594 = vmul.f32 %v1530, %v1530
    %v1595 = vmul.f32 %v1531, %v1531
    %v1596 = vmul.f32 %v1532, %v1532
    %v1597 = vmul.f32 %v1533, %v1533
    %v1598 = vmul.f32 %v1534, %v1534
    %v1599 = vmul.f32 %v1535, %v1535
    %v1600 = vmul.f32 %v1536, %v1536
    %v1601 = vadd.f32 %v1537, %v1538
    %v1602 = vadd.f32 %v1601, %v1539
    %v1603 = vadd.f32 %v1602, %v1540
    %v1604 = vadd.f32 %v1603, %v1541
    %v1605 = vadd.f32 %v1604, %v1542
    %v1606 = vadd.f32 %v1605, %v1543
    %v1607 = vadd.f32 %v1606, %v1544
    %v1608 = vadd.f32 %v1607, %v1545
    %v1609 = vadd.f32 %v1608, %v1546
    %v1610 = vadd.f32 %v1609, %v1547
    %v1611 = vadd.f32 %v1610, %v1548
    %v1612 = vadd.f32 %v1611, %v1549
    %v1613 = vadd.f32 %v1612, %v1550
    %v1614 = vadd.f32 %v1613, %v1551
    %v1615 = vadd.f32 %v1614, %v1552
    %v1616 = vadd.f32 %v1615, %v1553
    %v1617 = vadd.f32 %v1616, %v1554
    %v1618 = vadd.f32 %v1617, %v1555
    %v1619 = vadd.f32 %v1618, %v1556
    %v1620 = vadd.f32 %v1619, %v1557
    %v1621 = vadd.f32 %v1620, %v1558
    %v1622 = vadd.f32 %v1621, %v1559
    %v1623 = vadd.f32 %v1622, %v1560
    %v1624 = vadd.f32 %v1623, %v1561
    %v1625 = vadd.f32 %v1624, %v1562
    %v1626 = vadd.f32 %v1625, %v1563
    %v1627 = vadd.f32 %v1626, %v1564
    %v1628 = vadd.f32 %v1627, %v1565
    %v1629 = vadd.f32 %v1628, %v1566
    %v1630 = vadd.f32 %v1629, %v1567
    %v1631 = vadd.f32 %v1630, %v1568
    %v1632 = vrot.slane %v1631, 4
    %v1633 = vadd.f32 %v1631, %v1632
    %v1634 = vrot.slane %v1633, 2
    %v1635 = vadd.f32 %v1633, %v1634
    %v1636 = vrot.slane %v1635, 1
    %v1637 = vadd.f32 %v1635, %v1636
    %v1638 = vadd.f32 %v1569, %v1570
    %v1639 = vadd.f32 %v1638, %v1571
    %v1640 = vadd.f32 %v1639, %v1572
    %v1641 = vadd.f32 %v1640, %v1573
    %v1642 = vadd.f32 %v1641, %v1574
    %v1643 = vadd.f32 %v1642, %v1575
    %v1644 = vadd.f32 %v1643, %v1576
    %v1645 = vadd.f32 %v1644, %v1577
    %v1646 = vadd.f32 %v1645, %v1578
    %v1647 = vadd.f32 %v1646, %v1579
    %v1648 = vadd.f32 %v1647, %v1580
    %v1649 = vadd.f32 %v1648, %v1581
    %v1650 = vadd.f32 %v1649, %v1582
    %v1651 = vadd.f32 %v1650, %v1583
    %v1652 = vadd.f32 %v1651, %v1584
    %v1653 = vadd.f32 %v1652, %v1585
    %v1654 = vadd.f32 %v1653, %v1586
    %v1655 = vadd.f32 %v1654, %v1587
    %v1656 = vadd.f32 %v1655, %v1588
    %v1657 = vadd.f32 %v1656, %v1589
    %v1658 = vadd.f32 %v1657, %v1590
    %v1659 = vadd.f32 %v1658, %v1591
    %v1660 = vadd.f32 %v1659, %v1592
    %v1661 = vadd.f32 %v1660, %v1593
    %v1662 = vadd.f32 %v1661, %v1594
    %v1663 = vadd.f32 %v1662, %v1595
    %v1664 = vadd.f32 %v1663, %v1596
    %v1665 = vadd.f32 %v1664, %v1597
    %v1666 = vadd.f32 %v1665, %v1598
    %v1667 = vadd.f32 %v1666, %v1599
    %v1668 = vadd.f32 %v1667, %v1600
    %v1669 = vrot.slane %v1668, 4
    %v1670 = vadd.f32 %v1668, %v1669
    %v1671 = vrot.slane %v1670, 2
    %v1672 = vadd.f32 %v1670, %v1671
    %v1673 = vrot.slane %v1672, 1
    %v1674 = vadd.f32 %v1672, %v1673
    %v1675 = vmul.f32 %v1637, 0.00390625
    %v1676 = vmul.f32 %v1674, 0.00390625
    %v1677 = vadd.f32 %v1675, 1e-05
    %v1678 = vadd.f32 %v1676, 1e-05
    %v1679 = vrsqrt.pop %v1677
    %v1680 = vrsqrt.pop %v1678
    %v1681 = vmul.f32 %v56, %v1679
    %v1682 = vmul.f32 %v56, %v1680
    %v1683 = vlaneseq
    %v1684 = vshrl.u32 %v1683, 7
    %v1685 = vsub.s32 0, %v1684
    %v1686 = vrot.slane %v1681, %v1685
    %v1687 = vlaneseq
    %v1688 = vshrl.u32 %v1687, 7
    %v1689 = vsub.s32 0, %v1688
    %v1690 = vrot.slane %v1682, %v1689
    %v1691 = vmul.f32 %v1473, %v1686
    %v1692 = vmul.f32 %v1474, %v1686
    %v1693 = vmul.f32 %v1475, %v1686
    %v1694 = vmul.f32 %v1476, %v1686
    %v1695 = vmul.f32 %v1477, %v1686
    %v1696 = vmul.f32 %v1478, %v1686
    %v1697 = vmul.f32 %v1479, %v1686
    %v1698 = vmul.f32 %v1480, %v1686
    %v1699 = vmul.f32 %v1481, %v1686
    %v1700 = vmul.f32 %v1482, %v1686
    %v1701 = vmul.f32 %v1483, %v1686
    %v1702 = vmul.f32 %v1484, %v1686
    %v1703 = vmul.f32 %v1485, %v1686
    %v1704 = vmul.f32 %v1486, %v1686
    %v1705 = vmul.f32 %v1487, %v1686
    %v1706 = vmul.f32 %v1488, %v1686
    %v1707 = vmul.f32 %v1489, %v1686
    %v1708 = vmul.f32 %v1490, %v1686
    %v1709 = vmul.f32 %v1491, %v1686
    %v1710 = vmul.f32 %v1492, %v1686
    %v1711 = vmul.f32 %v1493, %v1686
    %v1712 = vmul.f32 %v1494, %v1686
    %v1713 = vmul.f32 %v1495, %v1686
    %v1714 = vmul.f32 %v1496, %v1686
    %v1715 = vmul.f32 %v1497, %v1686
    %v1716 = vmul.f32 %v1498, %v1686
    %v1717 = vmul.f32 %v1499, %v1686
    %v1718 = vmul.f32 %v1500, %v1686
    %v1719 = vmul.f32 %v1501, %v1686
    %v1720 = vmul.f32 %v1502, %v1686
    %v1721 = vmul.f32 %v1503, %v1686
    %v1722 = vmul.f32 %v1504, %v1686
    %v1723 = vmul.f32 %v1505, %v1690
    %v1724 = vmul.f32 %v1506, %v1690
    %v1725 = vmul.f32 %v1507, %v1690
    %v1726 = vmul.f32 %v1508, %v1690
    %v1727 = vmul.f32 %v1509, %v1690
    %v1728 = vmul.f32 %v1510, %v1690
    %v1729 = vmul.f32 %v1511, %v1690
    %v1730 = vmul.f32 %v1512, %v1690
    %v1731 = vmul.f32 %v1513, %v1690
    %v1732 = vmul.f32 %v1514, %v1690
    %v1733 = vmul.f32 %v1515, %v1690
    %v1734 = vmul.f32 %v1516, %v1690
    %v1735 = vmul.f32 %v1517, %v1690
    %v1736 = vmul.f32 %v1518, %v1690
    %v1737 = vmul.f32 %v1519, %v1690
    %v1738 = vmul.f32 %v1520, %v1690
    %v1739 = vmul.f32 %v1521, %v1690
    %v1740 = vmul.f32 %v1522, %v1690
    %v1741 = vmul.f32 %v1523, %v1690
    %v1742 = vmul.f32 %v1524, %v1690
    %v1743 = vmul.f32 %v1525, %v1690
    %v1744 = vmul.f32 %v1526, %v1690
    %v1745 = vmul.f32 %v1527, %v1690
    %v1746 = vmul.f32 %v1528, %v1690
    %v1747 = vmul.f32 %v1529, %v1690
    %v1748 = vmul.f32 %v1530, %v1690
    %v1749 = vmul.f32 %v1531, %v1690
    %v1750 = vmul.f32 %v1532, %v1690
    %v1751 = vmul.f32 %v1533, %v1690
    %v1752 = vmul.f32 %v1534, %v1690
    %v1753 = vmul.f32 %v1535, %v1690
    %v1754 = vmul.f32 %v1536, %v1690
    %v1755 = vlaneseq
    %v1756 = vshrl.u32 %v1755, 7
    %v1757 = vsub.s32 0, %v1756
    %v1758 = vrot.slane %v57, %v1757
    %v1759 = vadd.f32 %v1691, %v1758
    %v1760 = vadd.f32 %v1692, %v1758
    %v1761 = vadd.f32 %v1693, %v1758
    %v1762 = vadd.f32 %v1694, %v1758
    %v1763 = vadd.f32 %v1695, %v1758
    %v1764 = vadd.f32 %v1696, %v1758
    %v1765 = vadd.f32 %v1697, %v1758
    %v1766 = vadd.f32 %v1698, %v1758
    %v1767 = vadd.f32 %v1699, %v1758
    %v1768 = vadd.f32 %v1700, %v1758
    %v1769 = vadd.f32 %v1701, %v1758
    %v1770 = vadd.f32 %v1702, %v1758
    %v1771 = vadd.f32 %v1703, %v1758
    %v1772 = vadd.f32 %v1704, %v1758
    %v1773 = vadd.f32 %v1705, %v1758
    %v1774 = vadd.f32 %v1706, %v1758
    %v1775 = vadd.f32 %v1707, %v1758
    %v1776 = vadd.f32 %v1708, %v1758
    %v1777 = vadd.f32 %v1709, %v1758
    %v1778 = vadd.f32 %v1710, %v1758
    %v1779 = vadd.f32 %v1711, %v1758
    %v1780 = vadd.f32 %v1712, %v1758
    %v1781 = vadd.f32 %v1713, %v1758
    %v1782 = vadd.f32 %v1714, %v1758
    %v1783 = vadd.f32 %v1715, %v1758
    %v1784 = vadd.f32 %v1716, %v1758
    %v1785 = vadd.f32 %v1717, %v1758
    %v1786 = vadd.f32 %v1718, %v1758
    %v1787 = vadd.f32 %v1719, %v1758
    %v1788 = vadd.f32 %v1720, %v1758
    %v1789 = vadd.f32 %v1721, %v1758
    %v1790 = vadd.f32 %v1722, %v1758
    %v1791 = vadd.f32 %v1723, %v1758
    %v1792 = vadd.f32 %v1724, %v1758
    %v1793 = vadd.f32 %v1725, %v1758
    %v1794 = vadd.f32 %v1726, %v1758
    %v1795 = vadd.f32 %v1727, %v1758
    %v1796 = vadd.f32 %v1728, %v1758
    %v1797 = vadd.f32 %v1729, %v1758
    %v1798 = vadd.f32 %v1730, %v1758
    %v1799 = vadd.f32 %v1731, %v1758
    %v1800 = vadd.f32 %v1732, %v1758
    %v1801 = vadd.f32 %v1733, %v1758
    %v1802 = vadd.f32 %v1734, %v1758
    %v1803 = vadd.f32 %v1735, %v1758
    %v1804 = vadd.f32 %v1736, %v1758
    %v1805 = vadd.f32 %v1737, %v1758
    %v1806 = vadd.f32 %v1738, %v1758
    %v1807 = vadd.f32 %v1739, %v1758
    %v1808 = vadd.f32 %v1740, %v1758
    %v1809 = vadd.f32 %v1741, %v1758
    %v1810 = vadd.f32 %v1742, %v1758
    %v1811 = vadd.f32 %v1743, %v1758
    %v1812 = vadd.f32 %v1744, %v1758
    %v1813 = vadd.f32 %v1745, %v1758
    %v1814 = vadd.f32 %v1746, %v1758
    %v1815 = vadd.f32 %v1747, %v1758
    %v1816 = vadd.f32 %v1748, %v1758
    %v1817 = vadd.f32 %v1749, %v1758
    %v1818 = vadd.f32 %v1750, %v1758
    %v1819 = vadd.f32 %v1751, %v1758
    %v1820 = vadd.f32 %v1752, %v1758
    %v1821 = vadd.f32 %v1753, %v1758
    %v1822 = vadd.f32 %v1754, %v1758
    %vm1823 = vcmp.ge.f32.partialorder %v1759, 0.0
    %vm1824 = vcmp.ge.f32.partialorder %v1760, 0.0
    %vm1825 = vcmp.ge.f32.partialorder %v1761, 0.0
    %vm1826 = vcmp.ge.f32.partialorder %v1762, 0.0
    %vm1827 = vcmp.ge.f32.partialorder %v1763, 0.0
    %vm1828 = vcmp.ge.f32.partialorder %v1764, 0.0
    %vm1829 = vcmp.ge.f32.partialorder %v1765, 0.0
    %vm1830 = vcmp.ge.f32.partialorder %v1766, 0.0
    %vm1831 = vcmp.ge.f32.partialorder %v1767, 0.0
    %vm1832 = vcmp.ge.f32.partialorder %v1768, 0.0
    %vm1833 = vcmp.ge.f32.partialorder %v1769, 0.0
    %vm1834 = vcmp.ge.f32.partialorder %v1770, 0.0
    %vm1835 = vcmp.ge.f32.partialorder %v1771, 0.0
    %vm1836 = vcmp.ge.f32.partialorder %v1772, 0.0
    %vm1837 = vcmp.ge.f32.partialorder %v1773, 0.0
    %vm1838 = vcmp.ge.f32.partialorder %v1774, 0.0
    %vm1839 = vcmp.ge.f32.partialorder %v1775, 0.0
    %vm1840 = vcmp.ge.f32.partialorder %v1776, 0.0
    %vm1841 = vcmp.ge.f32.partialorder %v1777, 0.0
    %vm1842 = vcmp.ge.f32.partialorder %v1778, 0.0
    %vm1843 = vcmp.ge.f32.partialorder %v1779, 0.0
    %vm1844 = vcmp.ge.f32.partialorder %v1780, 0.0
    %vm1845 = vcmp.ge.f32.partialorder %v1781, 0.0
    %vm1846 = vcmp.ge.f32.partialorder %v1782, 0.0
    %vm1847 = vcmp.ge.f32.partialorder %v1783, 0.0
    %vm1848 = vcmp.ge.f32.partialorder %v1784, 0.0
    %vm1849 = vcmp.ge.f32.partialorder %v1785, 0.0
    %vm1850 = vcmp.ge.f32.partialorder %v1786, 0.0
    %vm1851 = vcmp.ge.f32.partialorder %v1787, 0.0
    %vm1852 = vcmp.ge.f32.partialorder %v1788, 0.0
    %vm1853 = vcmp.ge.f32.partialorder %v1789, 0.0
    %vm1854 = vcmp.ge.f32.partialorder %v1790, 0.0
    %vm1855 = vcmp.ge.f32.partialorder %v1791, 0.0
    %vm1856 = vcmp.ge.f32.partialorder %v1792, 0.0
    %vm1857 = vcmp.ge.f32.partialorder %v1793, 0.0
    %vm1858 = vcmp.ge.f32.partialorder %v1794, 0.0
    %vm1859 = vcmp.ge.f32.partialorder %v1795, 0.0
    %vm1860 = vcmp.ge.f32.partialorder %v1796, 0.0
    %vm1861 = vcmp.ge.f32.partialorder %v1797, 0.0
    %vm1862 = vcmp.ge.f32.partialorder %v1798, 0.0
    %vm1863 = vcmp.ge.f32.partialorder %v1799, 0.0
    %vm1864 = vcmp.ge.f32.partialorder %v1800, 0.0
    %vm1865 = vcmp.ge.f32.partialorder %v1801, 0.0
    %vm1866 = vcmp.ge.f32.partialorder %v1802, 0.0
    %vm1867 = vcmp.ge.f32.partialorder %v1803, 0.0
    %vm1868 = vcmp.ge.f32.partialorder %v1804, 0.0
    %vm1869 = vcmp.ge.f32.partialorder %v1805, 0.0
    %vm1870 = vcmp.ge.f32.partialorder %v1806, 0.0
    %vm1871 = vcmp.ge.f32.partialorder %v1807, 0.0
    %vm1872 = vcmp.ge.f32.partialorder %v1808, 0.0
    %vm1873 = vcmp.ge.f32.partialorder %v1809, 0.0
    %vm1874 = vcmp.ge.f32.partialorder %v1810, 0.0
    %vm1875 = vcmp.ge.f32.partialorder %v1811, 0.0
    %vm1876 = vcmp.ge.f32.partialorder %v1812, 0.0
    %vm1877 = vcmp.ge.f32.partialorder %v1813, 0.0
    %vm1878 = vcmp.ge.f32.partialorder %v1814, 0.0
    %vm1879 = vcmp.ge.f32.partialorder %v1815, 0.0
    %vm1880 = vcmp.ge.f32.partialorder %v1816, 0.0
    %vm1881 = vcmp.ge.f32.partialorder %v1817, 0.0
    %vm1882 = vcmp.ge.f32.partialorder %v1818, 0.0
    %vm1883 = vcmp.ge.f32.partialorder %v1819, 0.0
    %vm1884 = vcmp.ge.f32.partialorder %v1820, 0.0
    %vm1885 = vcmp.ge.f32.partialorder %v1821, 0.0
    %vm1886 = vcmp.ge.f32.partialorder %v1822, 0.0
    %v1887 = vlaneseq
    %v1888 = vshrl.u32 %v1887, 7
    %v1889 = vsub.s32 0, %v1888
    %v1890 = vrot.slane %v61, %v1889
    %v1891 = vmul.f32 %v1890, %v1759
    %v1892 = vmul.f32 %v1890, %v1760
    %v1893 = vmul.f32 %v1890, %v1761
    %v1894 = vmul.f32 %v1890, %v1762
    %v1895 = vmul.f32 %v1890, %v1763
    %v1896 = vmul.f32 %v1890, %v1764
    %v1897 = vmul.f32 %v1890, %v1765
    %v1898 = vmul.f32 %v1890, %v1766
    %v1899 = vmul.f32 %v1890, %v1767
    %v1900 = vmul.f32 %v1890, %v1768
    %v1901 = vmul.f32 %v1890, %v1769
    %v1902 = vmul.f32 %v1890, %v1770
    %v1903 = vmul.f32 %v1890, %v1771
    %v1904 = vmul.f32 %v1890, %v1772
    %v1905 = vmul.f32 %v1890, %v1773
    %v1906 = vmul.f32 %v1890, %v1774
    %v1907 = vmul.f32 %v1890, %v1775
    %v1908 = vmul.f32 %v1890, %v1776
    %v1909 = vmul.f32 %v1890, %v1777
    %v1910 = vmul.f32 %v1890, %v1778
    %v1911 = vmul.f32 %v1890, %v1779
    %v1912 = vmul.f32 %v1890, %v1780
    %v1913 = vmul.f32 %v1890, %v1781
    %v1914 = vmul.f32 %v1890, %v1782
    %v1915 = vmul.f32 %v1890, %v1783
    %v1916 = vmul.f32 %v1890, %v1784
    %v1917 = vmul.f32 %v1890, %v1785
    %v1918 = vmul.f32 %v1890, %v1786
    %v1919 = vmul.f32 %v1890, %v1787
    %v1920 = vmul.f32 %v1890, %v1788
    %v1921 = vmul.f32 %v1890, %v1789
    %v1922 = vmul.f32 %v1890, %v1790
    %v1923 = vmul.f32 %v1890, %v1791
    %v1924 = vmul.f32 %v1890, %v1792
    %v1925 = vmul.f32 %v1890, %v1793
    %v1926 = vmul.f32 %v1890, %v1794
    %v1927 = vmul.f32 %v1890, %v1795
    %v1928 = vmul.f32 %v1890, %v1796
    %v1929 = vmul.f32 %v1890, %v1797
    %v1930 = vmul.f32 %v1890, %v1798
    %v1931 = vmul.f32 %v1890, %v1799
    %v1932 = vmul.f32 %v1890, %v1800
    %v1933 = vmul.f32 %v1890, %v1801
    %v1934 = vmul.f32 %v1890, %v1802
    %v1935 = vmul.f32 %v1890, %v1803
    %v1936 = vmul.f32 %v1890, %v1804
    %v1937 = vmul.f32 %v1890, %v1805
    %v1938 = vmul.f32 %v1890, %v1806
    %v1939 = vmul.f32 %v1890, %v1807
    %v1940 = vmul.f32 %v1890, %v1808
    %v1941 = vmul.f32 %v1890, %v1809
    %v1942 = vmul.f32 %v1890, %v1810
    %v1943 = vmul.f32 %v1890, %v1811
    %v1944 = vmul.f32 %v1890, %v1812
    %v1945 = vmul.f32 %v1890, %v1813
    %v1946 = vmul.f32 %v1890, %v1814
    %v1947 = vmul.f32 %v1890, %v1815
    %v1948 = vmul.f32 %v1890, %v1816
    %v1949 = vmul.f32 %v1890, %v1817
    %v1950 = vmul.f32 %v1890, %v1818
    %v1951 = vmul.f32 %v1890, %v1819
    %v1952 = vmul.f32 %v1890, %v1820
    %v1953 = vmul.f32 %v1890, %v1821
    %v1954 = vmul.f32 %v1890, %v1822
    %v1955 = vsel %vm1823, %v1759, %v1891
    %v1956 = vsel %vm1824, %v1760, %v1892
    %v1957 = vsel %vm1825, %v1761, %v1893
    %v1958 = vsel %vm1826, %v1762, %v1894
    %v1959 = vsel %vm1827, %v1763, %v1895
    %v1960 = vsel %vm1828, %v1764, %v1896
    %v1961 = vsel %vm1829, %v1765, %v1897
    %v1962 = vsel %vm1830, %v1766, %v1898
    %v1963 = vsel %vm1831, %v1767, %v1899
    %v1964 = vsel %vm1832, %v1768, %v1900
    %v1965 = vsel %vm1833, %v1769, %v1901
    %v1966 = vsel %vm1834, %v1770, %v1902
    %v1967 = vsel %vm1835, %v1771, %v1903
    %v1968 = vsel %vm1836, %v1772, %v1904
    %v1969 = vsel %vm1837, %v1773, %v1905
    %v1970 = vsel %vm1838, %v1774, %v1906
    %v1971 = vsel %vm1839, %v1775, %v1907
    %v1972 = vsel %vm1840, %v1776, %v1908
    %v1973 = vsel %vm1841, %v1777, %v1909
    %v1974 = vsel %vm1842, %v1778, %v1910
    %v1975 = vsel %vm1843, %v1779, %v1911
    %v1976 = vsel %vm1844, %v1780, %v1912
    %v1977 = vsel %vm1845, %v1781, %v1913
    %v1978 = vsel %vm1846, %v1782, %v1914
    %v1979 = vsel %vm1847, %v1783, %v1915
    %v1980 = vsel %vm1848, %v1784, %v1916
    %v1981 = vsel %vm1849, %v1785, %v1917
    %v1982 = vsel %vm1850, %v1786, %v1918
    %v1983 = vsel %vm1851, %v1787, %v1919
    %v1984 = vsel %vm1852, %v1788, %v1920
    %v1985 = vsel %vm1853, %v1789, %v1921
    %v1986 = vsel %vm1854, %v1790, %v1922
    %v1987 = vsel %vm1855, %v1791, %v1923
    %v1988 = vsel %vm1856, %v1792, %v1924
    %v1989 = vsel %vm1857, %v1793, %v1925
    %v1990 = vsel %vm1858, %v1794, %v1926
    %v1991 = vsel %vm1859, %v1795, %v1927
    %v1992 = vsel %vm1860, %v1796, %v1928
    %v1993 = vsel %vm1861, %v1797, %v1929
    %v1994 = vsel %vm1862, %v1798, %v1930
    %v1995 = vsel %vm1863, %v1799, %v1931
    %v1996 = vsel %vm1864, %v1800, %v1932
    %v1997 = vsel %vm1865, %v1801, %v1933
    %v1998 = vsel %vm1866, %v1802, %v1934
    %v1999 = vsel %vm1867, %v1803, %v1935
    %v2000 = vsel %vm1868, %v1804, %v1936
    %v2001 = vsel %vm1869, %v1805, %v1937
    %v2002 = vsel %vm1870, %v1806, %v1938
    %v2003 = vsel %vm1871, %v1807, %v1939
    %v2004 = vsel %vm1872, %v1808, %v1940
    %v2005 = vsel %vm1873, %v1809, %v1941
    %v2006 = vsel %vm1874, %v1810, %v1942
    %v2007 = vsel %vm1875, %v1811, %v1943
    %v2008 = vsel %vm1876, %v1812, %v1944
    %v2009 = vsel %vm1877, %v1813, %v1945
    %v2010 = vsel %vm1878, %v1814, %v1946
    %v2011 = vsel %vm1879, %v1815, %v1947
    %v2012 = vsel %vm1880, %v1816, %v1948
    %v2013 = vsel %vm1881, %v1817, %v1949
    %v2014 = vsel %vm1882, %v1818, %v1950
    %v2015 = vsel %vm1883, %v1819, %v1951
    %v2016 = vsel %vm1884, %v1820, %v1952
    %v2017 = vsel %vm1885, %v1821, %v1953
    %v2018 = vsel %vm1886, %v1822, %v1954
    %s2019 = scalar_lea.vmem [#allocation4], 64
    %v2020 = vld [vmem:[%s2019] sm:$0xf]
    %v2021 = vld [vmem:[%s2019 + $0x4] sm:$0xf]
    %v2022 = vld [vmem:[%s2019 + $0x8] sm:$0xf]
    %v2023 = vld [vmem:[%s2019 + $0xc] sm:$0xf]
    %v2024 = vld [vmem:[%s2019 + $0x10] sm:$0xf]
    %v2025 = vld [vmem:[%s2019 + $0x14] sm:$0xf]
    %v2026 = vld [vmem:[%s2019 + $0x18] sm:$0xf]
    %v2027 = vld [vmem:[%s2019 + $0x1c] sm:$0xf]
    %v2028 = vld [vmem:[%s2019 + $0x20] sm:$0xf]
    %v2029 = vld [vmem:[%s2019 + $0x24] sm:$0xf]
    %v2030 = vld [vmem:[%s2019 + $0x28] sm:$0xf]
    %v2031 = vld [vmem:[%s2019 + $0x2c] sm:$0xf]
    %v2032 = vld [vmem:[%s2019 + $0x30] sm:$0xf]
    %v2033 = vld [vmem:[%s2019 + $0x34] sm:$0xf]
    %v2034 = vld [vmem:[%s2019 + $0x38] sm:$0xf]
    %v2035 = vld [vmem:[%s2019 + $0x3c] sm:$0xf]
    %v2036 = vpack.c.bf16 %v1956, %v1955
    %v2037 = vpack.c.bf16 %v1958, %v1957
    %v2038 = vpack.c.bf16 %v1960, %v1959
    %v2039 = vpack.c.bf16 %v1962, %v1961
    %v2040 = vpack.c.bf16 %v1964, %v1963
    %v2041 = vpack.c.bf16 %v1966, %v1965
    %v2042 = vpack.c.bf16 %v1968, %v1967
    %v2043 = vpack.c.bf16 %v1970, %v1969
    %v2044 = vpack.c.bf16 %v1972, %v1971
    %v2045 = vpack.c.bf16 %v1974, %v1973
    %v2046 = vpack.c.bf16 %v1976, %v1975
    %v2047 = vpack.c.bf16 %v1978, %v1977
    %v2048 = vpack.c.bf16 %v1980, %v1979
    %v2049 = vpack.c.bf16 %v1982, %v1981
    %v2050 = vpack.c.bf16 %v1984, %v1983
    %v2051 = vpack.c.bf16 %v1986, %v1985
    %v2052 = vpack.c.bf16 %v1988, %v1987
    %v2053 = vpack.c.bf16 %v1990, %v1989
    %v2054 = vpack.c.bf16 %v1992, %v1991
    %v2055 = vpack.c.bf16 %v1994, %v1993
    %v2056 = vpack.c.bf16 %v1996, %v1995
    %v2057 = vpack.c.bf16 %v1998, %v1997
    %v2058 = vpack.c.bf16 %v2000, %v1999
    %v2059 = vpack.c.bf16 %v2002, %v2001
    %v2060 = vpack.c.bf16 %v2004, %v2003
    %v2061 = vpack.c.bf16 %v2006, %v2005
    %v2062 = vpack.c.bf16 %v2008, %v2007
    %v2063 = vpack.c.bf16 %v2010, %v2009
    %v2064 = vpack.c.bf16 %v2012, %v2011
    %v2065 = vpack.c.bf16 %v2014, %v2013
    %v2066 = vpack.c.bf16 %v2016, %v2015
    %v2067 = vpack.c.bf16 %v2018, %v2017
    %v2068 = vlaneseq
    %v2069 = vshrl.u32 %v2068, 7
    %v2070 = vsub.s32 0, %v2069
    %v2071 = vrot.slane %v58, %v2070
    %v2088 = vunpack.c.l.b16 %v2020
    %v2089 = vunpack.c.l.b16 %v2021
    %v2090 = vunpack.c.l.b16 %v2022
    %v2091 = vunpack.c.l.b16 %v2023
    %v2092 = vunpack.c.l.b16 %v2024
    %v2093 = vunpack.c.l.b16 %v2025
    %v2094 = vunpack.c.l.b16 %v2026
    %v2095 = vunpack.c.l.b16 %v2027
    %v2096 = vunpack.c.l.b16 %v2028
    %v2097 = vunpack.c.l.b16 %v2029
    %v2098 = vunpack.c.l.b16 %v2030
    %v2099 = vunpack.c.l.b16 %v2031
    %v2100 = vunpack.c.l.b16 %v2032
    %v2101 = vunpack.c.l.b16 %v2033
    %v2102 = vunpack.c.l.b16 %v2034
    %v2103 = vunpack.c.l.b16 %v2035
    %v2104 = vpack.c.b16 %v2089, %v2088
    %v2105 = vpack.c.b16 %v2091, %v2090
    %v2106 = vpack.c.b16 %v2093, %v2092
    %v2107 = vpack.c.b16 %v2095, %v2094
    %v2108 = vpack.c.b16 %v2097, %v2096
    %v2109 = vpack.c.b16 %v2099, %v2098
    %v2110 = vpack.c.b16 %v2101, %v2100
    %v2111 = vpack.c.b16 %v2103, %v2102
    %2120 = vmatprep.subr.bf16.mxu0 0
    %2121 = vmatpush1.bf16.msra.mxu0 %v2111
    %2122 = vmatprep.subr.bf16.mxu0 0
    %2123 = vmatpush1.bf16.msra.mxu0 %v2110
    %2124 = vmatprep.subr.bf16.mxu0 0
    %2125 = vmatpush1.bf16.msra.mxu0 %v2109
    %2126 = vmatprep.subr.bf16.mxu0 0
    %2127 = vmatpush1.bf16.msra.mxu0 %v2108
    %2128 = vmatprep.subr.bf16.mxu0 0
    %2129 = vmatpush1.bf16.msra.mxu0 %v2107
    %2130 = vmatprep.subr.bf16.mxu0 0
    %2131 = vmatpush1.bf16.msra.mxu0 %v2106
    %2132 = vmatprep.subr.bf16.mxu0 0
    %2133 = vmatpush1.bf16.msra.mxu0 %v2105
    %2134 = vmatprep.subr.bf16.mxu0 0
    %2135 = vmatpush1.bf16.msra.mxu0 %v2104
    %2136 = vmatprep.subr.bf16.mxu0 0
    %2137 = vmatpush2.bf16.msra.mxu0 0
    %2138 = vmatprep.subr.bf16.mxu0 0
    %2139 = vmatpush2.bf16.msra.mxu0 0
    %2140 = vmatprep.subr.bf16.mxu0 0
    %2141 = vmatpush2.bf16.msra.mxu0 0
    %2142 = vmatprep.subr.bf16.mxu0 0
    %2143 = vmatpush2.bf16.msra.mxu0 0
    %2144 = vmatprep.subr.bf16.mxu0 0
    %2145 = vmatpush2.bf16.msra.mxu0 0
    %2146 = vmatprep.subr.bf16.mxu0 0
    %2147 = vmatpush2.bf16.msra.mxu0 0
    %2148 = vmatprep.subr.bf16.mxu0 0
    %2149 = vmatpush2.bf16.msra.mxu0 0
    %2150 = vmatprep.subr.bf16.mxu0 0
    %2151 = vmatpush2.bf16.msra.mxu0 0
    %2152 = vmatprep.mubr.bf16.mxu0 0
    %2153 = vmatmul.mubr.bf16.gmra.mxu0 %v2036
    %v2154 = vpop.f32.mrf.mxu0
    %v2155 = vadd.f32 %v2071, %v2154
    %v2156 = vpop.f32.mrf.mxu0
    %v2157 = vpop.f32.mrf.mxu0
    %v2158 = vadd.f32 %v2071, %v2157
    %v2159 = vpop.f32.mrf.mxu0
    %2160 = vmatprep.mubr.bf16.mxu0 0
    %2161 = vmatmul.mubr.bf16.gmra.mxu0 %v2037
    %v2162 = vpop.f32.mrf.mxu0
    %v2163 = vadd.f32 %v2071, %v2162
    %v2164 = vpop.f32.mrf.mxu0
    %v2165 = vpop.f32.mrf.mxu0
    %v2166 = vadd.f32 %v2071, %v2165
    %v2167 = vpop.f32.mrf.mxu0
    %2168 = vmatprep.mubr.bf16.mxu0 0
    %2169 = vmatmul.mubr.bf16.gmra.mxu0 %v2038
    %v2170 = vpop.f32.mrf.mxu0
    %v2171 = vadd.f32 %v2071, %v2170
    %v2172 = vpop.f32.mrf.mxu0
    %v2173 = vpop.f32.mrf.mxu0
    %v2174 = vadd.f32 %v2071, %v2173
    %v2175 = vpop.f32.mrf.mxu0
    %2176 = vmatprep.mubr.bf16.mxu0 0
    %2177 = vmatmul.mubr.bf16.gmra.mxu0 %v2039
    %v2178 = vpop.f32.mrf.mxu0
    %v2179 = vadd.f32 %v2071, %v2178
    %v2180 = vpop.f32.mrf.mxu0
    %v2181 = vpop.f32.mrf.mxu0
    %v2182 = vadd.f32 %v2071, %v2181
    %v2183 = vpop.f32.mrf.mxu0
    %2184 = vmatprep.mubr.bf16.mxu0 0
    %2185 = vmatmul.mubr.bf16.gmra.mxu0 %v2040
    %v2186 = vpop.f32.mrf.mxu0
    %v2187 = vadd.f32 %v2071, %v2186
    %v2188 = vpop.f32.mrf.mxu0
    %v2189 = vpop.f32.mrf.mxu0
    %v2190 = vadd.f32 %v2071, %v2189
    %v2191 = vpop.f32.mrf.mxu0
    %2192 = vmatprep.mubr.bf16.mxu0 0
    %2193 = vmatmul.mubr.bf16.gmra.mxu0 %v2041
    %v2194 = vpop.f32.mrf.mxu0
    %v2195 = vadd.f32 %v2071, %v2194
    %v2196 = vpop.f32.mrf.mxu0
    %v2197 = vpop.f32.mrf.mxu0
    %v2198 = vadd.f32 %v2071, %v2197
    %v2199 = vpop.f32.mrf.mxu0
    %2200 = vmatprep.mubr.bf16.mxu0 0
    %2201 = vmatmul.mubr.bf16.gmra.mxu0 %v2042
    %v2202 = vpop.f32.mrf.mxu0
    %v2203 = vadd.f32 %v2071, %v2202
    %v2204 = vpop.f32.mrf.mxu0
    %v2205 = vpop.f32.mrf.mxu0
    %v2206 = vadd.f32 %v2071, %v2205
    %v2207 = vpop.f32.mrf.mxu0
    %2208 = vmatprep.mubr.bf16.mxu0 0
    %2209 = vmatmul.mubr.bf16.gmra.mxu0 %v2043
    %v2210 = vpop.f32.mrf.mxu0
    %v2211 = vadd.f32 %v2071, %v2210
    %v2212 = vpop.f32.mrf.mxu0
    %v2213 = vpop.f32.mrf.mxu0
    %v2214 = vadd.f32 %v2071, %v2213
    %v2215 = vpop.f32.mrf.mxu0
    %2216 = vmatprep.mubr.bf16.mxu0 0
    %2217 = vmatmul.mubr.bf16.gmra.mxu0 %v2044
    %v2218 = vpop.f32.mrf.mxu0
    %v2219 = vadd.f32 %v2071, %v2218
    %v2220 = vpop.f32.mrf.mxu0
    %v2221 = vpop.f32.mrf.mxu0
    %v2222 = vadd.f32 %v2071, %v2221
    %v2223 = vpop.f32.mrf.mxu0
    %2224 = vmatprep.mubr.bf16.mxu0 0
    %2225 = vmatmul.mubr.bf16.gmra.mxu0 %v2045
    %v2226 = vpop.f32.mrf.mxu0
    %v2227 = vadd.f32 %v2071, %v2226
    %v2228 = vpop.f32.mrf.mxu0
    %v2229 = vpop.f32.mrf.mxu0
    %v2230 = vadd.f32 %v2071, %v2229
    %v2231 = vpop.f32.mrf.mxu0
    %2232 = vmatprep.mubr.bf16.mxu0 0
    %2233 = vmatmul.mubr.bf16.gmra.mxu0 %v2046
    %v2234 = vpop.f32.mrf.mxu0
    %v2235 = vadd.f32 %v2071, %v2234
    %v2236 = vpop.f32.mrf.mxu0
    %v2237 = vpop.f32.mrf.mxu0
    %v2238 = vadd.f32 %v2071, %v2237
    %v2239 = vpop.f32.mrf.mxu0
    %2240 = vmatprep.mubr.bf16.mxu0 0
    %2241 = vmatmul.mubr.bf16.gmra.mxu0 %v2047
    %v2242 = vpop.f32.mrf.mxu0
    %v2243 = vadd.f32 %v2071, %v2242
    %v2244 = vpop.f32.mrf.mxu0
    %v2245 = vpop.f32.mrf.mxu0
    %v2246 = vadd.f32 %v2071, %v2245
    %v2247 = vpop.f32.mrf.mxu0
    %2248 = vmatprep.mubr.bf16.mxu0 0
    %2249 = vmatmul.mubr.bf16.gmra.mxu0 %v2048
    %v2250 = vpop.f32.mrf.mxu0
    %v2251 = vadd.f32 %v2071, %v2250
    %v2252 = vpop.f32.mrf.mxu0
    %v2253 = vpop.f32.mrf.mxu0
    %v2254 = vadd.f32 %v2071, %v2253
    %v2255 = vpop.f32.mrf.mxu0
    %2256 = vmatprep.mubr.bf16.mxu0 0
    %2257 = vmatmul.mubr.bf16.gmra.mxu0 %v2049
    %v2258 = vpop.f32.mrf.mxu0
    %v2259 = vadd.f32 %v2071, %v2258
    %v2260 = vpop.f32.mrf.mxu0
    %v2261 = vpop.f32.mrf.mxu0
    %v2262 = vadd.f32 %v2071, %v2261
    %v2263 = vpop.f32.mrf.mxu0
    %2264 = vmatprep.mubr.bf16.mxu0 0
    %2265 = vmatmul.mubr.bf16.gmra.mxu0 %v2050
    %v2266 = vpop.f32.mrf.mxu0
    %v2267 = vadd.f32 %v2071, %v2266
    %v2268 = vpop.f32.mrf.mxu0
    %v2269 = vpop.f32.mrf.mxu0
    %v2270 = vadd.f32 %v2071, %v2269
    %v2271 = vpop.f32.mrf.mxu0
    %2272 = vmatprep.mubr.bf16.mxu0 0
    %2273 = vmatmul.mubr.bf16.gmra.mxu0 %v2051
    %v2274 = vpop.f32.mrf.mxu0
    %v2275 = vadd.f32 %v2071, %v2274
    %v2276 = vpop.f32.mrf.mxu0
    %v2277 = vpop.f32.mrf.mxu0
    %v2278 = vadd.f32 %v2071, %v2277
    %v2279 = vpop.f32.mrf.mxu0
    %2280 = vmatprep.mubr.bf16.mxu0 0
    %2281 = vmatmul.mubr.bf16.gmra.mxu0 %v2052
    %v2282 = vpop.f32.mrf.mxu0
    %v2283 = vadd.f32 %v2071, %v2282
    %v2284 = vpop.f32.mrf.mxu0
    %v2285 = vpop.f32.mrf.mxu0
    %v2286 = vadd.f32 %v2071, %v2285
    %v2287 = vpop.f32.mrf.mxu0
    %2288 = vmatprep.mubr.bf16.mxu0 0
    %2289 = vmatmul.mubr.bf16.gmra.mxu0 %v2053
    %v2290 = vpop.f32.mrf.mxu0
    %v2291 = vadd.f32 %v2071, %v2290
    %v2292 = vpop.f32.mrf.mxu0
    %v2293 = vpop.f32.mrf.mxu0
    %v2294 = vadd.f32 %v2071, %v2293
    %v2295 = vpop.f32.mrf.mxu0
    %2296 = vmatprep.mubr.bf16.mxu0 0
    %2297 = vmatmul.mubr.bf16.gmra.mxu0 %v2054
    %v2298 = vpop.f32.mrf.mxu0
    %v2299 = vadd.f32 %v2071, %v2298
    %v2300 = vpop.f32.mrf.mxu0
    %v2301 = vpop.f32.mrf.mxu0
    %v2302 = vadd.f32 %v2071, %v2301
    %v2303 = vpop.f32.mrf.mxu0
    %2304 = vmatprep.mubr.bf16.mxu0 0
    %2305 = vmatmul.mubr.bf16.gmra.mxu0 %v2055
    %v2306 = vpop.f32.mrf.mxu0
    %v2307 = vadd.f32 %v2071, %v2306
    %v2308 = vpop.f32.mrf.mxu0
    %v2309 = vpop.f32.mrf.mxu0
    %v2310 = vadd.f32 %v2071, %v2309
    %v2311 = vpop.f32.mrf.mxu0
    %2312 = vmatprep.mubr.bf16.mxu0 0
    %2313 = vmatmul.mubr.bf16.gmra.mxu0 %v2056
    %v2314 = vpop.f32.mrf.mxu0
    %v2315 = vadd.f32 %v2071, %v2314
    %v2316 = vpop.f32.mrf.mxu0
    %v2317 = vpop.f32.mrf.mxu0
    %v2318 = vadd.f32 %v2071, %v2317
    %v2319 = vpop.f32.mrf.mxu0
    %2320 = vmatprep.mubr.bf16.mxu0 0
    %2321 = vmatmul.mubr.bf16.gmra.mxu0 %v2057
    %v2322 = vpop.f32.mrf.mxu0
    %v2323 = vadd.f32 %v2071, %v2322
    %v2324 = vpop.f32.mrf.mxu0
    %v2325 = vpop.f32.mrf.mxu0
    %v2326 = vadd.f32 %v2071, %v2325
    %v2327 = vpop.f32.mrf.mxu0
    %2328 = vmatprep.mubr.bf16.mxu0 0
    %2329 = vmatmul.mubr.bf16.gmra.mxu0 %v2058
    %v2330 = vpop.f32.mrf.mxu0
    %v2331 = vadd.f32 %v2071, %v2330
    %v2332 = vpop.f32.mrf.mxu0
    %v2333 = vpop.f32.mrf.mxu0
    %v2334 = vadd.f32 %v2071, %v2333
    %v2335 = vpop.f32.mrf.mxu0
    %2336 = vmatprep.mubr.bf16.mxu0 0
    %2337 = vmatmul.mubr.bf16.gmra.mxu0 %v2059
    %v2338 = vpop.f32.mrf.mxu0
    %v2339 = vadd.f32 %v2071, %v2338
    %v2340 = vpop.f32.mrf.mxu0
    %v2341 = vpop.f32.mrf.mxu0
    %v2342 = vadd.f32 %v2071, %v2341
    %v2343 = vpop.f32.mrf.mxu0
    %2344 = vmatprep.mubr.bf16.mxu0 0
    %2345 = vmatmul.mubr.bf16.gmra.mxu0 %v2060
    %v2346 = vpop.f32.mrf.mxu0
    %v2347 = vadd.f32 %v2071, %v2346
    %v2348 = vpop.f32.mrf.mxu0
    %v2349 = vpop.f32.mrf.mxu0
    %v2350 = vadd.f32 %v2071, %v2349
    %v2351 = vpop.f32.mrf.mxu0
    %2352 = vmatprep.mubr.bf16.mxu0 0
    %2353 = vmatmul.mubr.bf16.gmra.mxu0 %v2061
    %v2354 = vpop.f32.mrf.mxu0
    %v2355 = vadd.f32 %v2071, %v2354
    %v2356 = vpop.f32.mrf.mxu0
    %v2357 = vpop.f32.mrf.mxu0
    %v2358 = vadd.f32 %v2071, %v2357
    %v2359 = vpop.f32.mrf.mxu0
    %2360 = vmatprep.mubr.bf16.mxu0 0
    %2361 = vmatmul.mubr.bf16.gmra.mxu0 %v2062
    %v2362 = vpop.f32.mrf.mxu0
    %v2363 = vadd.f32 %v2071, %v2362
    %v2364 = vpop.f32.mrf.mxu0
    %v2365 = vpop.f32.mrf.mxu0
    %v2366 = vadd.f32 %v2071, %v2365
    %v2367 = vpop.f32.mrf.mxu0
    %2368 = vmatprep.mubr.bf16.mxu0 0
    %2369 = vmatmul.mubr.bf16.gmra.mxu0 %v2063
    %v2370 = vpop.f32.mrf.mxu0
    %v2371 = vadd.f32 %v2071, %v2370
    %v2372 = vpop.f32.mrf.mxu0
    %v2373 = vpop.f32.mrf.mxu0
    %v2374 = vadd.f32 %v2071, %v2373
    %v2375 = vpop.f32.mrf.mxu0
    %2376 = vmatprep.mubr.bf16.mxu0 0
    %2377 = vmatmul.mubr.bf16.gmra.mxu0 %v2064
    %v2378 = vpop.f32.mrf.mxu0
    %v2379 = vadd.f32 %v2071, %v2378
    %v2380 = vpop.f32.mrf.mxu0
    %v2381 = vpop.f32.mrf.mxu0
    %v2382 = vadd.f32 %v2071, %v2381
    %v2383 = vpop.f32.mrf.mxu0
    %2384 = vmatprep.mubr.bf16.mxu0 0
    %2385 = vmatmul.mubr.bf16.gmra.mxu0 %v2065
    %v2386 = vpop.f32.mrf.mxu0
    %v2387 = vadd.f32 %v2071, %v2386
    %v2388 = vpop.f32.mrf.mxu0
    %v2389 = vpop.f32.mrf.mxu0
    %v2390 = vadd.f32 %v2071, %v2389
    %v2391 = vpop.f32.mrf.mxu0
    %2392 = vmatprep.mubr.bf16.mxu0 0
    %2393 = vmatmul.mubr.bf16.gmra.mxu0 %v2066
    %v2394 = vpop.f32.mrf.mxu0
    %v2395 = vadd.f32 %v2071, %v2394
    %v2396 = vpop.f32.mrf.mxu0
    %v2397 = vpop.f32.mrf.mxu0
    %v2398 = vadd.f32 %v2071, %v2397
    %v2399 = vpop.f32.mrf.mxu0
    %2400 = vmatprep.mubr.bf16.mxu0 0
    %2401 = vmatmul.mubr.bf16.gmra.mxu0 %v2067
    %v2402 = vpop.f32.mrf.mxu0
    %v2403 = vadd.f32 %v2071, %v2402
    %v2404 = vpop.f32.mrf.mxu0
    %v2405 = vpop.f32.mrf.mxu0
    %v2406 = vadd.f32 %v2071, %v2405
    %v2407 = vpop.f32.mrf.mxu0
    %2408 = vdwg.mxu0
    %v2409 = vadd.f32 %v2155, %v2158
    %v2410 = vadd.f32 %v2409, %v2163
    %v2411 = vadd.f32 %v2410, %v2166
    %v2412 = vadd.f32 %v2411, %v2171
    %v2413 = vadd.f32 %v2412, %v2174
    %v2414 = vadd.f32 %v2413, %v2179
    %v2415 = vadd.f32 %v2414, %v2182
    %v2416 = vadd.f32 %v2415, %v2187
    %v2417 = vadd.f32 %v2416, %v2190
    %v2418 = vadd.f32 %v2417, %v2195
    %v2419 = vadd.f32 %v2418, %v2198
    %v2420 = vadd.f32 %v2419, %v2203
    %v2421 = vadd.f32 %v2420, %v2206
    %v2422 = vadd.f32 %v2421, %v2211
    %v2423 = vadd.f32 %v2422, %v2214
    %v2424 = vadd.f32 %v2423, %v2219
    %v2425 = vadd.f32 %v2424, %v2222
    %v2426 = vadd.f32 %v2425, %v2227
    %v2427 = vadd.f32 %v2426, %v2230
    %v2428 = vadd.f32 %v2427, %v2235
    %v2429 = vadd.f32 %v2428, %v2238
    %v2430 = vadd.f32 %v2429, %v2243
    %v2431 = vadd.f32 %v2430, %v2246
    %v2432 = vadd.f32 %v2431, %v2251
    %v2433 = vadd.f32 %v2432, %v2254
    %v2434 = vadd.f32 %v2433, %v2259
    %v2435 = vadd.f32 %v2434, %v2262
    %v2436 = vadd.f32 %v2435, %v2267
    %v2437 = vadd.f32 %v2436, %v2270
    %v2438 = vadd.f32 %v2437, %v2275
    %v2439 = vadd.f32 %v2438, %v2278
    %v2440 = vrot.slane %v2439, 4
    %v2441 = vadd.f32 %v2439, %v2440
    %v2442 = vrot.slane %v2441, 2
    %v2443 = vadd.f32 %v2441, %v2442
    %v2444 = vrot.slane %v2443, 1
    %v2445 = vadd.f32 %v2443, %v2444
    %v2446 = vadd.f32 %v2283, %v2286
    %v2447 = vadd.f32 %v2446, %v2291
    %v2448 = vadd.f32 %v2447, %v2294
    %v2449 = vadd.f32 %v2448, %v2299
    %v2450 = vadd.f32 %v2449, %v2302
    %v2451 = vadd.f32 %v2450, %v2307
    %v2452 = vadd.f32 %v2451, %v2310
    %v2453 = vadd.f32 %v2452, %v2315
    %v2454 = vadd.f32 %v2453, %v2318
    %v2455 = vadd.f32 %v2454, %v2323
    %v2456 = vadd.f32 %v2455, %v2326
    %v2457 = vadd.f32 %v2456, %v2331
    %v2458 = vadd.f32 %v2457, %v2334
    %v2459 = vadd.f32 %v2458, %v2339
    %v2460 = vadd.f32 %v2459, %v2342
    %v2461 = vadd.f32 %v2460, %v2347
    %v2462 = vadd.f32 %v2461, %v2350
    %v2463 = vadd.f32 %v2462, %v2355
    %v2464 = vadd.f32 %v2463, %v2358
    %v2465 = vadd.f32 %v2464, %v2363
    %v2466 = vadd.f32 %v2465, %v2366
    %v2467 = vadd.f32 %v2466, %v2371
    %v2468 = vadd.f32 %v2467, %v2374
    %v2469 = vadd.f32 %v2468, %v2379
    %v2470 = vadd.f32 %v2469, %v2382
    %v2471 = vadd.f32 %v2470, %v2387
    %v2472 = vadd.f32 %v2471, %v2390
    %v2473 = vadd.f32 %v2472, %v2395
    %v2474 = vadd.f32 %v2473, %v2398
    %v2475 = vadd.f32 %v2474, %v2403
    %v2476 = vadd.f32 %v2475, %v2406
    %v2477 = vrot.slane %v2476, 4
    %v2478 = vadd.f32 %v2476, %v2477
    %v2479 = vrot.slane %v2478, 2
    %v2480 = vadd.f32 %v2478, %v2479
    %v2481 = vrot.slane %v2480, 1
    %v2482 = vadd.f32 %v2480, %v2481
    %v2483 = vmul.f32 %v2445, 0.00390625
    %v2484 = vmul.f32 %v2482, 0.00390625
    %v2485 = vsub.f32 %v2155, %v2483
    %v2486 = vsub.f32 %v2158, %v2483
    %v2487 = vsub.f32 %v2163, %v2483
    %v2488 = vsub.f32 %v2166, %v2483
    %v2489 = vsub.f32 %v2171, %v2483
    %v2490 = vsub.f32 %v2174, %v2483
    %v2491 = vsub.f32 %v2179, %v2483
    %v2492 = vsub.f32 %v2182, %v2483
    %v2493 = vsub.f32 %v2187, %v2483
    %v2494 = vsub.f32 %v2190, %v2483
    %v2495 = vsub.f32 %v2195, %v2483
    %v2496 = vsub.f32 %v2198, %v2483
    %v2497 = vsub.f32 %v2203, %v2483
    %v2498 = vsub.f32 %v2206, %v2483
    %v2499 = vsub.f32 %v2211, %v2483
    %v2500 = vsub.f32 %v2214, %v2483
    %v2501 = vsub.f32 %v2219, %v2483
    %v2502 = vsub.f32 %v2222, %v2483
    %v2503 = vsub.f32 %v2227, %v2483
    %v2504 = vsub.f32 %v2230, %v2483
    %v2505 = vsub.f32 %v2235, %v2483
    %v2506 = vsub.f32 %v2238, %v2483
    %v2507 = vsub.f32 %v2243, %v2483
    %v2508 = vsub.f32 %v2246, %v2483
    %v2509 = vsub.f32 %v2251, %v2483
    %v2510 = vsub.f32 %v2254, %v2483
    %v2511 = vsub.f32 %v2259, %v2483
    %v2512 = vsub.f32 %v2262, %v2483
    %v2513 = vsub.f32 %v2267, %v2483
    %v2514 = vsub.f32 %v2270, %v2483
    %v2515 = vsub.f32 %v2275, %v2483
    %v2516 = vsub.f32 %v2278, %v2483
    %v2517 = vsub.f32 %v2283, %v2484
    %v2518 = vsub.f32 %v2286, %v2484
    %v2519 = vsub.f32 %v2291, %v2484
    %v2520 = vsub.f32 %v2294, %v2484
    %v2521 = vsub.f32 %v2299, %v2484
    %v2522 = vsub.f32 %v2302, %v2484
    %v2523 = vsub.f32 %v2307, %v2484
    %v2524 = vsub.f32 %v2310, %v2484
    %v2525 = vsub.f32 %v2315, %v2484
    %v2526 = vsub.f32 %v2318, %v2484
    %v2527 = vsub.f32 %v2323, %v2484
    %v2528 = vsub.f32 %v2326, %v2484
    %v2529 = vsub.f32 %v2331, %v2484
    %v2530 = vsub.f32 %v2334, %v2484
    %v2531 = vsub.f32 %v2339, %v2484
    %v2532 = vsub.f32 %v2342, %v2484
    %v2533 = vsub.f32 %v2347, %v2484
    %v2534 = vsub.f32 %v2350, %v2484
    %v2535 = vsub.f32 %v2355, %v2484
    %v2536 = vsub.f32 %v2358, %v2484
    %v2537 = vsub.f32 %v2363, %v2484
    %v2538 = vsub.f32 %v2366, %v2484
    %v2539 = vsub.f32 %v2371, %v2484
    %v2540 = vsub.f32 %v2374, %v2484
    %v2541 = vsub.f32 %v2379, %v2484
    %v2542 = vsub.f32 %v2382, %v2484
    %v2543 = vsub.f32 %v2387, %v2484
    %v2544 = vsub.f32 %v2390, %v2484
    %v2545 = vsub.f32 %v2395, %v2484
    %v2546 = vsub.f32 %v2398, %v2484
    %v2547 = vsub.f32 %v2403, %v2484
    %v2548 = vsub.f32 %v2406, %v2484
    %v2549 = vmul.f32 %v2485, %v2485
    %v2550 = vmul.f32 %v2486, %v2486
    %v2551 = vmul.f32 %v2487, %v2487
    %v2552 = vmul.f32 %v2488, %v2488
    %v2553 = vmul.f32 %v2489, %v2489
    %v2554 = vmul.f32 %v2490, %v2490
    %v2555 = vmul.f32 %v2491, %v2491
    %v2556 = vmul.f32 %v2492, %v2492
    %v2557 = vmul.f32 %v2493, %v2493
    %v2558 = vmul.f32 %v2494, %v2494
    %v2559 = vmul.f32 %v2495, %v2495
    %v2560 = vmul.f32 %v2496, %v2496
    %v2561 = vmul.f32 %v2497, %v2497
    %v2562 = vmul.f32 %v2498, %v2498
    %v2563 = vmul.f32 %v2499, %v2499
    %v2564 = vmul.f32 %v2500, %v2500
    %v2565 = vmul.f32 %v2501, %v2501
    %v2566 = vmul.f32 %v2502, %v2502
    %v2567 = vmul.f32 %v2503, %v2503
    %v2568 = vmul.f32 %v2504, %v2504
    %v2569 = vmul.f32 %v2505, %v2505
    %v2570 = vmul.f32 %v2506, %v2506
    %v2571 = vmul.f32 %v2507, %v2507
    %v2572 = vmul.f32 %v2508, %v2508
    %v2573 = vmul.f32 %v2509, %v2509
    %v2574 = vmul.f32 %v2510, %v2510
    %v2575 = vmul.f32 %v2511, %v2511
    %v2576 = vmul.f32 %v2512, %v2512
    %v2577 = vmul.f32 %v2513, %v2513
    %v2578 = vmul.f32 %v2514, %v2514
    %v2579 = vmul.f32 %v2515, %v2515
    %v2580 = vmul.f32 %v2516, %v2516
    %v2581 = vmul.f32 %v2517, %v2517
    %v2582 = vmul.f32 %v2518, %v2518
    %v2583 = vmul.f32 %v2519, %v2519
    %v2584 = vmul.f32 %v2520, %v2520
    %v2585 = vmul.f32 %v2521, %v2521
    %v2586 = vmul.f32 %v2522, %v2522
    %v2587 = vmul.f32 %v2523, %v2523
    %v2588 = vmul.f32 %v2524, %v2524
    %v2589 = vmul.f32 %v2525, %v2525
    %v2590 = vmul.f32 %v2526, %v2526
    %v2591 = vmul.f32 %v2527, %v2527
    %v2592 = vmul.f32 %v2528, %v2528
    %v2593 = vmul.f32 %v2529, %v2529
    %v2594 = vmul.f32 %v2530, %v2530
    %v2595 = vmul.f32 %v2531, %v2531
    %v2596 = vmul.f32 %v2532, %v2532
    %v2597 = vmul.f32 %v2533, %v2533
    %v2598 = vmul.f32 %v2534, %v2534
    %v2599 = vmul.f32 %v2535, %v2535
    %v2600 = vmul.f32 %v2536, %v2536
    %v2601 = vmul.f32 %v2537, %v2537
    %v2602 = vmul.f32 %v2538, %v2538
    %v2603 = vmul.f32 %v2539, %v2539
    %v2604 = vmul.f32 %v2540, %v2540
    %v2605 = vmul.f32 %v2541, %v2541
    %v2606 = vmul.f32 %v2542, %v2542
    %v2607 = vmul.f32 %v2543, %v2543
    %v2608 = vmul.f32 %v2544, %v2544
    %v2609 = vmul.f32 %v2545, %v2545
    %v2610 = vmul.f32 %v2546, %v2546
    %v2611 = vmul.f32 %v2547, %v2547
    %v2612 = vmul.f32 %v2548, %v2548
    %v2613 = vadd.f32 %v2549, %v2550
    %v2614 = vadd.f32 %v2613, %v2551
    %v2615 = vadd.f32 %v2614, %v2552
    %v2616 = vadd.f32 %v2615, %v2553
    %v2617 = vadd.f32 %v2616, %v2554
    %v2618 = vadd.f32 %v2617, %v2555
    %v2619 = vadd.f32 %v2618, %v2556
    %v2620 = vadd.f32 %v2619, %v2557
    %v2621 = vadd.f32 %v2620, %v2558
    %v2622 = vadd.f32 %v2621, %v2559
    %v2623 = vadd.f32 %v2622, %v2560
    %v2624 = vadd.f32 %v2623, %v2561
    %v2625 = vadd.f32 %v2624, %v2562
    %v2626 = vadd.f32 %v2625, %v2563
    %v2627 = vadd.f32 %v2626, %v2564
    %v2628 = vadd.f32 %v2627, %v2565
    %v2629 = vadd.f32 %v2628, %v2566
    %v2630 = vadd.f32 %v2629, %v2567
    %v2631 = vadd.f32 %v2630, %v2568
    %v2632 = vadd.f32 %v2631, %v2569
    %v2633 = vadd.f32 %v2632, %v2570
    %v2634 = vadd.f32 %v2633, %v2571
    %v2635 = vadd.f32 %v2634, %v2572
    %v2636 = vadd.f32 %v2635, %v2573
    %v2637 = vadd.f32 %v2636, %v2574
    %v2638 = vadd.f32 %v2637, %v2575
    %v2639 = vadd.f32 %v2638, %v2576
    %v2640 = vadd.f32 %v2639, %v2577
    %v2641 = vadd.f32 %v2640, %v2578
    %v2642 = vadd.f32 %v2641, %v2579
    %v2643 = vadd.f32 %v2642, %v2580
    %v2644 = vrot.slane %v2643, 4
    %v2645 = vadd.f32 %v2643, %v2644
    %v2646 = vrot.slane %v2645, 2
    %v2647 = vadd.f32 %v2645, %v2646
    %v2648 = vrot.slane %v2647, 1
    %v2649 = vadd.f32 %v2647, %v2648
    %v2650 = vadd.f32 %v2581, %v2582
    %v2651 = vadd.f32 %v2650, %v2583
    %v2652 = vadd.f32 %v2651, %v2584
    %v2653 = vadd.f32 %v2652, %v2585
    %v2654 = vadd.f32 %v2653, %v2586
    %v2655 = vadd.f32 %v2654, %v2587
    %v2656 = vadd.f32 %v2655, %v2588
    %v2657 = vadd.f32 %v2656, %v2589
    %v2658 = vadd.f32 %v2657, %v2590
    %v2659 = vadd.f32 %v2658, %v2591
    %v2660 = vadd.f32 %v2659, %v2592
    %v2661 = vadd.f32 %v2660, %v2593
    %v2662 = vadd.f32 %v2661, %v2594
    %v2663 = vadd.f32 %v2662, %v2595
    %v2664 = vadd.f32 %v2663, %v2596
    %v2665 = vadd.f32 %v2664, %v2597
    %v2666 = vadd.f32 %v2665, %v2598
    %v2667 = vadd.f32 %v2666, %v2599
    %v2668 = vadd.f32 %v2667, %v2600
    %v2669 = vadd.f32 %v2668, %v2601
    %v2670 = vadd.f32 %v2669, %v2602
    %v2671 = vadd.f32 %v2670, %v2603
    %v2672 = vadd.f32 %v2671, %v2604
    %v2673 = vadd.f32 %v2672, %v2605
    %v2674 = vadd.f32 %v2673, %v2606
    %v2675 = vadd.f32 %v2674, %v2607
    %v2676 = vadd.f32 %v2675, %v2608
    %v2677 = vadd.f32 %v2676, %v2609
    %v2678 = vadd.f32 %v2677, %v2610
    %v2679 = vadd.f32 %v2678, %v2611
    %v2680 = vadd.f32 %v2679, %v2612
    %v2681 = vrot.slane %v2680, 4
    %v2682 = vadd.f32 %v2680, %v2681
    %v2683 = vrot.slane %v2682, 2
    %v2684 = vadd.f32 %v2682, %v2683
    %v2685 = vrot.slane %v2684, 1
    %v2686 = vadd.f32 %v2684, %v2685
    %v2687 = vmul.f32 %v2649, 0.00390625
    %v2688 = vmul.f32 %v2686, 0.00390625
    %v2689 = vadd.f32 %v2687, 1e-05
    %v2690 = vadd.f32 %v2688, 1e-05
    %v2691 = vrsqrt.pop %v2689
    %v2692 = vrsqrt.pop %v2690
    %v2693 = vmul.f32 %v59, %v2691
    %v2694 = vmul.f32 %v59, %v2692
    %v2695 = vlaneseq
    %v2696 = vshrl.u32 %v2695, 7
    %v2697 = vsub.s32 0, %v2696
    %v2698 = vrot.slane %v2693, %v2697
    %v2699 = vlaneseq
    %v2700 = vshrl.u32 %v2699, 7
    %v2701 = vsub.s32 0, %v2700
    %v2702 = vrot.slane %v2694, %v2701
    %v2703 = vmul.f32 %v2485, %v2698
    %v2704 = vmul.f32 %v2486, %v2698
    %v2705 = vmul.f32 %v2487, %v2698
    %v2706 = vmul.f32 %v2488, %v2698
    %v2707 = vmul.f32 %v2489, %v2698
    %v2708 = vmul.f32 %v2490, %v2698
    %v2709 = vmul.f32 %v2491, %v2698
    %v2710 = vmul.f32 %v2492, %v2698
    %v2711 = vmul.f32 %v2493, %v2698
    %v2712 = vmul.f32 %v2494, %v2698
    %v2713 = vmul.f32 %v2495, %v2698
    %v2714 = vmul.f32 %v2496, %v2698
    %v2715 = vmul.f32 %v2497, %v2698
    %v2716 = vmul.f32 %v2498, %v2698
    %v2717 = vmul.f32 %v2499, %v2698
    %v2718 = vmul.f32 %v2500, %v2698
    %v2719 = vmul.f32 %v2501, %v2698
    %v2720 = vmul.f32 %v2502, %v2698
    %v2721 = vmul.f32 %v2503, %v2698
    %v2722 = vmul.f32 %v2504, %v2698
    %v2723 = vmul.f32 %v2505, %v2698
    %v2724 = vmul.f32 %v2506, %v2698
    %v2725 = vmul.f32 %v2507, %v2698
    %v2726 = vmul.f32 %v2508, %v2698
    %v2727 = vmul.f32 %v2509, %v2698
    %v2728 = vmul.f32 %v2510, %v2698
    %v2729 = vmul.f32 %v2511, %v2698
    %v2730 = vmul.f32 %v2512, %v2698
    %v2731 = vmul.f32 %v2513, %v2698
    %v2732 = vmul.f32 %v2514, %v2698
    %v2733 = vmul.f32 %v2515, %v2698
    %v2734 = vmul.f32 %v2516, %v2698
    %v2735 = vmul.f32 %v2517, %v2702
    %v2736 = vmul.f32 %v2518, %v2702
    %v2737 = vmul.f32 %v2519, %v2702
    %v2738 = vmul.f32 %v2520, %v2702
    %v2739 = vmul.f32 %v2521, %v2702
    %v2740 = vmul.f32 %v2522, %v2702
    %v2741 = vmul.f32 %v2523, %v2702
    %v2742 = vmul.f32 %v2524, %v2702
    %v2743 = vmul.f32 %v2525, %v2702
    %v2744 = vmul.f32 %v2526, %v2702
    %v2745 = vmul.f32 %v2527, %v2702
    %v2746 = vmul.f32 %v2528, %v2702
    %v2747 = vmul.f32 %v2529, %v2702
    %v2748 = vmul.f32 %v2530, %v2702
    %v2749 = vmul.f32 %v2531, %v2702
    %v2750 = vmul.f32 %v2532, %v2702
    %v2751 = vmul.f32 %v2533, %v2702
    %v2752 = vmul.f32 %v2534, %v2702
    %v2753 = vmul.f32 %v2535, %v2702
    %v2754 = vmul.f32 %v2536, %v2702
    %v2755 = vmul.f32 %v2537, %v2702
    %v2756 = vmul.f32 %v2538, %v2702
    %v2757 = vmul.f32 %v2539, %v2702
    %v2758 = vmul.f32 %v2540, %v2702
    %v2759 = vmul.f32 %v2541, %v2702
    %v2760 = vmul.f32 %v2542, %v2702
    %v2761 = vmul.f32 %v2543, %v2702
    %v2762 = vmul.f32 %v2544, %v2702
    %v2763 = vmul.f32 %v2545, %v2702
    %v2764 = vmul.f32 %v2546, %v2702
    %v2765 = vmul.f32 %v2547, %v2702
    %v2766 = vmul.f32 %v2548, %v2702
    %v2767 = vlaneseq
    %v2768 = vshrl.u32 %v2767, 7
    %v2769 = vsub.s32 0, %v2768
    %v2770 = vrot.slane %v60, %v2769
    %v2771 = vadd.f32 %v2703, %v2770
    %v2772 = vadd.f32 %v2704, %v2770
    %v2773 = vadd.f32 %v2705, %v2770
    %v2774 = vadd.f32 %v2706, %v2770
    %v2775 = vadd.f32 %v2707, %v2770
    %v2776 = vadd.f32 %v2708, %v2770
    %v2777 = vadd.f32 %v2709, %v2770
    %v2778 = vadd.f32 %v2710, %v2770
    %v2779 = vadd.f32 %v2711, %v2770
    %v2780 = vadd.f32 %v2712, %v2770
    %v2781 = vadd.f32 %v2713, %v2770
    %v2782 = vadd.f32 %v2714, %v2770
    %v2783 = vadd.f32 %v2715, %v2770
    %v2784 = vadd.f32 %v2716, %v2770
    %v2785 = vadd.f32 %v2717, %v2770
    %v2786 = vadd.f32 %v2718, %v2770
    %v2787 = vadd.f32 %v2719, %v2770
    %v2788 = vadd.f32 %v2720, %v2770
    %v2789 = vadd.f32 %v2721, %v2770
    %v2790 = vadd.f32 %v2722, %v2770
    %v2791 = vadd.f32 %v2723, %v2770
    %v2792 = vadd.f32 %v2724, %v2770
    %v2793 = vadd.f32 %v2725, %v2770
    %v2794 = vadd.f32 %v2726, %v2770
    %v2795 = vadd.f32 %v2727, %v2770
    %v2796 = vadd.f32 %v2728, %v2770
    %v2797 = vadd.f32 %v2729, %v2770
    %v2798 = vadd.f32 %v2730, %v2770
    %v2799 = vadd.f32 %v2731, %v2770
    %v2800 = vadd.f32 %v2732, %v2770
    %v2801 = vadd.f32 %v2733, %v2770
    %v2802 = vadd.f32 %v2734, %v2770
    %v2803 = vadd.f32 %v2735, %v2770
    %v2804 = vadd.f32 %v2736, %v2770
    %v2805 = vadd.f32 %v2737, %v2770
    %v2806 = vadd.f32 %v2738, %v2770
    %v2807 = vadd.f32 %v2739, %v2770
    %v2808 = vadd.f32 %v2740, %v2770
    %v2809 = vadd.f32 %v2741, %v2770
    %v2810 = vadd.f32 %v2742, %v2770
    %v2811 = vadd.f32 %v2743, %v2770
    %v2812 = vadd.f32 %v2744, %v2770
    %v2813 = vadd.f32 %v2745, %v2770
    %v2814 = vadd.f32 %v2746, %v2770
    %v2815 = vadd.f32 %v2747, %v2770
    %v2816 = vadd.f32 %v2748, %v2770
    %v2817 = vadd.f32 %v2749, %v2770
    %v2818 = vadd.f32 %v2750, %v2770
    %v2819 = vadd.f32 %v2751, %v2770
    %v2820 = vadd.f32 %v2752, %v2770
    %v2821 = vadd.f32 %v2753, %v2770
    %v2822 = vadd.f32 %v2754, %v2770
    %v2823 = vadd.f32 %v2755, %v2770
    %v2824 = vadd.f32 %v2756, %v2770
    %v2825 = vadd.f32 %v2757, %v2770
    %v2826 = vadd.f32 %v2758, %v2770
    %v2827 = vadd.f32 %v2759, %v2770
    %v2828 = vadd.f32 %v2760, %v2770
    %v2829 = vadd.f32 %v2761, %v2770
    %v2830 = vadd.f32 %v2762, %v2770
    %v2831 = vadd.f32 %v2763, %v2770
    %v2832 = vadd.f32 %v2764, %v2770
    %v2833 = vadd.f32 %v2765, %v2770
    %v2834 = vadd.f32 %v2766, %v2770
    %vm2835 = vcmp.ge.f32.partialorder %v2771, 0.0
    %vm2836 = vcmp.ge.f32.partialorder %v2772, 0.0
    %vm2837 = vcmp.ge.f32.partialorder %v2773, 0.0
    %vm2838 = vcmp.ge.f32.partialorder %v2774, 0.0
    %vm2839 = vcmp.ge.f32.partialorder %v2775, 0.0
    %vm2840 = vcmp.ge.f32.partialorder %v2776, 0.0
    %vm2841 = vcmp.ge.f32.partialorder %v2777, 0.0
    %vm2842 = vcmp.ge.f32.partialorder %v2778, 0.0
    %vm2843 = vcmp.ge.f32.partialorder %v2779, 0.0
    %vm2844 = vcmp.ge.f32.partialorder %v2780, 0.0
    %vm2845 = vcmp.ge.f32.partialorder %v2781, 0.0
    %vm2846 = vcmp.ge.f32.partialorder %v2782, 0.0
    %vm2847 = vcmp.ge.f32.partialorder %v2783, 0.0
    %vm2848 = vcmp.ge.f32.partialorder %v2784, 0.0
    %vm2849 = vcmp.ge.f32.partialorder %v2785, 0.0
    %vm2850 = vcmp.ge.f32.partialorder %v2786, 0.0
    %vm2851 = vcmp.ge.f32.partialorder %v2787, 0.0
    %vm2852 = vcmp.ge.f32.partialorder %v2788, 0.0
    %vm2853 = vcmp.ge.f32.partialorder %v2789, 0.0
    %vm2854 = vcmp.ge.f32.partialorder %v2790, 0.0
    %vm2855 = vcmp.ge.f32.partialorder %v2791, 0.0
    %vm2856 = vcmp.ge.f32.partialorder %v2792, 0.0
    %vm2857 = vcmp.ge.f32.partialorder %v2793, 0.0
    %vm2858 = vcmp.ge.f32.partialorder %v2794, 0.0
    %vm2859 = vcmp.ge.f32.partialorder %v2795, 0.0
    %vm2860 = vcmp.ge.f32.partialorder %v2796, 0.0
    %vm2861 = vcmp.ge.f32.partialorder %v2797, 0.0
    %vm2862 = vcmp.ge.f32.partialorder %v2798, 0.0
    %vm2863 = vcmp.ge.f32.partialorder %v2799, 0.0
    %vm2864 = vcmp.ge.f32.partialorder %v2800, 0.0
    %vm2865 = vcmp.ge.f32.partialorder %v2801, 0.0
    %vm2866 = vcmp.ge.f32.partialorder %v2802, 0.0
    %vm2867 = vcmp.ge.f32.partialorder %v2803, 0.0
    %vm2868 = vcmp.ge.f32.partialorder %v2804, 0.0
    %vm2869 = vcmp.ge.f32.partialorder %v2805, 0.0
    %vm2870 = vcmp.ge.f32.partialorder %v2806, 0.0
    %vm2871 = vcmp.ge.f32.partialorder %v2807, 0.0
    %vm2872 = vcmp.ge.f32.partialorder %v2808, 0.0
    %vm2873 = vcmp.ge.f32.partialorder %v2809, 0.0
    %vm2874 = vcmp.ge.f32.partialorder %v2810, 0.0
    %vm2875 = vcmp.ge.f32.partialorder %v2811, 0.0
    %vm2876 = vcmp.ge.f32.partialorder %v2812, 0.0
    %vm2877 = vcmp.ge.f32.partialorder %v2813, 0.0
    %vm2878 = vcmp.ge.f32.partialorder %v2814, 0.0
    %vm2879 = vcmp.ge.f32.partialorder %v2815, 0.0
    %vm2880 = vcmp.ge.f32.partialorder %v2816, 0.0
    %vm2881 = vcmp.ge.f32.partialorder %v2817, 0.0
    %vm2882 = vcmp.ge.f32.partialorder %v2818, 0.0
    %vm2883 = vcmp.ge.f32.partialorder %v2819, 0.0
    %vm2884 = vcmp.ge.f32.partialorder %v2820, 0.0
    %vm2885 = vcmp.ge.f32.partialorder %v2821, 0.0
    %vm2886 = vcmp.ge.f32.partialorder %v2822, 0.0
    %vm2887 = vcmp.ge.f32.partialorder %v2823, 0.0
    %vm2888 = vcmp.ge.f32.partialorder %v2824, 0.0
    %vm2889 = vcmp.ge.f32.partialorder %v2825, 0.0
    %vm2890 = vcmp.ge.f32.partialorder %v2826, 0.0
    %vm2891 = vcmp.ge.f32.partialorder %v2827, 0.0
    %vm2892 = vcmp.ge.f32.partialorder %v2828, 0.0
    %vm2893 = vcmp.ge.f32.partialorder %v2829, 0.0
    %vm2894 = vcmp.ge.f32.partialorder %v2830, 0.0
    %vm2895 = vcmp.ge.f32.partialorder %v2831, 0.0
    %vm2896 = vcmp.ge.f32.partialorder %v2832, 0.0
    %vm2897 = vcmp.ge.f32.partialorder %v2833, 0.0
    %vm2898 = vcmp.ge.f32.partialorder %v2834, 0.0
    %v2899 = vlaneseq
    %v2900 = vshrl.u32 %v2899, 7
    %v2901 = vsub.s32 0, %v2900
    %v2902 = vrot.slane %v62, %v2901
    %v2903 = vmul.f32 %v2902, %v2771
    %v2904 = vmul.f32 %v2902, %v2772
    %v2905 = vmul.f32 %v2902, %v2773
    %v2906 = vmul.f32 %v2902, %v2774
    %v2907 = vmul.f32 %v2902, %v2775
    %v2908 = vmul.f32 %v2902, %v2776
    %v2909 = vmul.f32 %v2902, %v2777
    %v2910 = vmul.f32 %v2902, %v2778
    %v2911 = vmul.f32 %v2902, %v2779
    %v2912 = vmul.f32 %v2902, %v2780
    %v2913 = vmul.f32 %v2902, %v2781
    %v2914 = vmul.f32 %v2902, %v2782
    %v2915 = vmul.f32 %v2902, %v2783
    %v2916 = vmul.f32 %v2902, %v2784
    %v2917 = vmul.f32 %v2902, %v2785
    %v2918 = vmul.f32 %v2902, %v2786
    %v2919 = vmul.f32 %v2902, %v2787
    %v2920 = vmul.f32 %v2902, %v2788
    %v2921 = vmul.f32 %v2902, %v2789
    %v2922 = vmul.f32 %v2902, %v2790
    %v2923 = vmul.f32 %v2902, %v2791
    %v2924 = vmul.f32 %v2902, %v2792
    %v2925 = vmul.f32 %v2902, %v2793
    %v2926 = vmul.f32 %v2902, %v2794
    %v2927 = vmul.f32 %v2902, %v2795
    %v2928 = vmul.f32 %v2902, %v2796
    %v2929 = vmul.f32 %v2902, %v2797
    %v2930 = vmul.f32 %v2902, %v2798
    %v2931 = vmul.f32 %v2902, %v2799
    %v2932 = vmul.f32 %v2902, %v2800
    %v2933 = vmul.f32 %v2902, %v2801
    %v2934 = vmul.f32 %v2902, %v2802
    %v2935 = vmul.f32 %v2902, %v2803
    %v2936 = vmul.f32 %v2902, %v2804
    %v2937 = vmul.f32 %v2902, %v2805
    %v2938 = vmul.f32 %v2902, %v2806
    %v2939 = vmul.f32 %v2902, %v2807
    %v2940 = vmul.f32 %v2902, %v2808
    %v2941 = vmul.f32 %v2902, %v2809
    %v2942 = vmul.f32 %v2902, %v2810
    %v2943 = vmul.f32 %v2902, %v2811
    %v2944 = vmul.f32 %v2902, %v2812
    %v2945 = vmul.f32 %v2902, %v2813
    %v2946 = vmul.f32 %v2902, %v2814
    %v2947 = vmul.f32 %v2902, %v2815
    %v2948 = vmul.f32 %v2902, %v2816
    %v2949 = vmul.f32 %v2902, %v2817
    %v2950 = vmul.f32 %v2902, %v2818
    %v2951 = vmul.f32 %v2902, %v2819
    %v2952 = vmul.f32 %v2902, %v2820
    %v2953 = vmul.f32 %v2902, %v2821
    %v2954 = vmul.f32 %v2902, %v2822
    %v2955 = vmul.f32 %v2902, %v2823
    %v2956 = vmul.f32 %v2902, %v2824
    %v2957 = vmul.f32 %v2902, %v2825
    %v2958 = vmul.f32 %v2902, %v2826
    %v2959 = vmul.f32 %v2902, %v2827
    %v2960 = vmul.f32 %v2902, %v2828
    %v2961 = vmul.f32 %v2902, %v2829
    %v2962 = vmul.f32 %v2902, %v2830
    %v2963 = vmul.f32 %v2902, %v2831
    %v2964 = vmul.f32 %v2902, %v2832
    %v2965 = vmul.f32 %v2902, %v2833
    %v2966 = vmul.f32 %v2902, %v2834
    %v2967 = vsel %vm2835, %v2771, %v2903
    %v2968 = vsel %vm2836, %v2772, %v2904
    %v2969 = vsel %vm2837, %v2773, %v2905
    %v2970 = vsel %vm2838, %v2774, %v2906
    %v2971 = vsel %vm2839, %v2775, %v2907
    %v2972 = vsel %vm2840, %v2776, %v2908
    %v2973 = vsel %vm2841, %v2777, %v2909
    %v2974 = vsel %vm2842, %v2778, %v2910
    %v2975 = vsel %vm2843, %v2779, %v2911
    %v2976 = vsel %vm2844, %v2780, %v2912
    %v2977 = vsel %vm2845, %v2781, %v2913
    %v2978 = vsel %vm2846, %v2782, %v2914
    %v2979 = vsel %vm2847, %v2783, %v2915
    %v2980 = vsel %vm2848, %v2784, %v2916
    %v2981 = vsel %vm2849, %v2785, %v2917
    %v2982 = vsel %vm2850, %v2786, %v2918
    %v2983 = vsel %vm2851, %v2787, %v2919
    %v2984 = vsel %vm2852, %v2788, %v2920
    %v2985 = vsel %vm2853, %v2789, %v2921
    %v2986 = vsel %vm2854, %v2790, %v2922
    %v2987 = vsel %vm2855, %v2791, %v2923
    %v2988 = vsel %vm2856, %v2792, %v2924
    %v2989 = vsel %vm2857, %v2793, %v2925
    %v2990 = vsel %vm2858, %v2794, %v2926
    %v2991 = vsel %vm2859, %v2795, %v2927
    %v2992 = vsel %vm2860, %v2796, %v2928
    %v2993 = vsel %vm2861, %v2797, %v2929
    %v2994 = vsel %vm2862, %v2798, %v2930
    %v2995 = vsel %vm2863, %v2799, %v2931
    %v2996 = vsel %vm2864, %v2800, %v2932
    %v2997 = vsel %vm2865, %v2801, %v2933
    %v2998 = vsel %vm2866, %v2802, %v2934
    %v2999 = vsel %vm2867, %v2803, %v2935
    %v3000 = vsel %vm2868, %v2804, %v2936
    %v3001 = vsel %vm2869, %v2805, %v2937
    %v3002 = vsel %vm2870, %v2806, %v2938
    %v3003 = vsel %vm2871, %v2807, %v2939
    %v3004 = vsel %vm2872, %v2808, %v2940
    %v3005 = vsel %vm2873, %v2809, %v2941
    %v3006 = vsel %vm2874, %v2810, %v2942
    %v3007 = vsel %vm2875, %v2811, %v2943
    %v3008 = vsel %vm2876, %v2812, %v2944
    %v3009 = vsel %vm2877, %v2813, %v2945
    %v3010 = vsel %vm2878, %v2814, %v2946
    %v3011 = vsel %vm2879, %v2815, %v2947
    %v3012 = vsel %vm2880, %v2816, %v2948
    %v3013 = vsel %vm2881, %v2817, %v2949
    %v3014 = vsel %vm2882, %v2818, %v2950
    %v3015 = vsel %vm2883, %v2819, %v2951
    %v3016 = vsel %vm2884, %v2820, %v2952
    %v3017 = vsel %vm2885, %v2821, %v2953
    %v3018 = vsel %vm2886, %v2822, %v2954
    %v3019 = vsel %vm2887, %v2823, %v2955
    %v3020 = vsel %vm2888, %v2824, %v2956
    %v3021 = vsel %vm2889, %v2825, %v2957
    %v3022 = vsel %vm2890, %v2826, %v2958
    %v3023 = vsel %vm2891, %v2827, %v2959
    %v3024 = vsel %vm2892, %v2828, %v2960
    %v3025 = vsel %vm2893, %v2829, %v2961
    %v3026 = vsel %vm2894, %v2830, %v2962
    %v3027 = vsel %vm2895, %v2831, %v2963
    %v3028 = vsel %vm2896, %v2832, %v2964
    %v3029 = vsel %vm2897, %v2833, %v2965
    %v3030 = vsel %vm2898, %v2834, %v2966
    %v3063 = vunpack.c.l.b16 %v1024
    %v3064 = vunpack.c.h.b16 %v1024
    %v3065 = vunpack.c.l.b16 %v1025
    %v3066 = vunpack.c.h.b16 %v1025
    %v3067 = vunpack.c.l.b16 %v1026
    %v3068 = vunpack.c.h.b16 %v1026
    %v3069 = vunpack.c.l.b16 %v1027
    %v3070 = vunpack.c.h.b16 %v1027
    %v3071 = vunpack.c.l.b16 %v1028
    %v3072 = vunpack.c.h.b16 %v1028
    %v3073 = vunpack.c.l.b16 %v1029
    %v3074 = vunpack.c.h.b16 %v1029
    %v3075 = vunpack.c.l.b16 %v1030
    %v3076 = vunpack.c.h.b16 %v1030
    %v3077 = vunpack.c.l.b16 %v1031
    %v3078 = vunpack.c.h.b16 %v1031
    %v3079 = vunpack.c.l.b16 %v1032
    %v3080 = vunpack.c.h.b16 %v1032
    %v3081 = vunpack.c.l.b16 %v1033
    %v3082 = vunpack.c.h.b16 %v1033
    %v3083 = vunpack.c.l.b16 %v1034
    %v3084 = vunpack.c.h.b16 %v1034
    %v3085 = vunpack.c.l.b16 %v1035
    %v3086 = vunpack.c.h.b16 %v1035
    %v3087 = vunpack.c.l.b16 %v1036
    %v3088 = vunpack.c.h.b16 %v1036
    %v3089 = vunpack.c.l.b16 %v1037
    %v3090 = vunpack.c.h.b16 %v1037
    %v3091 = vunpack.c.l.b16 %v1038
    %v3092 = vunpack.c.h.b16 %v1038
    %v3093 = vunpack.c.l.b16 %v1039
    %v3094 = vunpack.c.h.b16 %v1039
    %v3095 = vunpack.c.l.b16 %v1040
    %v3096 = vunpack.c.h.b16 %v1040
    %v3097 = vunpack.c.l.b16 %v1041
    %v3098 = vunpack.c.h.b16 %v1041
    %v3099 = vunpack.c.l.b16 %v1042
    %v3100 = vunpack.c.h.b16 %v1042
    %v3101 = vunpack.c.l.b16 %v1043
    %v3102 = vunpack.c.h.b16 %v1043
    %v3103 = vunpack.c.l.b16 %v1044
    %v3104 = vunpack.c.h.b16 %v1044
    %v3105 = vunpack.c.l.b16 %v1045
    %v3106 = vunpack.c.h.b16 %v1045
    %v3107 = vunpack.c.l.b16 %v1046
    %v3108 = vunpack.c.h.b16 %v1046
    %v3109 = vunpack.c.l.b16 %v1047
    %v3110 = vunpack.c.h.b16 %v1047
    %v3111 = vunpack.c.l.b16 %v1048
    %v3112 = vunpack.c.h.b16 %v1048
    %v3113 = vunpack.c.l.b16 %v1049
    %v3114 = vunpack.c.h.b16 %v1049
    %v3115 = vunpack.c.l.b16 %v1050
    %v3116 = vunpack.c.h.b16 %v1050
    %v3117 = vunpack.c.l.b16 %v1051
    %v3118 = vunpack.c.h.b16 %v1051
    %v3119 = vunpack.c.l.b16 %v1052
    %v3120 = vunpack.c.h.b16 %v1052
    %v3121 = vunpack.c.l.b16 %v1053
    %v3122 = vunpack.c.h.b16 %v1053
    %v3123 = vunpack.c.l.b16 %v1054
    %v3124 = vunpack.c.h.b16 %v1054
    %v3125 = vunpack.c.l.b16 %v1055
    %v3126 = vunpack.c.h.b16 %v1055
    %v3127 = vpack.c.b16 %v3063, %v3063
    %v3128 = vpack.c.b16 %v3064, %v3064
    %v3129 = vpack.c.b16 %v3065, %v3065
    %v3130 = vpack.c.b16 %v3066, %v3066
    %v3131 = vpack.c.b16 %v3067, %v3067
    %v3132 = vpack.c.b16 %v3068, %v3068
    %v3133 = vpack.c.b16 %v3069, %v3069
    %v3134 = vpack.c.b16 %v3070, %v3070
    %v3135 = vpack.c.b16 %v3071, %v3071
    %v3136 = vpack.c.b16 %v3072, %v3072
    %v3137 = vpack.c.b16 %v3073, %v3073
    %v3138 = vpack.c.b16 %v3074, %v3074
    %v3139 = vpack.c.b16 %v3075, %v3075
    %v3140 = vpack.c.b16 %v3076, %v3076
    %v3141 = vpack.c.b16 %v3077, %v3077
    %v3142 = vpack.c.b16 %v3078, %v3078
    %v3143 = vpack.c.b16 %v3079, %v3079
    %v3144 = vpack.c.b16 %v3080, %v3080
    %v3145 = vpack.c.b16 %v3081, %v3081
    %v3146 = vpack.c.b16 %v3082, %v3082
    %v3147 = vpack.c.b16 %v3083, %v3083
    %v3148 = vpack.c.b16 %v3084, %v3084
    %v3149 = vpack.c.b16 %v3085, %v3085
    %v3150 = vpack.c.b16 %v3086, %v3086
    %v3151 = vpack.c.b16 %v3087, %v3087
    %v3152 = vpack.c.b16 %v3088, %v3088
    %v3153 = vpack.c.b16 %v3089, %v3089
    %v3154 = vpack.c.b16 %v3090, %v3090
    %v3155 = vpack.c.b16 %v3091, %v3091
    %v3156 = vpack.c.b16 %v3092, %v3092
    %v3157 = vpack.c.b16 %v3093, %v3093
    %v3158 = vpack.c.b16 %v3094, %v3094
    %v3159 = vpack.c.b16 %v3095, %v3095
    %v3160 = vpack.c.b16 %v3096, %v3096
    %v3161 = vpack.c.b16 %v3097, %v3097
    %v3162 = vpack.c.b16 %v3098, %v3098
    %v3163 = vpack.c.b16 %v3099, %v3099
    %v3164 = vpack.c.b16 %v3100, %v3100
    %v3165 = vpack.c.b16 %v3101, %v3101
    %v3166 = vpack.c.b16 %v3102, %v3102
    %v3167 = vpack.c.b16 %v3103, %v3103
    %v3168 = vpack.c.b16 %v3104, %v3104
    %v3169 = vpack.c.b16 %v3105, %v3105
    %v3170 = vpack.c.b16 %v3106, %v3106
    %v3171 = vpack.c.b16 %v3107, %v3107
    %v3172 = vpack.c.b16 %v3108, %v3108
    %v3173 = vpack.c.b16 %v3109, %v3109
    %v3174 = vpack.c.b16 %v3110, %v3110
    %v3175 = vpack.c.b16 %v3111, %v3111
    %v3176 = vpack.c.b16 %v3112, %v3112
    %v3177 = vpack.c.b16 %v3113, %v3113
    %v3178 = vpack.c.b16 %v3114, %v3114
    %v3179 = vpack.c.b16 %v3115, %v3115
    %v3180 = vpack.c.b16 %v3116, %v3116
    %v3181 = vpack.c.b16 %v3117, %v3117
    %v3182 = vpack.c.b16 %v3118, %v3118
    %v3183 = vpack.c.b16 %v3119, %v3119
    %v3184 = vpack.c.b16 %v3120, %v3120
    %v3185 = vpack.c.b16 %v3121, %v3121
    %v3186 = vpack.c.b16 %v3122, %v3122
    %v3187 = vpack.c.b16 %v3123, %v3123
    %v3188 = vpack.c.b16 %v3124, %v3124
    %v3189 = vpack.c.b16 %v3125, %v3125
    %v3190 = vpack.c.b16 %v3126, %v3126
    %3255 = vst [vmem:[%s5] sm:$0xf] %v3127
    %3256 = vst [vmem:[%s5 + $0x4] sm:$0xf] %v3128
    %3257 = vst [vmem:[%s5 + $0x8] sm:$0xf] %v3129
    %3258 = vst [vmem:[%s5 + $0xc] sm:$0xf] %v3130
    %3259 = vst [vmem:[%s5 + $0x10] sm:$0xf] %v3131
    %3260 = vst [vmem:[%s5 + $0x14] sm:$0xf] %v3132
    %3261 = vst [vmem:[%s5 + $0x18] sm:$0xf] %v3133
    %3262 = vst [vmem:[%s5 + $0x1c] sm:$0xf] %v3134
    %3263 = vst [vmem:[%s5 + $0x20] sm:$0xf] %v3135
    %3264 = vst [vmem:[%s5 + $0x24] sm:$0xf] %v3136
    %3265 = vst [vmem:[%s5 + $0x28] sm:$0xf] %v3137
    %3266 = vst [vmem:[%s5 + $0x2c] sm:$0xf] %v3138
    %3267 = vst [vmem:[%s5 + $0x30] sm:$0xf] %v3139
    %3268 = vst [vmem:[%s5 + $0x34] sm:$0xf] %v3140
    %3269 = vst [vmem:[%s5 + $0x38] sm:$0xf] %v3141
    %3270 = vst [vmem:[%s5 + $0x3c] sm:$0xf] %v3142
    %3271 = vst [vmem:[%s5 + $0x40] sm:$0xf] %v3143
    %3272 = vst [vmem:[%s5 + $0x44] sm:$0xf] %v3144
    %3273 = vst [vmem:[%s5 + $0x48] sm:$0xf] %v3145
    %3274 = vst [vmem:[%s5 + $0x4c] sm:$0xf] %v3146
    %3275 = vst [vmem:[%s5 + $0x50] sm:$0xf] %v3147
    %3276 = vst [vmem:[%s5 + $0x54] sm:$0xf] %v3148
    %3277 = vst [vmem:[%s5 + $0x58] sm:$0xf] %v3149
    %3278 = vst [vmem:[%s5 + $0x5c] sm:$0xf] %v3150
    %3279 = vst [vmem:[%s5 + $0x60] sm:$0xf] %v3151
    %3280 = vst [vmem:[%s5 + $0x64] sm:$0xf] %v3152
    %3281 = vst [vmem:[%s5 + $0x68] sm:$0xf] %v3153
    %3282 = vst [vmem:[%s5 + $0x6c] sm:$0xf] %v3154
    %3283 = vst [vmem:[%s5 + $0x70] sm:$0xf] %v3155
    %3284 = vst [vmem:[%s5 + $0x74] sm:$0xf] %v3156
    %3285 = vst [vmem:[%s5 + $0x78] sm:$0xf] %v3157
    %3286 = vst [vmem:[%s5 + $0x7c] sm:$0xf] %v3158
    %3287 = vst [vmem:[%s5 + $0x80] sm:$0xf] %v3159
    %3288 = vst [vmem:[%s5 + $0x84] sm:$0xf] %v3160
    %3289 = vst [vmem:[%s5 + $0x88] sm:$0xf] %v3161
    %3290 = vst [vmem:[%s5 + $0x8c] sm:$0xf] %v3162
    %3291 = vst [vmem:[%s5 + $0x90] sm:$0xf] %v3163
    %3292 = vst [vmem:[%s5 + $0x94] sm:$0xf] %v3164
    %3293 = vst [vmem:[%s5 + $0x98] sm:$0xf] %v3165
    %3294 = vst [vmem:[%s5 + $0x9c] sm:$0xf] %v3166
    %3295 = vst [vmem:[%s5 + $0xa0] sm:$0xf] %v3167
    %3296 = vst [vmem:[%s5 + $0xa4] sm:$0xf] %v3168
    %3297 = vst [vmem:[%s5 + $0xa8] sm:$0xf] %v3169
    %3298 = vst [vmem:[%s5 + $0xac] sm:$0xf] %v3170
    %3299 = vst [vmem:[%s5 + $0xb0] sm:$0xf] %v3171
    %3300 = vst [vmem:[%s5 + $0xb4] sm:$0xf] %v3172
    %3301 = vst [vmem:[%s5 + $0xb8] sm:$0xf] %v3173
    %3302 = vst [vmem:[%s5 + $0xbc] sm:$0xf] %v3174
    %3303 = vst [vmem:[%s5 + $0xc0] sm:$0xf] %v3175
    %3304 = vst [vmem:[%s5 + $0xc4] sm:$0xf] %v3176
    %3305 = vst [vmem:[%s5 + $0xc8] sm:$0xf] %v3177
    %3306 = vst [vmem:[%s5 + $0xcc] sm:$0xf] %v3178
    %3307 = vst [vmem:[%s5 + $0xd0] sm:$0xf] %v3179
    %3308 = vst [vmem:[%s5 + $0xd4] sm:$0xf] %v3180
    %3309 = vst [vmem:[%s5 + $0xd8] sm:$0xf] %v3181
    %3310 = vst [vmem:[%s5 + $0xdc] sm:$0xf] %v3182
    %3311 = vst [vmem:[%s5 + $0xe0] sm:$0xf] %v3183
    %3312 = vst [vmem:[%s5 + $0xe4] sm:$0xf] %v3184
    %3313 = vst [vmem:[%s5 + $0xe8] sm:$0xf] %v3185
    %3314 = vst [vmem:[%s5 + $0xec] sm:$0xf] %v3186
    %3315 = vst [vmem:[%s5 + $0xf0] sm:$0xf] %v3187
    %3316 = vst [vmem:[%s5 + $0xf4] sm:$0xf] %v3188
    %3317 = vst [vmem:[%s5 + $0xf8] sm:$0xf] %v3189
    %3318 = vst [vmem:[%s5 + $0xfc] sm:$0xf] %v3190
    %v3351 = vunpack.c.l.b16 %v2036
    %v3352 = vunpack.c.h.b16 %v2036
    %v3353 = vunpack.c.l.b16 %v2037
    %v3354 = vunpack.c.h.b16 %v2037
    %v3355 = vunpack.c.l.b16 %v2038
    %v3356 = vunpack.c.h.b16 %v2038
    %v3357 = vunpack.c.l.b16 %v2039
    %v3358 = vunpack.c.h.b16 %v2039
    %v3359 = vunpack.c.l.b16 %v2040
    %v3360 = vunpack.c.h.b16 %v2040
    %v3361 = vunpack.c.l.b16 %v2041
    %v3362 = vunpack.c.h.b16 %v2041
    %v3363 = vunpack.c.l.b16 %v2042
    %v3364 = vunpack.c.h.b16 %v2042
    %v3365 = vunpack.c.l.b16 %v2043
    %v3366 = vunpack.c.h.b16 %v2043
    %v3367 = vunpack.c.l.b16 %v2044
    %v3368 = vunpack.c.h.b16 %v2044
    %v3369 = vunpack.c.l.b16 %v2045
    %v3370 = vunpack.c.h.b16 %v2045
    %v3371 = vunpack.c.l.b16 %v2046
    %v3372 = vunpack.c.h.b16 %v2046
    %v3373 = vunpack.c.l.b16 %v2047
    %v3374 = vunpack.c.h.b16 %v2047
    %v3375 = vunpack.c.l.b16 %v2048
    %v3376 = vunpack.c.h.b16 %v2048
    %v3377 = vunpack.c.l.b16 %v2049
    %v3378 = vunpack.c.h.b16 %v2049
    %v3379 = vunpack.c.l.b16 %v2050
    %v3380 = vunpack.c.h.b16 %v2050
    %v3381 = vunpack.c.l.b16 %v2051
    %v3382 = vunpack.c.h.b16 %v2051
    %v3383 = vunpack.c.l.b16 %v2052
    %v3384 = vunpack.c.h.b16 %v2052
    %v3385 = vunpack.c.l.b16 %v2053
    %v3386 = vunpack.c.h.b16 %v2053
    %v3387 = vunpack.c.l.b16 %v2054
    %v3388 = vunpack.c.h.b16 %v2054
    %v3389 = vunpack.c.l.b16 %v2055
    %v3390 = vunpack.c.h.b16 %v2055
    %v3391 = vunpack.c.l.b16 %v2056
    %v3392 = vunpack.c.h.b16 %v2056
    %v3393 = vunpack.c.l.b16 %v2057
    %v3394 = vunpack.c.h.b16 %v2057
    %v3395 = vunpack.c.l.b16 %v2058
    %v3396 = vunpack.c.h.b16 %v2058
    %v3397 = vunpack.c.l.b16 %v2059
    %v3398 = vunpack.c.h.b16 %v2059
    %v3399 = vunpack.c.l.b16 %v2060
    %v3400 = vunpack.c.h.b16 %v2060
    %v3401 = vunpack.c.l.b16 %v2061
    %v3402 = vunpack.c.h.b16 %v2061
    %v3403 = vunpack.c.l.b16 %v2062
    %v3404 = vunpack.c.h.b16 %v2062
    %v3405 = vunpack.c.l.b16 %v2063
    %v3406 = vunpack.c.h.b16 %v2063
    %v3407 = vunpack.c.l.b16 %v2064
    %v3408 = vunpack.c.h.b16 %v2064
    %v3409 = vunpack.c.l.b16 %v2065
    %v3410 = vunpack.c.h.b16 %v2065
    %v3411 = vunpack.c.l.b16 %v2066
    %v3412 = vunpack.c.h.b16 %v2066
    %v3413 = vunpack.c.l.b16 %v2067
    %v3414 = vunpack.c.h.b16 %v2067
    %v3415 = vpack.c.b16 %v3351, %v3351
    %v3416 = vpack.c.b16 %v3352, %v3352
    %v3417 = vpack.c.b16 %v3353, %v3353
    %v3418 = vpack.c.b16 %v3354, %v3354
    %v3419 = vpack.c.b16 %v3355, %v3355
    %v3420 = vpack.c.b16 %v3356, %v3356
    %v3421 = vpack.c.b16 %v3357, %v3357
    %v3422 = vpack.c.b16 %v3358, %v3358
    %v3423 = vpack.c.b16 %v3359, %v3359
    %v3424 = vpack.c.b16 %v3360, %v3360
    %v3425 = vpack.c.b16 %v3361, %v3361
    %v3426 = vpack.c.b16 %v3362, %v3362
    %v3427 = vpack.c.b16 %v3363, %v3363
    %v3428 = vpack.c.b16 %v3364, %v3364
    %v3429 = vpack.c.b16 %v3365, %v3365
    %v3430 = vpack.c.b16 %v3366, %v3366
    %v3431 = vpack.c.b16 %v3367, %v3367
    %v3432 = vpack.c.b16 %v3368, %v3368
    %v3433 = vpack.c.b16 %v3369, %v3369
    %v3434 = vpack.c.b16 %v3370, %v3370
    %v3435 = vpack.c.b16 %v3371, %v3371
    %v3436 = vpack.c.b16 %v3372, %v3372
    %v3437 = vpack.c.b16 %v3373, %v3373
    %v3438 = vpack.c.b16 %v3374, %v3374
    %v3439 = vpack.c.b16 %v3375, %v3375
    %v3440 = vpack.c.b16 %v3376, %v3376
    %v3441 = vpack.c.b16 %v3377, %v3377
    %v3442 = vpack.c.b16 %v3378, %v3378
    %v3443 = vpack.c.b16 %v3379, %v3379
    %v3444 = vpack.c.b16 %v3380, %v3380
    %v3445 = vpack.c.b16 %v3381, %v3381
    %v3446 = vpack.c.b16 %v3382, %v3382
    %v3447 = vpack.c.b16 %v3383, %v3383
    %v3448 = vpack.c.b16 %v3384, %v3384
    %v3449 = vpack.c.b16 %v3385, %v3385
    %v3450 = vpack.c.b16 %v3386, %v3386
    %v3451 = vpack.c.b16 %v3387, %v3387
    %v3452 = vpack.c.b16 %v3388, %v3388
    %v3453 = vpack.c.b16 %v3389, %v3389
    %v3454 = vpack.c.b16 %v3390, %v3390
    %v3455 = vpack.c.b16 %v3391, %v3391
    %v3456 = vpack.c.b16 %v3392, %v3392
    %v3457 = vpack.c.b16 %v3393, %v3393
    %v3458 = vpack.c.b16 %v3394, %v3394
    %v3459 = vpack.c.b16 %v3395, %v3395
    %v3460 = vpack.c.b16 %v3396, %v3396
    %v3461 = vpack.c.b16 %v3397, %v3397
    %v3462 = vpack.c.b16 %v3398, %v3398
    %v3463 = vpack.c.b16 %v3399, %v3399
    %v3464 = vpack.c.b16 %v3400, %v3400
    %v3465 = vpack.c.b16 %v3401, %v3401
    %v3466 = vpack.c.b16 %v3402, %v3402
    %v3467 = vpack.c.b16 %v3403, %v3403
    %v3468 = vpack.c.b16 %v3404, %v3404
    %v3469 = vpack.c.b16 %v3405, %v3405
    %v3470 = vpack.c.b16 %v3406, %v3406
    %v3471 = vpack.c.b16 %v3407, %v3407
    %v3472 = vpack.c.b16 %v3408, %v3408
    %v3473 = vpack.c.b16 %v3409, %v3409
    %v3474 = vpack.c.b16 %v3410, %v3410
    %v3475 = vpack.c.b16 %v3411, %v3411
    %v3476 = vpack.c.b16 %v3412, %v3412
    %v3477 = vpack.c.b16 %v3413, %v3413
    %v3478 = vpack.c.b16 %v3414, %v3414
    %3543 = vst [vmem:[%s6] sm:$0xf] %v3415
    %3544 = vst [vmem:[%s6 + $0x4] sm:$0xf] %v3416
    %3545 = vst [vmem:[%s6 + $0x8] sm:$0xf] %v3417
    %3546 = vst [vmem:[%s6 + $0xc] sm:$0xf] %v3418
    %3547 = vst [vmem:[%s6 + $0x10] sm:$0xf] %v3419
    %3548 = vst [vmem:[%s6 + $0x14] sm:$0xf] %v3420
    %3549 = vst [vmem:[%s6 + $0x18] sm:$0xf] %v3421
    %3550 = vst [vmem:[%s6 + $0x1c] sm:$0xf] %v3422
    %3551 = vst [vmem:[%s6 + $0x20] sm:$0xf] %v3423
    %3552 = vst [vmem:[%s6 + $0x24] sm:$0xf] %v3424
    %3553 = vst [vmem:[%s6 + $0x28] sm:$0xf] %v3425
    %3554 = vst [vmem:[%s6 + $0x2c] sm:$0xf] %v3426
    %3555 = vst [vmem:[%s6 + $0x30] sm:$0xf] %v3427
    %3556 = vst [vmem:[%s6 + $0x34] sm:$0xf] %v3428
    %3557 = vst [vmem:[%s6 + $0x38] sm:$0xf] %v3429
    %3558 = vst [vmem:[%s6 + $0x3c] sm:$0xf] %v3430
    %3559 = vst [vmem:[%s6 + $0x40] sm:$0xf] %v3431
    %3560 = vst [vmem:[%s6 + $0x44] sm:$0xf] %v3432
    %3561 = vst [vmem:[%s6 + $0x48] sm:$0xf] %v3433
    %3562 = vst [vmem:[%s6 + $0x4c] sm:$0xf] %v3434
    %3563 = vst [vmem:[%s6 + $0x50] sm:$0xf] %v3435
    %3564 = vst [vmem:[%s6 + $0x54] sm:$0xf] %v3436
    %3565 = vst [vmem:[%s6 + $0x58] sm:$0xf] %v3437
    %3566 = vst [vmem:[%s6 + $0x5c] sm:$0xf] %v3438
    %3567 = vst [vmem:[%s6 + $0x60] sm:$0xf] %v3439
    %3568 = vst [vmem:[%s6 + $0x64] sm:$0xf] %v3440
    %3569 = vst [vmem:[%s6 + $0x68] sm:$0xf] %v3441
    %3570 = vst [vmem:[%s6 + $0x6c] sm:$0xf] %v3442
    %3571 = vst [vmem:[%s6 + $0x70] sm:$0xf] %v3443
    %3572 = vst [vmem:[%s6 + $0x74] sm:$0xf] %v3444
    %3573 = vst [vmem:[%s6 + $0x78] sm:$0xf] %v3445
    %3574 = vst [vmem:[%s6 + $0x7c] sm:$0xf] %v3446
    %3575 = vst [vmem:[%s6 + $0x80] sm:$0xf] %v3447
    %3576 = vst [vmem:[%s6 + $0x84] sm:$0xf] %v3448
    %3577 = vst [vmem:[%s6 + $0x88] sm:$0xf] %v3449
    %3578 = vst [vmem:[%s6 + $0x8c] sm:$0xf] %v3450
    %3579 = vst [vmem:[%s6 + $0x90] sm:$0xf] %v3451
    %3580 = vst [vmem:[%s6 + $0x94] sm:$0xf] %v3452
    %3581 = vst [vmem:[%s6 + $0x98] sm:$0xf] %v3453
    %3582 = vst [vmem:[%s6 + $0x9c] sm:$0xf] %v3454
    %3583 = vst [vmem:[%s6 + $0xa0] sm:$0xf] %v3455
    %3584 = vst [vmem:[%s6 + $0xa4] sm:$0xf] %v3456
    %3585 = vst [vmem:[%s6 + $0xa8] sm:$0xf] %v3457
    %3586 = vst [vmem:[%s6 + $0xac] sm:$0xf] %v3458
    %3587 = vst [vmem:[%s6 + $0xb0] sm:$0xf] %v3459
    %3588 = vst [vmem:[%s6 + $0xb4] sm:$0xf] %v3460
    %3589 = vst [vmem:[%s6 + $0xb8] sm:$0xf] %v3461
    %3590 = vst [vmem:[%s6 + $0xbc] sm:$0xf] %v3462
    %3591 = vst [vmem:[%s6 + $0xc0] sm:$0xf] %v3463
    %3592 = vst [vmem:[%s6 + $0xc4] sm:$0xf] %v3464
    %3593 = vst [vmem:[%s6 + $0xc8] sm:$0xf] %v3465
    %3594 = vst [vmem:[%s6 + $0xcc] sm:$0xf] %v3466
    %3595 = vst [vmem:[%s6 + $0xd0] sm:$0xf] %v3467
    %3596 = vst [vmem:[%s6 + $0xd4] sm:$0xf] %v3468
    %3597 = vst [vmem:[%s6 + $0xd8] sm:$0xf] %v3469
    %3598 = vst [vmem:[%s6 + $0xdc] sm:$0xf] %v3470
    %3599 = vst [vmem:[%s6 + $0xe0] sm:$0xf] %v3471
    %3600 = vst [vmem:[%s6 + $0xe4] sm:$0xf] %v3472
    %3601 = vst [vmem:[%s6 + $0xe8] sm:$0xf] %v3473
    %3602 = vst [vmem:[%s6 + $0xec] sm:$0xf] %v3474
    %3603 = vst [vmem:[%s6 + $0xf0] sm:$0xf] %v3475
    %3604 = vst [vmem:[%s6 + $0xf4] sm:$0xf] %v3476
    %3605 = vst [vmem:[%s6 + $0xf8] sm:$0xf] %v3477
    %3606 = vst [vmem:[%s6 + $0xfc] sm:$0xf] %v3478
    %v3607 = vpack.c.bf16 %v2968, %v2967
    %v3608 = vpack.c.bf16 %v2970, %v2969
    %v3609 = vpack.c.bf16 %v2972, %v2971
    %v3610 = vpack.c.bf16 %v2974, %v2973
    %v3611 = vpack.c.bf16 %v2976, %v2975
    %v3612 = vpack.c.bf16 %v2978, %v2977
    %v3613 = vpack.c.bf16 %v2980, %v2979
    %v3614 = vpack.c.bf16 %v2982, %v2981
    %v3615 = vpack.c.bf16 %v2984, %v2983
    %v3616 = vpack.c.bf16 %v2986, %v2985
    %v3617 = vpack.c.bf16 %v2988, %v2987
    %v3618 = vpack.c.bf16 %v2990, %v2989
    %v3619 = vpack.c.bf16 %v2992, %v2991
    %v3620 = vpack.c.bf16 %v2994, %v2993
    %v3621 = vpack.c.bf16 %v2996, %v2995
    %v3622 = vpack.c.bf16 %v2998, %v2997
    %v3623 = vpack.c.bf16 %v3000, %v2999
    %v3624 = vpack.c.bf16 %v3002, %v3001
    %v3625 = vpack.c.bf16 %v3004, %v3003
    %v3626 = vpack.c.bf16 %v3006, %v3005
    %v3627 = vpack.c.bf16 %v3008, %v3007
    %v3628 = vpack.c.bf16 %v3010, %v3009
    %v3629 = vpack.c.bf16 %v3012, %v3011
    %v3630 = vpack.c.bf16 %v3014, %v3013
    %v3631 = vpack.c.bf16 %v3016, %v3015
    %v3632 = vpack.c.bf16 %v3018, %v3017
    %v3633 = vpack.c.bf16 %v3020, %v3019
    %v3634 = vpack.c.bf16 %v3022, %v3021
    %v3635 = vpack.c.bf16 %v3024, %v3023
    %v3636 = vpack.c.bf16 %v3026, %v3025
    %v3637 = vpack.c.bf16 %v3028, %v3027
    %v3638 = vpack.c.bf16 %v3030, %v3029
    %v3671 = vunpack.c.l.b16 %v3607
    %v3672 = vunpack.c.h.b16 %v3607
    %v3673 = vunpack.c.l.b16 %v3608
    %v3674 = vunpack.c.h.b16 %v3608
    %v3675 = vunpack.c.l.b16 %v3609
    %v3676 = vunpack.c.h.b16 %v3609
    %v3677 = vunpack.c.l.b16 %v3610
    %v3678 = vunpack.c.h.b16 %v3610
    %v3679 = vunpack.c.l.b16 %v3611
    %v3680 = vunpack.c.h.b16 %v3611
    %v3681 = vunpack.c.l.b16 %v3612
    %v3682 = vunpack.c.h.b16 %v3612
    %v3683 = vunpack.c.l.b16 %v3613
    %v3684 = vunpack.c.h.b16 %v3613
    %v3685 = vunpack.c.l.b16 %v3614
    %v3686 = vunpack.c.h.b16 %v3614
    %v3687 = vunpack.c.l.b16 %v3615
    %v3688 = vunpack.c.h.b16 %v3615
    %v3689 = vunpack.c.l.b16 %v3616
    %v3690 = vunpack.c.h.b16 %v3616
    %v3691 = vunpack.c.l.b16 %v3617
    %v3692 = vunpack.c.h.b16 %v3617
    %v3693 = vunpack.c.l.b16 %v3618
    %v3694 = vunpack.c.h.b16 %v3618
    %v3695 = vunpack.c.l.b16 %v3619
    %v3696 = vunpack.c.h.b16 %v3619
    %v3697 = vunpack.c.l.b16 %v3620
    %v3698 = vunpack.c.h.b16 %v3620
    %v3699 = vunpack.c.l.b16 %v3621
    %v3700 = vunpack.c.h.b16 %v3621
    %v3701 = vunpack.c.l.b16 %v3622
    %v3702 = vunpack.c.h.b16 %v3622
    %v3703 = vunpack.c.l.b16 %v3623
    %v3704 = vunpack.c.h.b16 %v3623
    %v3705 = vunpack.c.l.b16 %v3624
    %v3706 = vunpack.c.h.b16 %v3624
    %v3707 = vunpack.c.l.b16 %v3625
    %v3708 = vunpack.c.h.b16 %v3625
    %v3709 = vunpack.c.l.b16 %v3626
    %v3710 = vunpack.c.h.b16 %v3626
    %v3711 = vunpack.c.l.b16 %v3627
    %v3712 = vunpack.c.h.b16 %v3627
    %v3713 = vunpack.c.l.b16 %v3628
    %v3714 = vunpack.c.h.b16 %v3628
    %v3715 = vunpack.c.l.b16 %v3629
    %v3716 = vunpack.c.h.b16 %v3629
    %v3717 = vunpack.c.l.b16 %v3630
    %v3718 = vunpack.c.h.b16 %v3630
    %v3719 = vunpack.c.l.b16 %v3631
    %v3720 = vunpack.c.h.b16 %v3631
    %v3721 = vunpack.c.l.b16 %v3632
    %v3722 = vunpack.c.h.b16 %v3632
    %v3723 = vunpack.c.l.b16 %v3633
    %v3724 = vunpack.c.h.b16 %v3633
    %v3725 = vunpack.c.l.b16 %v3634
    %v3726 = vunpack.c.h.b16 %v3634
    %v3727 = vunpack.c.l.b16 %v3635
    %v3728 = vunpack.c.h.b16 %v3635
    %v3729 = vunpack.c.l.b16 %v3636
    %v3730 = vunpack.c.h.b16 %v3636
    %v3731 = vunpack.c.l.b16 %v3637
    %v3732 = vunpack.c.h.b16 %v3637
    %v3733 = vunpack.c.l.b16 %v3638
    %v3734 = vunpack.c.h.b16 %v3638
    %v3735 = vpack.c.b16 %v3671, %v3671
    %v3736 = vpack.c.b16 %v3672, %v3672
    %v3737 = vpack.c.b16 %v3673, %v3673
    %v3738 = vpack.c.b16 %v3674, %v3674
    %v3739 = vpack.c.b16 %v3675, %v3675
    %v3740 = vpack.c.b16 %v3676, %v3676
    %v3741 = vpack.c.b16 %v3677, %v3677
    %v3742 = vpack.c.b16 %v3678, %v3678
    %v3743 = vpack.c.b16 %v3679, %v3679
    %v3744 = vpack.c.b16 %v3680, %v3680
    %v3745 = vpack.c.b16 %v3681, %v3681
    %v3746 = vpack.c.b16 %v3682, %v3682
    %v3747 = vpack.c.b16 %v3683, %v3683
    %v3748 = vpack.c.b16 %v3684, %v3684
    %v3749 = vpack.c.b16 %v3685, %v3685
    %v3750 = vpack.c.b16 %v3686, %v3686
    %v3751 = vpack.c.b16 %v3687, %v3687
    %v3752 = vpack.c.b16 %v3688, %v3688
    %v3753 = vpack.c.b16 %v3689, %v3689
    %v3754 = vpack.c.b16 %v3690, %v3690
    %v3755 = vpack.c.b16 %v3691, %v3691
    %v3756 = vpack.c.b16 %v3692, %v3692
    %v3757 = vpack.c.b16 %v3693, %v3693
    %v3758 = vpack.c.b16 %v3694, %v3694
    %v3759 = vpack.c.b16 %v3695, %v3695
    %v3760 = vpack.c.b16 %v3696, %v3696
    %v3761 = vpack.c.b16 %v3697, %v3697
    %v3762 = vpack.c.b16 %v3698, %v3698
    %v3763 = vpack.c.b16 %v3699, %v3699
    %v3764 = vpack.c.b16 %v3700, %v3700
    %v3765 = vpack.c.b16 %v3701, %v3701
    %v3766 = vpack.c.b16 %v3702, %v3702
    %v3767 = vpack.c.b16 %v3703, %v3703
    %v3768 = vpack.c.b16 %v3704, %v3704
    %v3769 = vpack.c.b16 %v3705, %v3705
    %v3770 = vpack.c.b16 %v3706, %v3706
    %v3771 = vpack.c.b16 %v3707, %v3707
    %v3772 = vpack.c.b16 %v3708, %v3708
    %v3773 = vpack.c.b16 %v3709, %v3709
    %v3774 = vpack.c.b16 %v3710, %v3710
    %v3775 = vpack.c.b16 %v3711, %v3711
    %v3776 = vpack.c.b16 %v3712, %v3712
    %v3777 = vpack.c.b16 %v3713, %v3713
    %v3778 = vpack.c.b16 %v3714, %v3714
    %v3779 = vpack.c.b16 %v3715, %v3715
    %v3780 = vpack.c.b16 %v3716, %v3716
    %v3781 = vpack.c.b16 %v3717, %v3717
    %v3782 = vpack.c.b16 %v3718, %v3718
    %v3783 = vpack.c.b16 %v3719, %v3719
    %v3784 = vpack.c.b16 %v3720, %v3720
    %v3785 = vpack.c.b16 %v3721, %v3721
    %v3786 = vpack.c.b16 %v3722, %v3722
    %v3787 = vpack.c.b16 %v3723, %v3723
    %v3788 = vpack.c.b16 %v3724, %v3724
    %v3789 = vpack.c.b16 %v3725, %v3725
    %v3790 = vpack.c.b16 %v3726, %v3726
    %v3791 = vpack.c.b16 %v3727, %v3727
    %v3792 = vpack.c.b16 %v3728, %v3728
    %v3793 = vpack.c.b16 %v3729, %v3729
    %v3794 = vpack.c.b16 %v3730, %v3730
    %v3795 = vpack.c.b16 %v3731, %v3731
    %v3796 = vpack.c.b16 %v3732, %v3732
    %v3797 = vpack.c.b16 %v3733, %v3733
    %v3798 = vpack.c.b16 %v3734, %v3734
    %3863 = vst [vmem:[%s7] sm:$0xf] %v3735
    %3864 = vst [vmem:[%s7 + $0x4] sm:$0xf] %v3736
    %3865 = vst [vmem:[%s7 + $0x8] sm:$0xf] %v3737
    %3866 = vst [vmem:[%s7 + $0xc] sm:$0xf] %v3738
    %3867 = vst [vmem:[%s7 + $0x10] sm:$0xf] %v3739
    %3868 = vst [vmem:[%s7 + $0x14] sm:$0xf] %v3740
    %3869 = vst [vmem:[%s7 + $0x18] sm:$0xf] %v3741
    %3870 = vst [vmem:[%s7 + $0x1c] sm:$0xf] %v3742
    %3871 = vst [vmem:[%s7 + $0x20] sm:$0xf] %v3743
    %3872 = vst [vmem:[%s7 + $0x24] sm:$0xf] %v3744
    %3873 = vst [vmem:[%s7 + $0x28] sm:$0xf] %v3745
    %3874 = vst [vmem:[%s7 + $0x2c] sm:$0xf] %v3746
    %3875 = vst [vmem:[%s7 + $0x30] sm:$0xf] %v3747
    %3876 = vst [vmem:[%s7 + $0x34] sm:$0xf] %v3748
    %3877 = vst [vmem:[%s7 + $0x38] sm:$0xf] %v3749
    %3878 = vst [vmem:[%s7 + $0x3c] sm:$0xf] %v3750
    %3879 = vst [vmem:[%s7 + $0x40] sm:$0xf] %v3751
    %3880 = vst [vmem:[%s7 + $0x44] sm:$0xf] %v3752
    %3881 = vst [vmem:[%s7 + $0x48] sm:$0xf] %v3753
    %3882 = vst [vmem:[%s7 + $0x4c] sm:$0xf] %v3754
    %3883 = vst [vmem:[%s7 + $0x50] sm:$0xf] %v3755
    %3884 = vst [vmem:[%s7 + $0x54] sm:$0xf] %v3756
    %3885 = vst [vmem:[%s7 + $0x58] sm:$0xf] %v3757
    %3886 = vst [vmem:[%s7 + $0x5c] sm:$0xf] %v3758
    %3887 = vst [vmem:[%s7 + $0x60] sm:$0xf] %v3759
    %3888 = vst [vmem:[%s7 + $0x64] sm:$0xf] %v3760
    %3889 = vst [vmem:[%s7 + $0x68] sm:$0xf] %v3761
    %3890 = vst [vmem:[%s7 + $0x6c] sm:$0xf] %v3762
    %3891 = vst [vmem:[%s7 + $0x70] sm:$0xf] %v3763
    %3892 = vst [vmem:[%s7 + $0x74] sm:$0xf] %v3764
    %3893 = vst [vmem:[%s7 + $0x78] sm:$0xf] %v3765
    %3894 = vst [vmem:[%s7 + $0x7c] sm:$0xf] %v3766
    %3895 = vst [vmem:[%s7 + $0x80] sm:$0xf] %v3767
    %3896 = vst [vmem:[%s7 + $0x84] sm:$0xf] %v3768
    %3897 = vst [vmem:[%s7 + $0x88] sm:$0xf] %v3769
    %3898 = vst [vmem:[%s7 + $0x8c] sm:$0xf] %v3770
    %3899 = vst [vmem:[%s7 + $0x90] sm:$0xf] %v3771
    %3900 = vst [vmem:[%s7 + $0x94] sm:$0xf] %v3772
    %3901 = vst [vmem:[%s7 + $0x98] sm:$0xf] %v3773
    %3902 = vst [vmem:[%s7 + $0x9c] sm:$0xf] %v3774
    %3903 = vst [vmem:[%s7 + $0xa0] sm:$0xf] %v3775
    %3904 = vst [vmem:[%s7 + $0xa4] sm:$0xf] %v3776
    %3905 = vst [vmem:[%s7 + $0xa8] sm:$0xf] %v3777
    %3906 = vst [vmem:[%s7 + $0xac] sm:$0xf] %v3778
    %3907 = vst [vmem:[%s7 + $0xb0] sm:$0xf] %v3779
    %3908 = vst [vmem:[%s7 + $0xb4] sm:$0xf] %v3780
    %3909 = vst [vmem:[%s7 + $0xb8] sm:$0xf] %v3781
    %3910 = vst [vmem:[%s7 + $0xbc] sm:$0xf] %v3782
    %3911 = vst [vmem:[%s7 + $0xc0] sm:$0xf] %v3783
    %3912 = vst [vmem:[%s7 + $0xc4] sm:$0xf] %v3784
    %3913 = vst [vmem:[%s7 + $0xc8] sm:$0xf] %v3785
    %3914 = vst [vmem:[%s7 + $0xcc] sm:$0xf] %v3786
    %3915 = vst [vmem:[%s7 + $0xd0] sm:$0xf] %v3787
    %3916 = vst [vmem:[%s7 + $0xd4] sm:$0xf] %v3788
    %3917 = vst [vmem:[%s7 + $0xd8] sm:$0xf] %v3789
    %3918 = vst [vmem:[%s7 + $0xdc] sm:$0xf] %v3790
    %3919 = vst [vmem:[%s7 + $0xe0] sm:$0xf] %v3791
    %3920 = vst [vmem:[%s7 + $0xe4] sm:$0xf] %v3792
    %3921 = vst [vmem:[%s7 + $0xe8] sm:$0xf] %v3793
    %3922 = vst [vmem:[%s7 + $0xec] sm:$0xf] %v3794
    %3923 = vst [vmem:[%s7 + $0xf0] sm:$0xf] %v3795
    %3924 = vst [vmem:[%s7 + $0xf4] sm:$0xf] %v3796
    %3925 = vst [vmem:[%s7 + $0xf8] sm:$0xf] %v3797
    %3926 = vst [vmem:[%s7 + $0xfc] sm:$0xf] %v3798
    // Predicated region
    $region30: #{bgrl_encoder_forward.3} parent=1 // pred_check
      _
    $region31: #{bgrl_encoder_forward.3} parent=1 // pred_check_branch
      %3928 = sbr.rel (0) target = $region33
    $region32: #{bgrl_encoder_forward.3} parent=1 // pred_region
      _
    $region33: #{bgrl_encoder_forward.3} parent=1 // pred_fallthru
      _
    // Predicated region
    $region34: #{bgrl_encoder_forward.3} parent=1 // pred_check
      _
    $region35: #{bgrl_encoder_forward.3} parent=1 // pred_check_branch
      %3930 = sbr.rel (0) target = $region37
    $region36: #{bgrl_encoder_forward.3} parent=1 // pred_region
      _
    $region37: #{bgrl_encoder_forward.3} parent=1 // pred_fallthru
      _
    // Predicated region
    $region38: #{bgrl_encoder_forward.3} parent=1 // pred_check
      _
    $region39: #{bgrl_encoder_forward.3} parent=1 // pred_check_branch
      %3932 = sbr.rel (0) target = $region41
    $region40: #{bgrl_encoder_forward.3} parent=1 // pred_region
      _
    $region41: #{bgrl_encoder_forward.3} parent=1 // pred_fallthru
      _
    // Predicated region
    $region42: #{bgrl_encoder_forward.3} parent=1 // pred_check
      _
    $region43: #{bgrl_encoder_forward.3} parent=1 // pred_check_branch
      %3934 = sbr.rel (0) target = $region45
    $region44: #{bgrl_encoder_forward.3} parent=1 // pred_region
      _
    $region45: #{bgrl_encoder_forward.3} parent=1 // pred_fallthru
      _
    // Predicated region
    $region46: #{bgrl_encoder_forward.3} parent=1 // pred_check
      _
    $region47: #{bgrl_encoder_forward.3} parent=1 // pred_check_branch
      %3936 = sbr.rel (0) target = $region49
    $region48: #{bgrl_encoder_forward.3} parent=1 // pred_region
      _
    $region49: #{bgrl_encoder_forward.3} parent=1 // pred_fallthru
      _
    // Predicated region
    $region50: #{bgrl_encoder_forward.3} parent=1 // pred_check
      _
    $region51: #{bgrl_encoder_forward.3} parent=1 // pred_check_branch
      %3938 = sbr.rel (0) target = $region53
    $region52: #{bgrl_encoder_forward.3} parent=1 // pred_region
      _
    $region53: #{bgrl_encoder_forward.3} parent=1 // pred_fallthru
      _
    %3939 = vsyncpa [#allocation3], 1
    %3940 = vsyncpa [#allocation5], 1

</llo_original>
